<compile_context>
chip_gen: v5e
topology: v5e:2x2
jax: 0.10.0
libtpu: 0.0.40
codegen_flags: <defaults>
</compile_context>

<pallas_src>
import functools

import jax
import jax.numpy as jnp
from jax.experimental import pallas as pl
from jax.experimental.pallas import tpu as pltpu


def _bidi_lstm_layer(x_tm, wih_ref, whh_ref, b_ref, T, B, H):
    """One bidirectional LSTM layer on a time-major (T*B, D) value.

    Gate-column packing (width 8H): [i_f i_b | f_f f_b | o_f o_b | g_f g_b],
    i.e. within each gate the forward lanes come first, then backward, so the
    cell update runs elementwise on contiguous (B, 2H) lane blocks.

    Returns a list of T per-position outputs, each (B, H): h_fwd[t] + h_bwd[t].
    """
    d2, d4, d6, d8 = 2 * H, 4 * H, 6 * H, 8 * H

    # Hoisted input projection for both directions and all time steps: one MXU
    # matmul off the serial chain. b_ref already holds b_ih + b_hh (both dirs).
    gin = (jnp.dot(x_tm, wih_ref[...], preferred_element_type=jnp.float32)
           + b_ref[...])                                        # (T*B, 8H)

    # Per-step gate inputs: fwd lanes from time t, bwd lanes from time T-1-t.
    # Built with a constant lane mask before the loop (off the serial chain).
    lane = jax.lax.broadcasted_iota(jnp.int32, (B, d8), 1)
    bwd_lane = (lane % d2) >= H
    blocks = [gin[t * B:(t + 1) * B, :] for t in range(T)]
    gate_in = [jnp.where(bwd_lane, blocks[T - 1 - t], blocks[t])
               for t in range(T)]

    whh = whh_ref[...]                                          # keep in vregs
    # TODO(synk): at larger sizes, keep whh resident in the MXU across the
    # unrolled steps via pltpu.matmul_push_rhs / matmul_acc_lhs / matmul_pop.

    h = jnp.zeros((B, d2), jnp.float32)                         # [h_fwd | h_bwd]
    c = jnp.zeros((B, d2), jnp.float32)                         # [c_fwd | c_bwd]
    h_list = []
    for t in range(T):                      # T static -> fully unrolled
        # fused fwd+bwd recurrent matmul: (B, 2H) @ (2H, 8H) -> (B, 8H)
        g = gate_in[t] + jnp.dot(h, whh, preferred_element_type=jnp.float32)
        sg = jax.nn.sigmoid(g)              # i|f|o used; g-gate lanes discarded
        gg = jnp.tanh(g[:, d6:d8])          # g gate, both directions
        c = sg[:, d2:d4] * c + sg[:, 0:d2] * gg
        h = sg[:, d4:d6] * jnp.tanh(c)
        h_list.append(h)

    # h_bwd for original position t was produced at loop step T-1-t.
    return [h_list[t][:, 0:H] + h_list[T - 1 - t][:, H:d2] for t in range(T)]


def _bilstm3_kernel(T, B, H1, H2, H3,
                    x_ref,
                    wih1_ref, whh1_ref, b1_ref,
                    wih2_ref, whh2_ref, b2_ref,
                    wih3_ref, whh3_ref, b3_ref,
                    out_ref):
    # x_ref is batch-major (B*T, D) (a free reshape of the (B,T,D) input).
    # Reorder once to time-major rows (row t*B + b) — off the serial chain.
    xv = x_ref[...]
    x_tm = jnp.concatenate(
        [xv[b * T + t: b * T + t + 1, :] for t in range(T) for b in range(B)],
        axis=0)                                                 # (T*B, D)

    # TODO(synk): nn.Dropout(p=0.2) between layers is identity in eval mode;
    # training-mode dropout is not implemented.
    ys1 = _bidi_lstm_layer(x_tm, wih1_ref, whh1_ref, b1_ref, T, B, H1)
    y1 = jnp.concatenate(ys1, axis=0)                           # (T*B, H1)
    ys2 = _bidi_lstm_layer(y1, wih2_ref, whh2_ref, b2_ref, T, B, H2)
    y2 = jnp.concatenate(ys2, axis=0)                           # (T*B, H2)
    ys3 = _bidi_lstm_layer(y2, wih3_ref, whh3_ref, b3_ref, T, B, H3)

    # Assemble the output directly in the caller's batch-major row order
    # (row b*T + t) and write it as one slab; F.leaky_relu default slope 0.01.
    out = jnp.concatenate(
        [ys3[t][b:b + 1, :] for b in range(B) for t in range(T)], axis=0)
    out_ref[...] = jnp.where(out >= 0.0, out, 0.01 * out)


@jax.jit
def bi_lstm_standard_forward(x, params):
    """Forward pass of Bi_LSTM_Standard. x: (B, T, input_dim), batch_first."""
    B, T, D = x.shape
    wih1, whh1, b1 = params["l1"]
    wih2, whh2, b2 = params["l2"]
    wih3, whh3, b3 = params["l3"]
    H1 = whh1.shape[0] // 2
    H2 = whh2.shape[0] // 2
    H3 = whh3.shape[0] // 2

    # Free reshape (no transpose / extra HBM pass) at the model boundary.
    x2 = x.reshape(B * T, D).astype(jnp.float32)

    kernel = functools.partial(_bilstm3_kernel, T, B, H1, H2, H3)
    out2 = pl.pallas_call(
        kernel,
        out_shape=jax.ShapeDtypeStruct((B * T, H3), jnp.float32),
        in_specs=[pl.BlockSpec(memory_space=pltpu.MemorySpace.VMEM)] * 10,
        out_specs=pl.BlockSpec(memory_space=pltpu.MemorySpace.VMEM),
    )(x2, wih1, whh1, b1, wih2, whh2, b2, wih3, whh3, b3)

    # Free reshape back to (B, T, H3); output already in batch-major row order.
    return out2.reshape(B, T, H3)


def init_bilstm_layer(key, in_dim, hidden):
    """One bidirectional LSTM layer packed for the fused kernel.

    Column layout (width 8H): gate order [i, f, o, g]; within each gate the
    forward-direction H columns come first, then backward. Weights/biases use
    PyTorch's LSTM default U(-1/sqrt(H), 1/sqrt(H)); b_ih and b_hh pre-summed.
    whh is (2H, 8H): forward hidden rows feed only forward lanes, backward rows
    only backward lanes (exact block structure, zeros elsewhere).
    """
    H = hidden
    bound = 1.0 / (H ** 0.5)
    ks = jax.random.split(key, 8)

    def u(k, shape):
        return jax.random.uniform(k, shape, jnp.float32, -bound, bound)

    wih_dir = [u(ks[0], (in_dim, 4 * H)), u(ks[1], (in_dim, 4 * H))]
    whh_dir = [u(ks[2], (H, 4 * H)), u(ks[3], (H, 4 * H))]
    b_dir = [u(ks[4], (4 * H,)) + u(ks[5], (4 * H,)),
             u(ks[6], (4 * H,)) + u(ks[7], (4 * H,))]

    wih = jnp.zeros((in_dim, 8 * H), jnp.float32)
    whh = jnp.zeros((2 * H, 8 * H), jnp.float32)
    bias = jnp.zeros((1, 8 * H), jnp.float32)
    for gate in range(4):
        src = slice(gate * H, (gate + 1) * H)
        for d in range(2):                       # 0 = fwd, 1 = bwd
            dst = slice(gate * 2 * H + d * H, gate * 2 * H + (d + 1) * H)
            wih = wih.at[:, dst].set(wih_dir[d][:, src])
            whh = whh.at[d * H:(d + 1) * H, dst].set(whh_dir[d][:, src])
            bias = bias.at[0, dst].set(b_dir[d][src])
    return (wih, whh, bias)


if __name__ == "__main__":
    batch = 2
    time_length = 8
    input_dim = 8
    num_hidden = 16

    key = jax.random.PRNGKey(0)
    kx, k1, k2, k3 = jax.random.split(key, 4)

    # x: (B, T, input_dim) — batch_first=True like the PyTorch module
    x = jax.random.normal(kx, (batch, time_length, input_dim), jnp.float32)

    params = {
        "l1": init_bilstm_layer(k1, input_dim, num_hidden),        # D  -> H
        "l2": init_bilstm_layer(k2, num_hidden, num_hidden * 2),   # H  -> 2H
        "l3": init_bilstm_layer(k3, num_hidden * 2, num_hidden),   # 2H -> H
    }

    out = bi_lstm_standard_forward(x, params)
    out = jax.block_until_ready(out)

    assert out.shape == (batch, time_length, num_hidden), out.shape
    assert out.dtype == jnp.float32
    assert bool(jnp.all(jnp.isfinite(out)))
    print("KERNEL_OK")
</pallas_src>

<mosaic_0001>
module attributes {stable_mosaic.version = 11 : i64} {
  func.func @_bilstm3_kernel(%arg0: memref<16x8xf32, #tpu.memory_space<vmem>>, %arg1: memref<8x128xf32, #tpu.memory_space<vmem>>, %arg2: memref<32x128xf32, #tpu.memory_space<vmem>>, %arg3: memref<1x128xf32, #tpu.memory_space<vmem>>, %arg4: memref<16x256xf32, #tpu.memory_space<vmem>>, %arg5: memref<64x256xf32, #tpu.memory_space<vmem>>, %arg6: memref<1x256xf32, #tpu.memory_space<vmem>>, %arg7: memref<32x128xf32, #tpu.memory_space<vmem>>, %arg8: memref<32x128xf32, #tpu.memory_space<vmem>>, %arg9: memref<1x128xf32, #tpu.memory_space<vmem>>, %arg10: memref<16x16xf32, #tpu.memory_space<vmem>>) attributes {dimension_semantics = [], scalar_prefetch = 0 : i64, scratch_operands = 0 : i64, tpu.core_type = #tpu.core_type<tc>} {
    %c0 = arith.constant 0 : index
    %c0_0 = arith.constant 0 : index
    %0 = vector.load %arg0[%c0, %c0_0] : memref<16x8xf32, #tpu.memory_space<vmem>>, vector<16x8xf32>
    %1 = vector.extract_strided_slice %0 {offsets = [0, 0], sizes = [1, 8], strides = [1, 1]} : vector<16x8xf32> to vector<1x8xf32>
    %2 = vector.extract_strided_slice %0 {offsets = [8, 0], sizes = [1, 8], strides = [1, 1]} : vector<16x8xf32> to vector<1x8xf32>
    %3 = vector.extract_strided_slice %0 {offsets = [1, 0], sizes = [1, 8], strides = [1, 1]} : vector<16x8xf32> to vector<1x8xf32>
    %4 = vector.extract_strided_slice %0 {offsets = [9, 0], sizes = [1, 8], strides = [1, 1]} : vector<16x8xf32> to vector<1x8xf32>
    %5 = vector.extract_strided_slice %0 {offsets = [2, 0], sizes = [1, 8], strides = [1, 1]} : vector<16x8xf32> to vector<1x8xf32>
    %6 = vector.extract_strided_slice %0 {offsets = [10, 0], sizes = [1, 8], strides = [1, 1]} : vector<16x8xf32> to vector<1x8xf32>
    %7 = vector.extract_strided_slice %0 {offsets = [3, 0], sizes = [1, 8], strides = [1, 1]} : vector<16x8xf32> to vector<1x8xf32>
    %8 = vector.extract_strided_slice %0 {offsets = [11, 0], sizes = [1, 8], strides = [1, 1]} : vector<16x8xf32> to vector<1x8xf32>
    %9 = vector.extract_strided_slice %0 {offsets = [4, 0], sizes = [1, 8], strides = [1, 1]} : vector<16x8xf32> to vector<1x8xf32>
    %10 = vector.extract_strided_slice %0 {offsets = [12, 0], sizes = [1, 8], strides = [1, 1]} : vector<16x8xf32> to vector<1x8xf32>
    %11 = vector.extract_strided_slice %0 {offsets = [5, 0], sizes = [1, 8], strides = [1, 1]} : vector<16x8xf32> to vector<1x8xf32>
    %12 = vector.extract_strided_slice %0 {offsets = [13, 0], sizes = [1, 8], strides = [1, 1]} : vector<16x8xf32> to vector<1x8xf32>
    %13 = vector.extract_strided_slice %0 {offsets = [6, 0], sizes = [1, 8], strides = [1, 1]} : vector<16x8xf32> to vector<1x8xf32>
    %14 = vector.extract_strided_slice %0 {offsets = [14, 0], sizes = [1, 8], strides = [1, 1]} : vector<16x8xf32> to vector<1x8xf32>
    %15 = vector.extract_strided_slice %0 {offsets = [7, 0], sizes = [1, 8], strides = [1, 1]} : vector<16x8xf32> to vector<1x8xf32>
    %16 = vector.extract_strided_slice %0 {offsets = [15, 0], sizes = [1, 8], strides = [1, 1]} : vector<16x8xf32> to vector<1x8xf32>
    %17 = tpu.concatenate %1, %2, %3, %4, %5, %6, %7, %8, %9, %10, %11, %12, %13, %14, %15, %16 in 0 : vector<1x8xf32>, vector<1x8xf32>, vector<1x8xf32>, vector<1x8xf32>, vector<1x8xf32>, vector<1x8xf32>, vector<1x8xf32>, vector<1x8xf32>, vector<1x8xf32>, vector<1x8xf32>, vector<1x8xf32>, vector<1x8xf32>, vector<1x8xf32>, vector<1x8xf32>, vector<1x8xf32>, vector<1x8xf32> -> vector<16x8xf32>
    %c0_1 = arith.constant 0 : index
    %c0_2 = arith.constant 0 : index
    %18 = vector.load %arg1[%c0_1, %c0_2] : memref<8x128xf32, #tpu.memory_space<vmem>>, vector<8x128xf32>
    %cst = arith.constant dense<0.000000e+00> : vector<16x128xf32>
    %19 = tpu.matmul %17, %18, %cst {dimension_numbers = #tpu.dot_dimension_numbers<[1], [0], [0], [1], [0, 0, 1, 1], [], []>} : vector<16x8xf32>, vector<8x128xf32>, vector<16x128xf32> -> vector<16x128xf32>
    %c0_3 = arith.constant 0 : index
    %c0_4 = arith.constant 0 : index
    %20 = vector.load %arg3[%c0_3, %c0_4] : memref<1x128xf32, #tpu.memory_space<vmem>>, vector<1x128xf32>
    %21 = vector.broadcast %20 : vector<1x128xf32> to vector<16x128xf32>
    %22 = arith.addf %19, %21 : vector<16x128xf32>
    %23 = tpu.iota {dimensions = array<i32: 1>} : vector<2x128xi32>
    %c32_i32 = arith.constant 32 : i32
    %c0_i32 = arith.constant 0 : i32
    %24 = arith.cmpi eq, %c32_i32, %c0_i32 : i32
    %c1_i32 = arith.constant 1 : i32
    %25 = arith.select %24, %c1_i32, %c32_i32 : i32
    %26 = vector.broadcast %25 : i32 to vector<2x128xi32>
    %27 = arith.remsi %23, %26 : vector<2x128xi32>
    %c0_i32_5 = arith.constant 0 : i32
    %28 = vector.broadcast %c0_i32_5 : i32 to vector<2x128xi32>
    %29 = arith.cmpi ne, %27, %28 : vector<2x128xi32>
    %c0_i32_6 = arith.constant 0 : i32
    %30 = vector.broadcast %c0_i32_6 : i32 to vector<2x128xi32>
    %31 = arith.cmpi slt, %27, %30 : vector<2x128xi32>
    %c0_i32_7 = arith.constant 0 : i32
    %32 = arith.cmpi slt, %25, %c0_i32_7 : i32
    %33 = vector.broadcast %32 : i1 to vector<2x128xi1>
    %34 = vector.broadcast %33 : vector<2x128xi1> to vector<2x128xi1>
    %35 = arith.xori %31, %34 : vector<2x128xi1>
    %36 = arith.andi %35, %29 : vector<2x128xi1>
    %37 = vector.broadcast %25 : i32 to vector<2x128xi32>
    %38 = arith.addi %27, %37 : vector<2x128xi32>
    %39 = arith.select %36, %38, %27 : vector<2x128xi1>, vector<2x128xi32>
    %c16_i32 = arith.constant 16 : i32
    %40 = vector.broadcast %c16_i32 : i32 to vector<2x128xi32>
    %41 = arith.cmpi sge, %39, %40 : vector<2x128xi32>
    %42 = vector.extract_strided_slice %22 {offsets = [0, 0], sizes = [2, 128], strides = [1, 1]} : vector<16x128xf32> to vector<2x128xf32>
    %43 = vector.extract_strided_slice %22 {offsets = [2, 0], sizes = [2, 128], strides = [1, 1]} : vector<16x128xf32> to vector<2x128xf32>
    %44 = vector.extract_strided_slice %22 {offsets = [4, 0], sizes = [2, 128], strides = [1, 1]} : vector<16x128xf32> to vector<2x128xf32>
    %45 = vector.extract_strided_slice %22 {offsets = [6, 0], sizes = [2, 128], strides = [1, 1]} : vector<16x128xf32> to vector<2x128xf32>
    %46 = vector.extract_strided_slice %22 {offsets = [8, 0], sizes = [2, 128], strides = [1, 1]} : vector<16x128xf32> to vector<2x128xf32>
    %47 = vector.extract_strided_slice %22 {offsets = [10, 0], sizes = [2, 128], strides = [1, 1]} : vector<16x128xf32> to vector<2x128xf32>
    %48 = vector.extract_strided_slice %22 {offsets = [12, 0], sizes = [2, 128], strides = [1, 1]} : vector<16x128xf32> to vector<2x128xf32>
    %49 = vector.extract_strided_slice %22 {offsets = [14, 0], sizes = [2, 128], strides = [1, 1]} : vector<16x128xf32> to vector<2x128xf32>
    %50 = arith.select %41, %49, %42 : vector<2x128xi1>, vector<2x128xf32>
    %51 = arith.select %41, %48, %43 : vector<2x128xi1>, vector<2x128xf32>
    %52 = arith.select %41, %47, %44 : vector<2x128xi1>, vector<2x128xf32>
    %53 = arith.select %41, %46, %45 : vector<2x128xi1>, vector<2x128xf32>
    %54 = arith.select %41, %45, %46 : vector<2x128xi1>, vector<2x128xf32>
    %55 = arith.select %41, %44, %47 : vector<2x128xi1>, vector<2x128xf32>
    %56 = arith.select %41, %43, %48 : vector<2x128xi1>, vector<2x128xf32>
    %57 = arith.select %41, %42, %49 : vector<2x128xi1>, vector<2x128xf32>
    %c0_8 = arith.constant 0 : index
    %c0_9 = arith.constant 0 : index
    %58 = vector.load %arg2[%c0_8, %c0_9] : memref<32x128xf32, #tpu.memory_space<vmem>>, vector<32x128xf32>
    %cst_10 = arith.constant 0.000000e+00 : f32
    %59 = vector.broadcast %cst_10 : f32 to vector<2x32xf32>
    %cst_11 = arith.constant 0.000000e+00 : f32
    %60 = vector.broadcast %cst_11 : f32 to vector<2x32xf32>
    %cst_12 = arith.constant dense<0.000000e+00> : vector<2x128xf32>
    %61 = tpu.matmul %59, %58, %cst_12 {dimension_numbers = #tpu.dot_dimension_numbers<[1], [0], [0], [1], [0, 0, 1, 1], [], []>} : vector<2x32xf32>, vector<32x128xf32>, vector<2x128xf32> -> vector<2x128xf32>
    %62 = arith.addf %50, %61 : vector<2x128xf32>
    %63 = arith.negf %62 : vector<2x128xf32>
    %64 = math.exp %63 : vector<2x128xf32>
    %cst_13 = arith.constant 1.000000e+00 : f32
    %65 = vector.broadcast %cst_13 : f32 to vector<2x128xf32>
    %66 = arith.addf %65, %64 : vector<2x128xf32>
    %67 = arith.divf %65, %66 : vector<2x128xf32>
    %68 = vector.extract_strided_slice %62 {offsets = [0, 96], sizes = [2, 32], strides = [1, 1]} : vector<2x128xf32> to vector<2x32xf32>
    %69 = math.tanh %68 : vector<2x32xf32>
    %70 = vector.extract_strided_slice %67 {offsets = [0, 32], sizes = [2, 32], strides = [1, 1]} : vector<2x128xf32> to vector<2x32xf32>
    %71 = arith.mulf %70, %60 : vector<2x32xf32>
    %72 = vector.extract_strided_slice %67 {offsets = [0, 0], sizes = [2, 32], strides = [1, 1]} : vector<2x128xf32> to vector<2x32xf32>
    %73 = arith.mulf %72, %69 : vector<2x32xf32>
    %74 = arith.addf %71, %73 : vector<2x32xf32>
    %75 = vector.extract_strided_slice %67 {offsets = [0, 64], sizes = [2, 32], strides = [1, 1]} : vector<2x128xf32> to vector<2x32xf32>
    %76 = math.tanh %74 : vector<2x32xf32>
    %77 = arith.mulf %75, %76 : vector<2x32xf32>
    %cst_14 = arith.constant dense<0.000000e+00> : vector<2x128xf32>
    %78 = tpu.matmul %77, %58, %cst_14 {dimension_numbers = #tpu.dot_dimension_numbers<[1], [0], [0], [1], [0, 0, 1, 1], [], []>} : vector<2x32xf32>, vector<32x128xf32>, vector<2x128xf32> -> vector<2x128xf32>
    %79 = arith.addf %51, %78 : vector<2x128xf32>
    %80 = arith.negf %79 : vector<2x128xf32>
    %81 = math.exp %80 : vector<2x128xf32>
    %cst_15 = arith.constant 1.000000e+00 : f32
    %82 = vector.broadcast %cst_15 : f32 to vector<2x128xf32>
    %83 = arith.addf %82, %81 : vector<2x128xf32>
    %84 = arith.divf %82, %83 : vector<2x128xf32>
    %85 = vector.extract_strided_slice %79 {offsets = [0, 96], sizes = [2, 32], strides = [1, 1]} : vector<2x128xf32> to vector<2x32xf32>
    %86 = math.tanh %85 : vector<2x32xf32>
    %87 = vector.extract_strided_slice %84 {offsets = [0, 32], sizes = [2, 32], strides = [1, 1]} : vector<2x128xf32> to vector<2x32xf32>
    %88 = arith.mulf %87, %74 : vector<2x32xf32>
    %89 = vector.extract_strided_slice %84 {offsets = [0, 0], sizes = [2, 32], strides = [1, 1]} : vector<2x128xf32> to vector<2x32xf32>
    %90 = arith.mulf %89, %86 : vector<2x32xf32>
    %91 = arith.addf %88, %90 : vector<2x32xf32>
    %92 = vector.extract_strided_slice %84 {offsets = [0, 64], sizes = [2, 32], strides = [1, 1]} : vector<2x128xf32> to vector<2x32xf32>
    %93 = math.tanh %91 : vector<2x32xf32>
    %94 = arith.mulf %92, %93 : vector<2x32xf32>
    %cst_16 = arith.constant dense<0.000000e+00> : vector<2x128xf32>
    %95 = tpu.matmul %94, %58, %cst_16 {dimension_numbers = #tpu.dot_dimension_numbers<[1], [0], [0], [1], [0, 0, 1, 1], [], []>} : vector<2x32xf32>, vector<32x128xf32>, vector<2x128xf32> -> vector<2x128xf32>
    %96 = arith.addf %52, %95 : vector<2x128xf32>
    %97 = arith.negf %96 : vector<2x128xf32>
    %98 = math.exp %97 : vector<2x128xf32>
    %cst_17 = arith.constant 1.000000e+00 : f32
    %99 = vector.broadcast %cst_17 : f32 to vector<2x128xf32>
    %100 = arith.addf %99, %98 : vector<2x128xf32>
    %101 = arith.divf %99, %100 : vector<2x128xf32>
    %102 = vector.extract_strided_slice %96 {offsets = [0, 96], sizes = [2, 32], strides = [1, 1]} : vector<2x128xf32> to vector<2x32xf32>
    %103 = math.tanh %102 : vector<2x32xf32>
    %104 = vector.extract_strided_slice %101 {offsets = [0, 32], sizes = [2, 32], strides = [1, 1]} : vector<2x128xf32> to vector<2x32xf32>
    %105 = arith.mulf %104, %91 : vector<2x32xf32>
    %106 = vector.extract_strided_slice %101 {offsets = [0, 0], sizes = [2, 32], strides = [1, 1]} : vector<2x128xf32> to vector<2x32xf32>
    %107 = arith.mulf %106, %103 : vector<2x32xf32>
    %108 = arith.addf %105, %107 : vector<2x32xf32>
    %109 = vector.extract_strided_slice %101 {offsets = [0, 64], sizes = [2, 32], strides = [1, 1]} : vector<2x128xf32> to vector<2x32xf32>
    %110 = math.tanh %108 : vector<2x32xf32>
    %111 = arith.mulf %109, %110 : vector<2x32xf32>
    %cst_18 = arith.constant dense<0.000000e+00> : vector<2x128xf32>
    %112 = tpu.matmul %111, %58, %cst_18 {dimension_numbers = #tpu.dot_dimension_numbers<[1], [0], [0], [1], [0, 0, 1, 1], [], []>} : vector<2x32xf32>, vector<32x128xf32>, vector<2x128xf32> -> vector<2x128xf32>
    %113 = arith.addf %53, %112 : vector<2x128xf32>
    %114 = arith.negf %113 : vector<2x128xf32>
    %115 = math.exp %114 : vector<2x128xf32>
    %cst_19 = arith.constant 1.000000e+00 : f32
    %116 = vector.broadcast %cst_19 : f32 to vector<2x128xf32>
    %117 = arith.addf %116, %115 : vector<2x128xf32>
    %118 = arith.divf %116, %117 : vector<2x128xf32>
    %119 = vector.extract_strided_slice %113 {offsets = [0, 96], sizes = [2, 32], strides = [1, 1]} : vector<2x128xf32> to vector<2x32xf32>
    %120 = math.tanh %119 : vector<2x32xf32>
    %121 = vector.extract_strided_slice %118 {offsets = [0, 32], sizes = [2, 32], strides = [1, 1]} : vector<2x128xf32> to vector<2x32xf32>
    %122 = arith.mulf %121, %108 : vector<2x32xf32>
    %123 = vector.extract_strided_slice %118 {offsets = [0, 0], sizes = [2, 32], strides = [1, 1]} : vector<2x128xf32> to vector<2x32xf32>
    %124 = arith.mulf %123, %120 : vector<2x32xf32>
    %125 = arith.addf %122, %124 : vector<2x32xf32>
    %126 = vector.extract_strided_slice %118 {offsets = [0, 64], sizes = [2, 32], strides = [1, 1]} : vector<2x128xf32> to vector<2x32xf32>
    %127 = math.tanh %125 : vector<2x32xf32>
    %128 = arith.mulf %126, %127 : vector<2x32xf32>
    %cst_20 = arith.constant dense<0.000000e+00> : vector<2x128xf32>
    %129 = tpu.matmul %128, %58, %cst_20 {dimension_numbers = #tpu.dot_dimension_numbers<[1], [0], [0], [1], [0, 0, 1, 1], [], []>} : vector<2x32xf32>, vector<32x128xf32>, vector<2x128xf32> -> vector<2x128xf32>
    %130 = arith.addf %54, %129 : vector<2x128xf32>
    %131 = arith.negf %130 : vector<2x128xf32>
    %132 = math.exp %131 : vector<2x128xf32>
    %cst_21 = arith.constant 1.000000e+00 : f32
    %133 = vector.broadcast %cst_21 : f32 to vector<2x128xf32>
    %134 = arith.addf %133, %132 : vector<2x128xf32>
    %135 = arith.divf %133, %134 : vector<2x128xf32>
    %136 = vector.extract_strided_slice %130 {offsets = [0, 96], sizes = [2, 32], strides = [1, 1]} : vector<2x128xf32> to vector<2x32xf32>
    %137 = math.tanh %136 : vector<2x32xf32>
    %138 = vector.extract_strided_slice %135 {offsets = [0, 32], sizes = [2, 32], strides = [1, 1]} : vector<2x128xf32> to vector<2x32xf32>
    %139 = arith.mulf %138, %125 : vector<2x32xf32>
    %140 = vector.extract_strided_slice %135 {offsets = [0, 0], sizes = [2, 32], strides = [1, 1]} : vector<2x128xf32> to vector<2x32xf32>
    %141 = arith.mulf %140, %137 : vector<2x32xf32>
    %142 = arith.addf %139, %141 : vector<2x32xf32>
    %143 = vector.extract_strided_slice %135 {offsets = [0, 64], sizes = [2, 32], strides = [1, 1]} : vector<2x128xf32> to vector<2x32xf32>
    %144 = math.tanh %142 : vector<2x32xf32>
    %145 = arith.mulf %143, %144 : vector<2x32xf32>
    %cst_22 = arith.constant dense<0.000000e+00> : vector<2x128xf32>
    %146 = tpu.matmul %145, %58, %cst_22 {dimension_numbers = #tpu.dot_dimension_numbers<[1], [0], [0], [1], [0, 0, 1, 1], [], []>} : vector<2x32xf32>, vector<32x128xf32>, vector<2x128xf32> -> vector<2x128xf32>
    %147 = arith.addf %55, %146 : vector<2x128xf32>
    %148 = arith.negf %147 : vector<2x128xf32>
    %149 = math.exp %148 : vector<2x128xf32>
    %cst_23 = arith.constant 1.000000e+00 : f32
    %150 = vector.broadcast %cst_23 : f32 to vector<2x128xf32>
    %151 = arith.addf %150, %149 : vector<2x128xf32>
    %152 = arith.divf %150, %151 : vector<2x128xf32>
    %153 = vector.extract_strided_slice %147 {offsets = [0, 96], sizes = [2, 32], strides = [1, 1]} : vector<2x128xf32> to vector<2x32xf32>
    %154 = math.tanh %153 : vector<2x32xf32>
    %155 = vector.extract_strided_slice %152 {offsets = [0, 32], sizes = [2, 32], strides = [1, 1]} : vector<2x128xf32> to vector<2x32xf32>
    %156 = arith.mulf %155, %142 : vector<2x32xf32>
    %157 = vector.extract_strided_slice %152 {offsets = [0, 0], sizes = [2, 32], strides = [1, 1]} : vector<2x128xf32> to vector<2x32xf32>
    %158 = arith.mulf %157, %154 : vector<2x32xf32>
    %159 = arith.addf %156, %158 : vector<2x32xf32>
    %160 = vector.extract_strided_slice %152 {offsets = [0, 64], sizes = [2, 32], strides = [1, 1]} : vector<2x128xf32> to vector<2x32xf32>
    %161 = math.tanh %159 : vector<2x32xf32>
    %162 = arith.mulf %160, %161 : vector<2x32xf32>
    %cst_24 = arith.constant dense<0.000000e+00> : vector<2x128xf32>
    %163 = tpu.matmul %162, %58, %cst_24 {dimension_numbers = #tpu.dot_dimension_numbers<[1], [0], [0], [1], [0, 0, 1, 1], [], []>} : vector<2x32xf32>, vector<32x128xf32>, vector<2x128xf32> -> vector<2x128xf32>
    %164 = arith.addf %56, %163 : vector<2x128xf32>
    %165 = arith.negf %164 : vector<2x128xf32>
    %166 = math.exp %165 : vector<2x128xf32>
    %cst_25 = arith.constant 1.000000e+00 : f32
    %167 = vector.broadcast %cst_25 : f32 to vector<2x128xf32>
    %168 = arith.addf %167, %166 : vector<2x128xf32>
    %169 = arith.divf %167, %168 : vector<2x128xf32>
    %170 = vector.extract_strided_slice %164 {offsets = [0, 96], sizes = [2, 32], strides = [1, 1]} : vector<2x128xf32> to vector<2x32xf32>
    %171 = math.tanh %170 : vector<2x32xf32>
    %172 = vector.extract_strided_slice %169 {offsets = [0, 32], sizes = [2, 32], strides = [1, 1]} : vector<2x128xf32> to vector<2x32xf32>
    %173 = arith.mulf %172, %159 : vector<2x32xf32>
    %174 = vector.extract_strided_slice %169 {offsets = [0, 0], sizes = [2, 32], strides = [1, 1]} : vector<2x128xf32> to vector<2x32xf32>
    %175 = arith.mulf %174, %171 : vector<2x32xf32>
    %176 = arith.addf %173, %175 : vector<2x32xf32>
    %177 = vector.extract_strided_slice %169 {offsets = [0, 64], sizes = [2, 32], strides = [1, 1]} : vector<2x128xf32> to vector<2x32xf32>
    %178 = math.tanh %176 : vector<2x32xf32>
    %179 = arith.mulf %177, %178 : vector<2x32xf32>
    %cst_26 = arith.constant dense<0.000000e+00> : vector<2x128xf32>
    %180 = tpu.matmul %179, %58, %cst_26 {dimension_numbers = #tpu.dot_dimension_numbers<[1], [0], [0], [1], [0, 0, 1, 1], [], []>} : vector<2x32xf32>, vector<32x128xf32>, vector<2x128xf32> -> vector<2x128xf32>
    %181 = arith.addf %57, %180 : vector<2x128xf32>
    %182 = arith.negf %181 : vector<2x128xf32>
    %183 = math.exp %182 : vector<2x128xf32>
    %cst_27 = arith.constant 1.000000e+00 : f32
    %184 = vector.broadcast %cst_27 : f32 to vector<2x128xf32>
    %185 = arith.addf %184, %183 : vector<2x128xf32>
    %186 = arith.divf %184, %185 : vector<2x128xf32>
    %187 = vector.extract_strided_slice %181 {offsets = [0, 96], sizes = [2, 32], strides = [1, 1]} : vector<2x128xf32> to vector<2x32xf32>
    %188 = math.tanh %187 : vector<2x32xf32>
    %189 = vector.extract_strided_slice %186 {offsets = [0, 32], sizes = [2, 32], strides = [1, 1]} : vector<2x128xf32> to vector<2x32xf32>
    %190 = arith.mulf %189, %176 : vector<2x32xf32>
    %191 = vector.extract_strided_slice %186 {offsets = [0, 0], sizes = [2, 32], strides = [1, 1]} : vector<2x128xf32> to vector<2x32xf32>
    %192 = arith.mulf %191, %188 : vector<2x32xf32>
    %193 = arith.addf %190, %192 : vector<2x32xf32>
    %194 = vector.extract_strided_slice %186 {offsets = [0, 64], sizes = [2, 32], strides = [1, 1]} : vector<2x128xf32> to vector<2x32xf32>
    %195 = math.tanh %193 : vector<2x32xf32>
    %196 = arith.mulf %194, %195 : vector<2x32xf32>
    %197 = vector.extract_strided_slice %77 {offsets = [0, 0], sizes = [2, 16], strides = [1, 1]} : vector<2x32xf32> to vector<2x16xf32>
    %198 = vector.extract_strided_slice %196 {offsets = [0, 16], sizes = [2, 16], strides = [1, 1]} : vector<2x32xf32> to vector<2x16xf32>
    %199 = arith.addf %197, %198 : vector<2x16xf32>
    %200 = vector.extract_strided_slice %94 {offsets = [0, 0], sizes = [2, 16], strides = [1, 1]} : vector<2x32xf32> to vector<2x16xf32>
    %201 = vector.extract_strided_slice %179 {offsets = [0, 16], sizes = [2, 16], strides = [1, 1]} : vector<2x32xf32> to vector<2x16xf32>
    %202 = arith.addf %200, %201 : vector<2x16xf32>
    %203 = vector.extract_strided_slice %111 {offsets = [0, 0], sizes = [2, 16], strides = [1, 1]} : vector<2x32xf32> to vector<2x16xf32>
    %204 = vector.extract_strided_slice %162 {offsets = [0, 16], sizes = [2, 16], strides = [1, 1]} : vector<2x32xf32> to vector<2x16xf32>
    %205 = arith.addf %203, %204 : vector<2x16xf32>
    %206 = vector.extract_strided_slice %128 {offsets = [0, 0], sizes = [2, 16], strides = [1, 1]} : vector<2x32xf32> to vector<2x16xf32>
    %207 = vector.extract_strided_slice %145 {offsets = [0, 16], sizes = [2, 16], strides = [1, 1]} : vector<2x32xf32> to vector<2x16xf32>
    %208 = arith.addf %206, %207 : vector<2x16xf32>
    %209 = vector.extract_strided_slice %145 {offsets = [0, 0], sizes = [2, 16], strides = [1, 1]} : vector<2x32xf32> to vector<2x16xf32>
    %210 = vector.extract_strided_slice %128 {offsets = [0, 16], sizes = [2, 16], strides = [1, 1]} : vector<2x32xf32> to vector<2x16xf32>
    %211 = arith.addf %209, %210 : vector<2x16xf32>
    %212 = vector.extract_strided_slice %162 {offsets = [0, 0], sizes = [2, 16], strides = [1, 1]} : vector<2x32xf32> to vector<2x16xf32>
    %213 = vector.extract_strided_slice %111 {offsets = [0, 16], sizes = [2, 16], strides = [1, 1]} : vector<2x32xf32> to vector<2x16xf32>
    %214 = arith.addf %212, %213 : vector<2x16xf32>
    %215 = vector.extract_strided_slice %179 {offsets = [0, 0], sizes = [2, 16], strides = [1, 1]} : vector<2x32xf32> to vector<2x16xf32>
    %216 = vector.extract_strided_slice %94 {offsets = [0, 16], sizes = [2, 16], strides = [1, 1]} : vector<2x32xf32> to vector<2x16xf32>
    %217 = arith.addf %215, %216 : vector<2x16xf32>
    %218 = vector.extract_strided_slice %196 {offsets = [0, 0], sizes = [2, 16], strides = [1, 1]} : vector<2x32xf32> to vector<2x16xf32>
    %219 = vector.extract_strided_slice %77 {offsets = [0, 16], sizes = [2, 16], strides = [1, 1]} : vector<2x32xf32> to vector<2x16xf32>
    %220 = arith.addf %218, %219 : vector<2x16xf32>
    %221 = tpu.concatenate %199, %202, %205, %208, %211, %214, %217, %220 in 0 : vector<2x16xf32>, vector<2x16xf32>, vector<2x16xf32>, vector<2x16xf32>, vector<2x16xf32>, vector<2x16xf32>, vector<2x16xf32>, vector<2x16xf32> -> vector<16x16xf32>
    %c0_28 = arith.constant 0 : index
    %c0_29 = arith.constant 0 : index
    %222 = vector.load %arg4[%c0_28, %c0_29] : memref<16x256xf32, #tpu.memory_space<vmem>>, vector<16x256xf32>
    %cst_30 = arith.constant dense<0.000000e+00> : vector<16x256xf32>
    %223 = tpu.matmul %221, %222, %cst_30 {dimension_numbers = #tpu.dot_dimension_numbers<[1], [0], [0], [1], [0, 0, 1, 1], [], []>} : vector<16x16xf32>, vector<16x256xf32>, vector<16x256xf32> -> vector<16x256xf32>
    %c0_31 = arith.constant 0 : index
    %c0_32 = arith.constant 0 : index
    %224 = vector.load %arg6[%c0_31, %c0_32] : memref<1x256xf32, #tpu.memory_space<vmem>>, vector<1x256xf32>
    %225 = vector.broadcast %224 : vector<1x256xf32> to vector<16x256xf32>
    %226 = arith.addf %223, %225 : vector<16x256xf32>
    %227 = tpu.iota {dimensions = array<i32: 1>} : vector<2x256xi32>
    %c64_i32 = arith.constant 64 : i32
    %c0_i32_33 = arith.constant 0 : i32
    %228 = arith.cmpi eq, %c64_i32, %c0_i32_33 : i32
    %c1_i32_34 = arith.constant 1 : i32
    %229 = arith.select %228, %c1_i32_34, %c64_i32 : i32
    %230 = vector.broadcast %229 : i32 to vector<2x256xi32>
    %231 = arith.remsi %227, %230 : vector<2x256xi32>
    %c0_i32_35 = arith.constant 0 : i32
    %232 = vector.broadcast %c0_i32_35 : i32 to vector<2x256xi32>
    %233 = arith.cmpi ne, %231, %232 : vector<2x256xi32>
    %c0_i32_36 = arith.constant 0 : i32
    %234 = vector.broadcast %c0_i32_36 : i32 to vector<2x256xi32>
    %235 = arith.cmpi slt, %231, %234 : vector<2x256xi32>
    %c0_i32_37 = arith.constant 0 : i32
    %236 = arith.cmpi slt, %229, %c0_i32_37 : i32
    %237 = vector.broadcast %236 : i1 to vector<2x256xi1>
    %238 = vector.broadcast %237 : vector<2x256xi1> to vector<2x256xi1>
    %239 = arith.xori %235, %238 : vector<2x256xi1>
    %240 = arith.andi %239, %233 : vector<2x256xi1>
    %241 = vector.broadcast %229 : i32 to vector<2x256xi32>
    %242 = arith.addi %231, %241 : vector<2x256xi32>
    %243 = arith.select %240, %242, %231 : vector<2x256xi1>, vector<2x256xi32>
    %c32_i32_38 = arith.constant 32 : i32
    %244 = vector.broadcast %c32_i32_38 : i32 to vector<2x256xi32>
    %245 = arith.cmpi sge, %243, %244 : vector<2x256xi32>
    %246 = vector.extract_strided_slice %226 {offsets = [0, 0], sizes = [2, 256], strides = [1, 1]} : vector<16x256xf32> to vector<2x256xf32>
    %247 = vector.extract_strided_slice %226 {offsets = [2, 0], sizes = [2, 256], strides = [1, 1]} : vector<16x256xf32> to vector<2x256xf32>
    %248 = vector.extract_strided_slice %226 {offsets = [4, 0], sizes = [2, 256], strides = [1, 1]} : vector<16x256xf32> to vector<2x256xf32>
    %249 = vector.extract_strided_slice %226 {offsets = [6, 0], sizes = [2, 256], strides = [1, 1]} : vector<16x256xf32> to vector<2x256xf32>
    %250 = vector.extract_strided_slice %226 {offsets = [8, 0], sizes = [2, 256], strides = [1, 1]} : vector<16x256xf32> to vector<2x256xf32>
    %251 = vector.extract_strided_slice %226 {offsets = [10, 0], sizes = [2, 256], strides = [1, 1]} : vector<16x256xf32> to vector<2x256xf32>
    %252 = vector.extract_strided_slice %226 {offsets = [12, 0], sizes = [2, 256], strides = [1, 1]} : vector<16x256xf32> to vector<2x256xf32>
    %253 = vector.extract_strided_slice %226 {offsets = [14, 0], sizes = [2, 256], strides = [1, 1]} : vector<16x256xf32> to vector<2x256xf32>
    %254 = arith.select %245, %253, %246 : vector<2x256xi1>, vector<2x256xf32>
    %255 = arith.select %245, %252, %247 : vector<2x256xi1>, vector<2x256xf32>
    %256 = arith.select %245, %251, %248 : vector<2x256xi1>, vector<2x256xf32>
    %257 = arith.select %245, %250, %249 : vector<2x256xi1>, vector<2x256xf32>
    %258 = arith.select %245, %249, %250 : vector<2x256xi1>, vector<2x256xf32>
    %259 = arith.select %245, %248, %251 : vector<2x256xi1>, vector<2x256xf32>
    %260 = arith.select %245, %247, %252 : vector<2x256xi1>, vector<2x256xf32>
    %261 = arith.select %245, %246, %253 : vector<2x256xi1>, vector<2x256xf32>
    %c0_39 = arith.constant 0 : index
    %c0_40 = arith.constant 0 : index
    %262 = vector.load %arg5[%c0_39, %c0_40] : memref<64x256xf32, #tpu.memory_space<vmem>>, vector<64x256xf32>
    %cst_41 = arith.constant 0.000000e+00 : f32
    %263 = vector.broadcast %cst_41 : f32 to vector<2x64xf32>
    %cst_42 = arith.constant 0.000000e+00 : f32
    %264 = vector.broadcast %cst_42 : f32 to vector<2x64xf32>
    %cst_43 = arith.constant dense<0.000000e+00> : vector<2x256xf32>
    %265 = tpu.matmul %263, %262, %cst_43 {dimension_numbers = #tpu.dot_dimension_numbers<[1], [0], [0], [1], [0, 0, 1, 1], [], []>} : vector<2x64xf32>, vector<64x256xf32>, vector<2x256xf32> -> vector<2x256xf32>
    %266 = arith.addf %254, %265 : vector<2x256xf32>
    %267 = arith.negf %266 : vector<2x256xf32>
    %268 = math.exp %267 : vector<2x256xf32>
    %cst_44 = arith.constant 1.000000e+00 : f32
    %269 = vector.broadcast %cst_44 : f32 to vector<2x256xf32>
    %270 = arith.addf %269, %268 : vector<2x256xf32>
    %271 = arith.divf %269, %270 : vector<2x256xf32>
    %272 = vector.extract_strided_slice %266 {offsets = [0, 192], sizes = [2, 64], strides = [1, 1]} : vector<2x256xf32> to vector<2x64xf32>
    %273 = math.tanh %272 : vector<2x64xf32>
    %274 = vector.extract_strided_slice %271 {offsets = [0, 64], sizes = [2, 64], strides = [1, 1]} : vector<2x256xf32> to vector<2x64xf32>
    %275 = arith.mulf %274, %264 : vector<2x64xf32>
    %276 = vector.extract_strided_slice %271 {offsets = [0, 0], sizes = [2, 64], strides = [1, 1]} : vector<2x256xf32> to vector<2x64xf32>
    %277 = arith.mulf %276, %273 : vector<2x64xf32>
    %278 = arith.addf %275, %277 : vector<2x64xf32>
    %279 = vector.extract_strided_slice %271 {offsets = [0, 128], sizes = [2, 64], strides = [1, 1]} : vector<2x256xf32> to vector<2x64xf32>
    %280 = math.tanh %278 : vector<2x64xf32>
    %281 = arith.mulf %279, %280 : vector<2x64xf32>
    %cst_45 = arith.constant dense<0.000000e+00> : vector<2x256xf32>
    %282 = tpu.matmul %281, %262, %cst_45 {dimension_numbers = #tpu.dot_dimension_numbers<[1], [0], [0], [1], [0, 0, 1, 1], [], []>} : vector<2x64xf32>, vector<64x256xf32>, vector<2x256xf32> -> vector<2x256xf32>
    %283 = arith.addf %255, %282 : vector<2x256xf32>
    %284 = arith.negf %283 : vector<2x256xf32>
    %285 = math.exp %284 : vector<2x256xf32>
    %cst_46 = arith.constant 1.000000e+00 : f32
    %286 = vector.broadcast %cst_46 : f32 to vector<2x256xf32>
    %287 = arith.addf %286, %285 : vector<2x256xf32>
    %288 = arith.divf %286, %287 : vector<2x256xf32>
    %289 = vector.extract_strided_slice %283 {offsets = [0, 192], sizes = [2, 64], strides = [1, 1]} : vector<2x256xf32> to vector<2x64xf32>
    %290 = math.tanh %289 : vector<2x64xf32>
    %291 = vector.extract_strided_slice %288 {offsets = [0, 64], sizes = [2, 64], strides = [1, 1]} : vector<2x256xf32> to vector<2x64xf32>
    %292 = arith.mulf %291, %278 : vector<2x64xf32>
    %293 = vector.extract_strided_slice %288 {offsets = [0, 0], sizes = [2, 64], strides = [1, 1]} : vector<2x256xf32> to vector<2x64xf32>
    %294 = arith.mulf %293, %290 : vector<2x64xf32>
    %295 = arith.addf %292, %294 : vector<2x64xf32>
    %296 = vector.extract_strided_slice %288 {offsets = [0, 128], sizes = [2, 64], strides = [1, 1]} : vector<2x256xf32> to vector<2x64xf32>
    %297 = math.tanh %295 : vector<2x64xf32>
    %298 = arith.mulf %296, %297 : vector<2x64xf32>
    %cst_47 = arith.constant dense<0.000000e+00> : vector<2x256xf32>
    %299 = tpu.matmul %298, %262, %cst_47 {dimension_numbers = #tpu.dot_dimension_numbers<[1], [0], [0], [1], [0, 0, 1, 1], [], []>} : vector<2x64xf32>, vector<64x256xf32>, vector<2x256xf32> -> vector<2x256xf32>
    %300 = arith.addf %256, %299 : vector<2x256xf32>
    %301 = arith.negf %300 : vector<2x256xf32>
    %302 = math.exp %301 : vector<2x256xf32>
    %cst_48 = arith.constant 1.000000e+00 : f32
    %303 = vector.broadcast %cst_48 : f32 to vector<2x256xf32>
    %304 = arith.addf %303, %302 : vector<2x256xf32>
    %305 = arith.divf %303, %304 : vector<2x256xf32>
    %306 = vector.extract_strided_slice %300 {offsets = [0, 192], sizes = [2, 64], strides = [1, 1]} : vector<2x256xf32> to vector<2x64xf32>
    %307 = math.tanh %306 : vector<2x64xf32>
    %308 = vector.extract_strided_slice %305 {offsets = [0, 64], sizes = [2, 64], strides = [1, 1]} : vector<2x256xf32> to vector<2x64xf32>
    %309 = arith.mulf %308, %295 : vector<2x64xf32>
    %310 = vector.extract_strided_slice %305 {offsets = [0, 0], sizes = [2, 64], strides = [1, 1]} : vector<2x256xf32> to vector<2x64xf32>
    %311 = arith.mulf %310, %307 : vector<2x64xf32>
    %312 = arith.addf %309, %311 : vector<2x64xf32>
    %313 = vector.extract_strided_slice %305 {offsets = [0, 128], sizes = [2, 64], strides = [1, 1]} : vector<2x256xf32> to vector<2x64xf32>
    %314 = math.tanh %312 : vector<2x64xf32>
    %315 = arith.mulf %313, %314 : vector<2x64xf32>
    %cst_49 = arith.constant dense<0.000000e+00> : vector<2x256xf32>
    %316 = tpu.matmul %315, %262, %cst_49 {dimension_numbers = #tpu.dot_dimension_numbers<[1], [0], [0], [1], [0, 0, 1, 1], [], []>} : vector<2x64xf32>, vector<64x256xf32>, vector<2x256xf32> -> vector<2x256xf32>
    %317 = arith.addf %257, %316 : vector<2x256xf32>
    %318 = arith.negf %317 : vector<2x256xf32>
    %319 = math.exp %318 : vector<2x256xf32>
    %cst_50 = arith.constant 1.000000e+00 : f32
    %320 = vector.broadcast %cst_50 : f32 to vector<2x256xf32>
    %321 = arith.addf %320, %319 : vector<2x256xf32>
    %322 = arith.divf %320, %321 : vector<2x256xf32>
    %323 = vector.extract_strided_slice %317 {offsets = [0, 192], sizes = [2, 64], strides = [1, 1]} : vector<2x256xf32> to vector<2x64xf32>
    %324 = math.tanh %323 : vector<2x64xf32>
    %325 = vector.extract_strided_slice %322 {offsets = [0, 64], sizes = [2, 64], strides = [1, 1]} : vector<2x256xf32> to vector<2x64xf32>
    %326 = arith.mulf %325, %312 : vector<2x64xf32>
    %327 = vector.extract_strided_slice %322 {offsets = [0, 0], sizes = [2, 64], strides = [1, 1]} : vector<2x256xf32> to vector<2x64xf32>
    %328 = arith.mulf %327, %324 : vector<2x64xf32>
    %329 = arith.addf %326, %328 : vector<2x64xf32>
    %330 = vector.extract_strided_slice %322 {offsets = [0, 128], sizes = [2, 64], strides = [1, 1]} : vector<2x256xf32> to vector<2x64xf32>
    %331 = math.tanh %329 : vector<2x64xf32>
    %332 = arith.mulf %330, %331 : vector<2x64xf32>
    %cst_51 = arith.constant dense<0.000000e+00> : vector<2x256xf32>
    %333 = tpu.matmul %332, %262, %cst_51 {dimension_numbers = #tpu.dot_dimension_numbers<[1], [0], [0], [1], [0, 0, 1, 1], [], []>} : vector<2x64xf32>, vector<64x256xf32>, vector<2x256xf32> -> vector<2x256xf32>
    %334 = arith.addf %258, %333 : vector<2x256xf32>
    %335 = arith.negf %334 : vector<2x256xf32>
    %336 = math.exp %335 : vector<2x256xf32>
    %cst_52 = arith.constant 1.000000e+00 : f32
    %337 = vector.broadcast %cst_52 : f32 to vector<2x256xf32>
    %338 = arith.addf %337, %336 : vector<2x256xf32>
    %339 = arith.divf %337, %338 : vector<2x256xf32>
    %340 = vector.extract_strided_slice %334 {offsets = [0, 192], sizes = [2, 64], strides = [1, 1]} : vector<2x256xf32> to vector<2x64xf32>
    %341 = math.tanh %340 : vector<2x64xf32>
    %342 = vector.extract_strided_slice %339 {offsets = [0, 64], sizes = [2, 64], strides = [1, 1]} : vector<2x256xf32> to vector<2x64xf32>
    %343 = arith.mulf %342, %329 : vector<2x64xf32>
    %344 = vector.extract_strided_slice %339 {offsets = [0, 0], sizes = [2, 64], strides = [1, 1]} : vector<2x256xf32> to vector<2x64xf32>
    %345 = arith.mulf %344, %341 : vector<2x64xf32>
    %346 = arith.addf %343, %345 : vector<2x64xf32>
    %347 = vector.extract_strided_slice %339 {offsets = [0, 128], sizes = [2, 64], strides = [1, 1]} : vector<2x256xf32> to vector<2x64xf32>
    %348 = math.tanh %346 : vector<2x64xf32>
    %349 = arith.mulf %347, %348 : vector<2x64xf32>
    %cst_53 = arith.constant dense<0.000000e+00> : vector<2x256xf32>
    %350 = tpu.matmul %349, %262, %cst_53 {dimension_numbers = #tpu.dot_dimension_numbers<[1], [0], [0], [1], [0, 0, 1, 1], [], []>} : vector<2x64xf32>, vector<64x256xf32>, vector<2x256xf32> -> vector<2x256xf32>
    %351 = arith.addf %259, %350 : vector<2x256xf32>
    %352 = arith.negf %351 : vector<2x256xf32>
    %353 = math.exp %352 : vector<2x256xf32>
    %cst_54 = arith.constant 1.000000e+00 : f32
    %354 = vector.broadcast %cst_54 : f32 to vector<2x256xf32>
    %355 = arith.addf %354, %353 : vector<2x256xf32>
    %356 = arith.divf %354, %355 : vector<2x256xf32>
    %357 = vector.extract_strided_slice %351 {offsets = [0, 192], sizes = [2, 64], strides = [1, 1]} : vector<2x256xf32> to vector<2x64xf32>
    %358 = math.tanh %357 : vector<2x64xf32>
    %359 = vector.extract_strided_slice %356 {offsets = [0, 64], sizes = [2, 64], strides = [1, 1]} : vector<2x256xf32> to vector<2x64xf32>
    %360 = arith.mulf %359, %346 : vector<2x64xf32>
    %361 = vector.extract_strided_slice %356 {offsets = [0, 0], sizes = [2, 64], strides = [1, 1]} : vector<2x256xf32> to vector<2x64xf32>
    %362 = arith.mulf %361, %358 : vector<2x64xf32>
    %363 = arith.addf %360, %362 : vector<2x64xf32>
    %364 = vector.extract_strided_slice %356 {offsets = [0, 128], sizes = [2, 64], strides = [1, 1]} : vector<2x256xf32> to vector<2x64xf32>
    %365 = math.tanh %363 : vector<2x64xf32>
    %366 = arith.mulf %364, %365 : vector<2x64xf32>
    %cst_55 = arith.constant dense<0.000000e+00> : vector<2x256xf32>
    %367 = tpu.matmul %366, %262, %cst_55 {dimension_numbers = #tpu.dot_dimension_numbers<[1], [0], [0], [1], [0, 0, 1, 1], [], []>} : vector<2x64xf32>, vector<64x256xf32>, vector<2x256xf32> -> vector<2x256xf32>
    %368 = arith.addf %260, %367 : vector<2x256xf32>
    %369 = arith.negf %368 : vector<2x256xf32>
    %370 = math.exp %369 : vector<2x256xf32>
    %cst_56 = arith.constant 1.000000e+00 : f32
    %371 = vector.broadcast %cst_56 : f32 to vector<2x256xf32>
    %372 = arith.addf %371, %370 : vector<2x256xf32>
    %373 = arith.divf %371, %372 : vector<2x256xf32>
    %374 = vector.extract_strided_slice %368 {offsets = [0, 192], sizes = [2, 64], strides = [1, 1]} : vector<2x256xf32> to vector<2x64xf32>
    %375 = math.tanh %374 : vector<2x64xf32>
    %376 = vector.extract_strided_slice %373 {offsets = [0, 64], sizes = [2, 64], strides = [1, 1]} : vector<2x256xf32> to vector<2x64xf32>
    %377 = arith.mulf %376, %363 : vector<2x64xf32>
    %378 = vector.extract_strided_slice %373 {offsets = [0, 0], sizes = [2, 64], strides = [1, 1]} : vector<2x256xf32> to vector<2x64xf32>
    %379 = arith.mulf %378, %375 : vector<2x64xf32>
    %380 = arith.addf %377, %379 : vector<2x64xf32>
    %381 = vector.extract_strided_slice %373 {offsets = [0, 128], sizes = [2, 64], strides = [1, 1]} : vector<2x256xf32> to vector<2x64xf32>
    %382 = math.tanh %380 : vector<2x64xf32>
    %383 = arith.mulf %381, %382 : vector<2x64xf32>
    %cst_57 = arith.constant dense<0.000000e+00> : vector<2x256xf32>
    %384 = tpu.matmul %383, %262, %cst_57 {dimension_numbers = #tpu.dot_dimension_numbers<[1], [0], [0], [1], [0, 0, 1, 1], [], []>} : vector<2x64xf32>, vector<64x256xf32>, vector<2x256xf32> -> vector<2x256xf32>
    %385 = arith.addf %261, %384 : vector<2x256xf32>
    %386 = arith.negf %385 : vector<2x256xf32>
    %387 = math.exp %386 : vector<2x256xf32>
    %cst_58 = arith.constant 1.000000e+00 : f32
    %388 = vector.broadcast %cst_58 : f32 to vector<2x256xf32>
    %389 = arith.addf %388, %387 : vector<2x256xf32>
    %390 = arith.divf %388, %389 : vector<2x256xf32>
    %391 = vector.extract_strided_slice %385 {offsets = [0, 192], sizes = [2, 64], strides = [1, 1]} : vector<2x256xf32> to vector<2x64xf32>
    %392 = math.tanh %391 : vector<2x64xf32>
    %393 = vector.extract_strided_slice %390 {offsets = [0, 64], sizes = [2, 64], strides = [1, 1]} : vector<2x256xf32> to vector<2x64xf32>
    %394 = arith.mulf %393, %380 : vector<2x64xf32>
    %395 = vector.extract_strided_slice %390 {offsets = [0, 0], sizes = [2, 64], strides = [1, 1]} : vector<2x256xf32> to vector<2x64xf32>
    %396 = arith.mulf %395, %392 : vector<2x64xf32>
    %397 = arith.addf %394, %396 : vector<2x64xf32>
    %398 = vector.extract_strided_slice %390 {offsets = [0, 128], sizes = [2, 64], strides = [1, 1]} : vector<2x256xf32> to vector<2x64xf32>
    %399 = math.tanh %397 : vector<2x64xf32>
    %400 = arith.mulf %398, %399 : vector<2x64xf32>
    %401 = vector.extract_strided_slice %281 {offsets = [0, 0], sizes = [2, 32], strides = [1, 1]} : vector<2x64xf32> to vector<2x32xf32>
    %402 = vector.extract_strided_slice %400 {offsets = [0, 32], sizes = [2, 32], strides = [1, 1]} : vector<2x64xf32> to vector<2x32xf32>
    %403 = arith.addf %401, %402 : vector<2x32xf32>
    %404 = vector.extract_strided_slice %298 {offsets = [0, 0], sizes = [2, 32], strides = [1, 1]} : vector<2x64xf32> to vector<2x32xf32>
    %405 = vector.extract_strided_slice %383 {offsets = [0, 32], sizes = [2, 32], strides = [1, 1]} : vector<2x64xf32> to vector<2x32xf32>
    %406 = arith.addf %404, %405 : vector<2x32xf32>
    %407 = vector.extract_strided_slice %315 {offsets = [0, 0], sizes = [2, 32], strides = [1, 1]} : vector<2x64xf32> to vector<2x32xf32>
    %408 = vector.extract_strided_slice %366 {offsets = [0, 32], sizes = [2, 32], strides = [1, 1]} : vector<2x64xf32> to vector<2x32xf32>
    %409 = arith.addf %407, %408 : vector<2x32xf32>
    %410 = vector.extract_strided_slice %332 {offsets = [0, 0], sizes = [2, 32], strides = [1, 1]} : vector<2x64xf32> to vector<2x32xf32>
    %411 = vector.extract_strided_slice %349 {offsets = [0, 32], sizes = [2, 32], strides = [1, 1]} : vector<2x64xf32> to vector<2x32xf32>
    %412 = arith.addf %410, %411 : vector<2x32xf32>
    %413 = vector.extract_strided_slice %349 {offsets = [0, 0], sizes = [2, 32], strides = [1, 1]} : vector<2x64xf32> to vector<2x32xf32>
    %414 = vector.extract_strided_slice %332 {offsets = [0, 32], sizes = [2, 32], strides = [1, 1]} : vector<2x64xf32> to vector<2x32xf32>
    %415 = arith.addf %413, %414 : vector<2x32xf32>
    %416 = vector.extract_strided_slice %366 {offsets = [0, 0], sizes = [2, 32], strides = [1, 1]} : vector<2x64xf32> to vector<2x32xf32>
    %417 = vector.extract_strided_slice %315 {offsets = [0, 32], sizes = [2, 32], strides = [1, 1]} : vector<2x64xf32> to vector<2x32xf32>
    %418 = arith.addf %416, %417 : vector<2x32xf32>
    %419 = vector.extract_strided_slice %383 {offsets = [0, 0], sizes = [2, 32], strides = [1, 1]} : vector<2x64xf32> to vector<2x32xf32>
    %420 = vector.extract_strided_slice %298 {offsets = [0, 32], sizes = [2, 32], strides = [1, 1]} : vector<2x64xf32> to vector<2x32xf32>
    %421 = arith.addf %419, %420 : vector<2x32xf32>
    %422 = vector.extract_strided_slice %400 {offsets = [0, 0], sizes = [2, 32], strides = [1, 1]} : vector<2x64xf32> to vector<2x32xf32>
    %423 = vector.extract_strided_slice %281 {offsets = [0, 32], sizes = [2, 32], strides = [1, 1]} : vector<2x64xf32> to vector<2x32xf32>
    %424 = arith.addf %422, %423 : vector<2x32xf32>
    %425 = tpu.concatenate %403, %406, %409, %412, %415, %418, %421, %424 in 0 : vector<2x32xf32>, vector<2x32xf32>, vector<2x32xf32>, vector<2x32xf32>, vector<2x32xf32>, vector<2x32xf32>, vector<2x32xf32>, vector<2x32xf32> -> vector<16x32xf32>
    %c0_59 = arith.constant 0 : index
    %c0_60 = arith.constant 0 : index
    %426 = vector.load %arg7[%c0_59, %c0_60] : memref<32x128xf32, #tpu.memory_space<vmem>>, vector<32x128xf32>
    %cst_61 = arith.constant dense<0.000000e+00> : vector<16x128xf32>
    %427 = tpu.matmul %425, %426, %cst_61 {dimension_numbers = #tpu.dot_dimension_numbers<[1], [0], [0], [1], [0, 0, 1, 1], [], []>} : vector<16x32xf32>, vector<32x128xf32>, vector<16x128xf32> -> vector<16x128xf32>
    %c0_62 = arith.constant 0 : index
    %c0_63 = arith.constant 0 : index
    %428 = vector.load %arg9[%c0_62, %c0_63] : memref<1x128xf32, #tpu.memory_space<vmem>>, vector<1x128xf32>
    %429 = vector.broadcast %428 : vector<1x128xf32> to vector<16x128xf32>
    %430 = arith.addf %427, %429 : vector<16x128xf32>
    %431 = tpu.iota {dimensions = array<i32: 1>} : vector<2x128xi32>
    %c32_i32_64 = arith.constant 32 : i32
    %c0_i32_65 = arith.constant 0 : i32
    %432 = arith.cmpi eq, %c32_i32_64, %c0_i32_65 : i32
    %c1_i32_66 = arith.constant 1 : i32
    %433 = arith.select %432, %c1_i32_66, %c32_i32_64 : i32
    %434 = vector.broadcast %433 : i32 to vector<2x128xi32>
    %435 = arith.remsi %431, %434 : vector<2x128xi32>
    %c0_i32_67 = arith.constant 0 : i32
    %436 = vector.broadcast %c0_i32_67 : i32 to vector<2x128xi32>
    %437 = arith.cmpi ne, %435, %436 : vector<2x128xi32>
    %c0_i32_68 = arith.constant 0 : i32
    %438 = vector.broadcast %c0_i32_68 : i32 to vector<2x128xi32>
    %439 = arith.cmpi slt, %435, %438 : vector<2x128xi32>
    %c0_i32_69 = arith.constant 0 : i32
    %440 = arith.cmpi slt, %433, %c0_i32_69 : i32
    %441 = vector.broadcast %440 : i1 to vector<2x128xi1>
    %442 = vector.broadcast %441 : vector<2x128xi1> to vector<2x128xi1>
    %443 = arith.xori %439, %442 : vector<2x128xi1>
    %444 = arith.andi %443, %437 : vector<2x128xi1>
    %445 = vector.broadcast %433 : i32 to vector<2x128xi32>
    %446 = arith.addi %435, %445 : vector<2x128xi32>
    %447 = arith.select %444, %446, %435 : vector<2x128xi1>, vector<2x128xi32>
    %c16_i32_70 = arith.constant 16 : i32
    %448 = vector.broadcast %c16_i32_70 : i32 to vector<2x128xi32>
    %449 = arith.cmpi sge, %447, %448 : vector<2x128xi32>
    %450 = vector.extract_strided_slice %430 {offsets = [0, 0], sizes = [2, 128], strides = [1, 1]} : vector<16x128xf32> to vector<2x128xf32>
    %451 = vector.extract_strided_slice %430 {offsets = [2, 0], sizes = [2, 128], strides = [1, 1]} : vector<16x128xf32> to vector<2x128xf32>
    %452 = vector.extract_strided_slice %430 {offsets = [4, 0], sizes = [2, 128], strides = [1, 1]} : vector<16x128xf32> to vector<2x128xf32>
    %453 = vector.extract_strided_slice %430 {offsets = [6, 0], sizes = [2, 128], strides = [1, 1]} : vector<16x128xf32> to vector<2x128xf32>
    %454 = vector.extract_strided_slice %430 {offsets = [8, 0], sizes = [2, 128], strides = [1, 1]} : vector<16x128xf32> to vector<2x128xf32>
    %455 = vector.extract_strided_slice %430 {offsets = [10, 0], sizes = [2, 128], strides = [1, 1]} : vector<16x128xf32> to vector<2x128xf32>
    %456 = vector.extract_strided_slice %430 {offsets = [12, 0], sizes = [2, 128], strides = [1, 1]} : vector<16x128xf32> to vector<2x128xf32>
    %457 = vector.extract_strided_slice %430 {offsets = [14, 0], sizes = [2, 128], strides = [1, 1]} : vector<16x128xf32> to vector<2x128xf32>
    %458 = arith.select %449, %457, %450 : vector<2x128xi1>, vector<2x128xf32>
    %459 = arith.select %449, %456, %451 : vector<2x128xi1>, vector<2x128xf32>
    %460 = arith.select %449, %455, %452 : vector<2x128xi1>, vector<2x128xf32>
    %461 = arith.select %449, %454, %453 : vector<2x128xi1>, vector<2x128xf32>
    %462 = arith.select %449, %453, %454 : vector<2x128xi1>, vector<2x128xf32>
    %463 = arith.select %449, %452, %455 : vector<2x128xi1>, vector<2x128xf32>
    %464 = arith.select %449, %451, %456 : vector<2x128xi1>, vector<2x128xf32>
    %465 = arith.select %449, %450, %457 : vector<2x128xi1>, vector<2x128xf32>
    %c0_71 = arith.constant 0 : index
    %c0_72 = arith.constant 0 : index
    %466 = vector.load %arg8[%c0_71, %c0_72] : memref<32x128xf32, #tpu.memory_space<vmem>>, vector<32x128xf32>
    %cst_73 = arith.constant 0.000000e+00 : f32
    %467 = vector.broadcast %cst_73 : f32 to vector<2x32xf32>
    %cst_74 = arith.constant 0.000000e+00 : f32
    %468 = vector.broadcast %cst_74 : f32 to vector<2x32xf32>
    %cst_75 = arith.constant dense<0.000000e+00> : vector<2x128xf32>
    %469 = tpu.matmul %467, %466, %cst_75 {dimension_numbers = #tpu.dot_dimension_numbers<[1], [0], [0], [1], [0, 0, 1, 1], [], []>} : vector<2x32xf32>, vector<32x128xf32>, vector<2x128xf32> -> vector<2x128xf32>
    %470 = arith.addf %458, %469 : vector<2x128xf32>
    %471 = arith.negf %470 : vector<2x128xf32>
    %472 = math.exp %471 : vector<2x128xf32>
    %cst_76 = arith.constant 1.000000e+00 : f32
    %473 = vector.broadcast %cst_76 : f32 to vector<2x128xf32>
    %474 = arith.addf %473, %472 : vector<2x128xf32>
    %475 = arith.divf %473, %474 : vector<2x128xf32>
    %476 = vector.extract_strided_slice %470 {offsets = [0, 96], sizes = [2, 32], strides = [1, 1]} : vector<2x128xf32> to vector<2x32xf32>
    %477 = math.tanh %476 : vector<2x32xf32>
    %478 = vector.extract_strided_slice %475 {offsets = [0, 32], sizes = [2, 32], strides = [1, 1]} : vector<2x128xf32> to vector<2x32xf32>
    %479 = arith.mulf %478, %468 : vector<2x32xf32>
    %480 = vector.extract_strided_slice %475 {offsets = [0, 0], sizes = [2, 32], strides = [1, 1]} : vector<2x128xf32> to vector<2x32xf32>
    %481 = arith.mulf %480, %477 : vector<2x32xf32>
    %482 = arith.addf %479, %481 : vector<2x32xf32>
    %483 = vector.extract_strided_slice %475 {offsets = [0, 64], sizes = [2, 32], strides = [1, 1]} : vector<2x128xf32> to vector<2x32xf32>
    %484 = math.tanh %482 : vector<2x32xf32>
    %485 = arith.mulf %483, %484 : vector<2x32xf32>
    %cst_77 = arith.constant dense<0.000000e+00> : vector<2x128xf32>
    %486 = tpu.matmul %485, %466, %cst_77 {dimension_numbers = #tpu.dot_dimension_numbers<[1], [0], [0], [1], [0, 0, 1, 1], [], []>} : vector<2x32xf32>, vector<32x128xf32>, vector<2x128xf32> -> vector<2x128xf32>
    %487 = arith.addf %459, %486 : vector<2x128xf32>
    %488 = arith.negf %487 : vector<2x128xf32>
    %489 = math.exp %488 : vector<2x128xf32>
    %cst_78 = arith.constant 1.000000e+00 : f32
    %490 = vector.broadcast %cst_78 : f32 to vector<2x128xf32>
    %491 = arith.addf %490, %489 : vector<2x128xf32>
    %492 = arith.divf %490, %491 : vector<2x128xf32>
    %493 = vector.extract_strided_slice %487 {offsets = [0, 96], sizes = [2, 32], strides = [1, 1]} : vector<2x128xf32> to vector<2x32xf32>
    %494 = math.tanh %493 : vector<2x32xf32>
    %495 = vector.extract_strided_slice %492 {offsets = [0, 32], sizes = [2, 32], strides = [1, 1]} : vector<2x128xf32> to vector<2x32xf32>
    %496 = arith.mulf %495, %482 : vector<2x32xf32>
    %497 = vector.extract_strided_slice %492 {offsets = [0, 0], sizes = [2, 32], strides = [1, 1]} : vector<2x128xf32> to vector<2x32xf32>
    %498 = arith.mulf %497, %494 : vector<2x32xf32>
    %499 = arith.addf %496, %498 : vector<2x32xf32>
    %500 = vector.extract_strided_slice %492 {offsets = [0, 64], sizes = [2, 32], strides = [1, 1]} : vector<2x128xf32> to vector<2x32xf32>
    %501 = math.tanh %499 : vector<2x32xf32>
    %502 = arith.mulf %500, %501 : vector<2x32xf32>
    %cst_79 = arith.constant dense<0.000000e+00> : vector<2x128xf32>
    %503 = tpu.matmul %502, %466, %cst_79 {dimension_numbers = #tpu.dot_dimension_numbers<[1], [0], [0], [1], [0, 0, 1, 1], [], []>} : vector<2x32xf32>, vector<32x128xf32>, vector<2x128xf32> -> vector<2x128xf32>
    %504 = arith.addf %460, %503 : vector<2x128xf32>
    %505 = arith.negf %504 : vector<2x128xf32>
    %506 = math.exp %505 : vector<2x128xf32>
    %cst_80 = arith.constant 1.000000e+00 : f32
    %507 = vector.broadcast %cst_80 : f32 to vector<2x128xf32>
    %508 = arith.addf %507, %506 : vector<2x128xf32>
    %509 = arith.divf %507, %508 : vector<2x128xf32>
    %510 = vector.extract_strided_slice %504 {offsets = [0, 96], sizes = [2, 32], strides = [1, 1]} : vector<2x128xf32> to vector<2x32xf32>
    %511 = math.tanh %510 : vector<2x32xf32>
    %512 = vector.extract_strided_slice %509 {offsets = [0, 32], sizes = [2, 32], strides = [1, 1]} : vector<2x128xf32> to vector<2x32xf32>
    %513 = arith.mulf %512, %499 : vector<2x32xf32>
    %514 = vector.extract_strided_slice %509 {offsets = [0, 0], sizes = [2, 32], strides = [1, 1]} : vector<2x128xf32> to vector<2x32xf32>
    %515 = arith.mulf %514, %511 : vector<2x32xf32>
    %516 = arith.addf %513, %515 : vector<2x32xf32>
    %517 = vector.extract_strided_slice %509 {offsets = [0, 64], sizes = [2, 32], strides = [1, 1]} : vector<2x128xf32> to vector<2x32xf32>
    %518 = math.tanh %516 : vector<2x32xf32>
    %519 = arith.mulf %517, %518 : vector<2x32xf32>
    %cst_81 = arith.constant dense<0.000000e+00> : vector<2x128xf32>
    %520 = tpu.matmul %519, %466, %cst_81 {dimension_numbers = #tpu.dot_dimension_numbers<[1], [0], [0], [1], [0, 0, 1, 1], [], []>} : vector<2x32xf32>, vector<32x128xf32>, vector<2x128xf32> -> vector<2x128xf32>
    %521 = arith.addf %461, %520 : vector<2x128xf32>
    %522 = arith.negf %521 : vector<2x128xf32>
    %523 = math.exp %522 : vector<2x128xf32>
    %cst_82 = arith.constant 1.000000e+00 : f32
    %524 = vector.broadcast %cst_82 : f32 to vector<2x128xf32>
    %525 = arith.addf %524, %523 : vector<2x128xf32>
    %526 = arith.divf %524, %525 : vector<2x128xf32>
    %527 = vector.extract_strided_slice %521 {offsets = [0, 96], sizes = [2, 32], strides = [1, 1]} : vector<2x128xf32> to vector<2x32xf32>
    %528 = math.tanh %527 : vector<2x32xf32>
    %529 = vector.extract_strided_slice %526 {offsets = [0, 32], sizes = [2, 32], strides = [1, 1]} : vector<2x128xf32> to vector<2x32xf32>
    %530 = arith.mulf %529, %516 : vector<2x32xf32>
    %531 = vector.extract_strided_slice %526 {offsets = [0, 0], sizes = [2, 32], strides = [1, 1]} : vector<2x128xf32> to vector<2x32xf32>
    %532 = arith.mulf %531, %528 : vector<2x32xf32>
    %533 = arith.addf %530, %532 : vector<2x32xf32>
    %534 = vector.extract_strided_slice %526 {offsets = [0, 64], sizes = [2, 32], strides = [1, 1]} : vector<2x128xf32> to vector<2x32xf32>
    %535 = math.tanh %533 : vector<2x32xf32>
    %536 = arith.mulf %534, %535 : vector<2x32xf32>
    %cst_83 = arith.constant dense<0.000000e+00> : vector<2x128xf32>
    %537 = tpu.matmul %536, %466, %cst_83 {dimension_numbers = #tpu.dot_dimension_numbers<[1], [0], [0], [1], [0, 0, 1, 1], [], []>} : vector<2x32xf32>, vector<32x128xf32>, vector<2x128xf32> -> vector<2x128xf32>
    %538 = arith.addf %462, %537 : vector<2x128xf32>
    %539 = arith.negf %538 : vector<2x128xf32>
    %540 = math.exp %539 : vector<2x128xf32>
    %cst_84 = arith.constant 1.000000e+00 : f32
    %541 = vector.broadcast %cst_84 : f32 to vector<2x128xf32>
    %542 = arith.addf %541, %540 : vector<2x128xf32>
    %543 = arith.divf %541, %542 : vector<2x128xf32>
    %544 = vector.extract_strided_slice %538 {offsets = [0, 96], sizes = [2, 32], strides = [1, 1]} : vector<2x128xf32> to vector<2x32xf32>
    %545 = math.tanh %544 : vector<2x32xf32>
    %546 = vector.extract_strided_slice %543 {offsets = [0, 32], sizes = [2, 32], strides = [1, 1]} : vector<2x128xf32> to vector<2x32xf32>
    %547 = arith.mulf %546, %533 : vector<2x32xf32>
    %548 = vector.extract_strided_slice %543 {offsets = [0, 0], sizes = [2, 32], strides = [1, 1]} : vector<2x128xf32> to vector<2x32xf32>
    %549 = arith.mulf %548, %545 : vector<2x32xf32>
    %550 = arith.addf %547, %549 : vector<2x32xf32>
    %551 = vector.extract_strided_slice %543 {offsets = [0, 64], sizes = [2, 32], strides = [1, 1]} : vector<2x128xf32> to vector<2x32xf32>
    %552 = math.tanh %550 : vector<2x32xf32>
    %553 = arith.mulf %551, %552 : vector<2x32xf32>
    %cst_85 = arith.constant dense<0.000000e+00> : vector<2x128xf32>
    %554 = tpu.matmul %553, %466, %cst_85 {dimension_numbers = #tpu.dot_dimension_numbers<[1], [0], [0], [1], [0, 0, 1, 1], [], []>} : vector<2x32xf32>, vector<32x128xf32>, vector<2x128xf32> -> vector<2x128xf32>
    %555 = arith.addf %463, %554 : vector<2x128xf32>
    %556 = arith.negf %555 : vector<2x128xf32>
    %557 = math.exp %556 : vector<2x128xf32>
    %cst_86 = arith.constant 1.000000e+00 : f32
    %558 = vector.broadcast %cst_86 : f32 to vector<2x128xf32>
    %559 = arith.addf %558, %557 : vector<2x128xf32>
    %560 = arith.divf %558, %559 : vector<2x128xf32>
    %561 = vector.extract_strided_slice %555 {offsets = [0, 96], sizes = [2, 32], strides = [1, 1]} : vector<2x128xf32> to vector<2x32xf32>
    %562 = math.tanh %561 : vector<2x32xf32>
    %563 = vector.extract_strided_slice %560 {offsets = [0, 32], sizes = [2, 32], strides = [1, 1]} : vector<2x128xf32> to vector<2x32xf32>
    %564 = arith.mulf %563, %550 : vector<2x32xf32>
    %565 = vector.extract_strided_slice %560 {offsets = [0, 0], sizes = [2, 32], strides = [1, 1]} : vector<2x128xf32> to vector<2x32xf32>
    %566 = arith.mulf %565, %562 : vector<2x32xf32>
    %567 = arith.addf %564, %566 : vector<2x32xf32>
    %568 = vector.extract_strided_slice %560 {offsets = [0, 64], sizes = [2, 32], strides = [1, 1]} : vector<2x128xf32> to vector<2x32xf32>
    %569 = math.tanh %567 : vector<2x32xf32>
    %570 = arith.mulf %568, %569 : vector<2x32xf32>
    %cst_87 = arith.constant dense<0.000000e+00> : vector<2x128xf32>
    %571 = tpu.matmul %570, %466, %cst_87 {dimension_numbers = #tpu.dot_dimension_numbers<[1], [0], [0], [1], [0, 0, 1, 1], [], []>} : vector<2x32xf32>, vector<32x128xf32>, vector<2x128xf32> -> vector<2x128xf32>
    %572 = arith.addf %464, %571 : vector<2x128xf32>
    %573 = arith.negf %572 : vector<2x128xf32>
    %574 = math.exp %573 : vector<2x128xf32>
    %cst_88 = arith.constant 1.000000e+00 : f32
    %575 = vector.broadcast %cst_88 : f32 to vector<2x128xf32>
    %576 = arith.addf %575, %574 : vector<2x128xf32>
    %577 = arith.divf %575, %576 : vector<2x128xf32>
    %578 = vector.extract_strided_slice %572 {offsets = [0, 96], sizes = [2, 32], strides = [1, 1]} : vector<2x128xf32> to vector<2x32xf32>
    %579 = math.tanh %578 : vector<2x32xf32>
    %580 = vector.extract_strided_slice %577 {offsets = [0, 32], sizes = [2, 32], strides = [1, 1]} : vector<2x128xf32> to vector<2x32xf32>
    %581 = arith.mulf %580, %567 : vector<2x32xf32>
    %582 = vector.extract_strided_slice %577 {offsets = [0, 0], sizes = [2, 32], strides = [1, 1]} : vector<2x128xf32> to vector<2x32xf32>
    %583 = arith.mulf %582, %579 : vector<2x32xf32>
    %584 = arith.addf %581, %583 : vector<2x32xf32>
    %585 = vector.extract_strided_slice %577 {offsets = [0, 64], sizes = [2, 32], strides = [1, 1]} : vector<2x128xf32> to vector<2x32xf32>
    %586 = math.tanh %584 : vector<2x32xf32>
    %587 = arith.mulf %585, %586 : vector<2x32xf32>
    %cst_89 = arith.constant dense<0.000000e+00> : vector<2x128xf32>
    %588 = tpu.matmul %587, %466, %cst_89 {dimension_numbers = #tpu.dot_dimension_numbers<[1], [0], [0], [1], [0, 0, 1, 1], [], []>} : vector<2x32xf32>, vector<32x128xf32>, vector<2x128xf32> -> vector<2x128xf32>
    %589 = arith.addf %465, %588 : vector<2x128xf32>
    %590 = arith.negf %589 : vector<2x128xf32>
    %591 = math.exp %590 : vector<2x128xf32>
    %cst_90 = arith.constant 1.000000e+00 : f32
    %592 = vector.broadcast %cst_90 : f32 to vector<2x128xf32>
    %593 = arith.addf %592, %591 : vector<2x128xf32>
    %594 = arith.divf %592, %593 : vector<2x128xf32>
    %595 = vector.extract_strided_slice %589 {offsets = [0, 96], sizes = [2, 32], strides = [1, 1]} : vector<2x128xf32> to vector<2x32xf32>
    %596 = math.tanh %595 : vector<2x32xf32>
    %597 = vector.extract_strided_slice %594 {offsets = [0, 32], sizes = [2, 32], strides = [1, 1]} : vector<2x128xf32> to vector<2x32xf32>
    %598 = arith.mulf %597, %584 : vector<2x32xf32>
    %599 = vector.extract_strided_slice %594 {offsets = [0, 0], sizes = [2, 32], strides = [1, 1]} : vector<2x128xf32> to vector<2x32xf32>
    %600 = arith.mulf %599, %596 : vector<2x32xf32>
    %601 = arith.addf %598, %600 : vector<2x32xf32>
    %602 = vector.extract_strided_slice %594 {offsets = [0, 64], sizes = [2, 32], strides = [1, 1]} : vector<2x128xf32> to vector<2x32xf32>
    %603 = math.tanh %601 : vector<2x32xf32>
    %604 = arith.mulf %602, %603 : vector<2x32xf32>
    %605 = vector.extract_strided_slice %485 {offsets = [0, 0], sizes = [2, 16], strides = [1, 1]} : vector<2x32xf32> to vector<2x16xf32>
    %606 = vector.extract_strided_slice %604 {offsets = [0, 16], sizes = [2, 16], strides = [1, 1]} : vector<2x32xf32> to vector<2x16xf32>
    %607 = arith.addf %605, %606 : vector<2x16xf32>
    %608 = vector.extract_strided_slice %502 {offsets = [0, 0], sizes = [2, 16], strides = [1, 1]} : vector<2x32xf32> to vector<2x16xf32>
    %609 = vector.extract_strided_slice %587 {offsets = [0, 16], sizes = [2, 16], strides = [1, 1]} : vector<2x32xf32> to vector<2x16xf32>
    %610 = arith.addf %608, %609 : vector<2x16xf32>
    %611 = vector.extract_strided_slice %519 {offsets = [0, 0], sizes = [2, 16], strides = [1, 1]} : vector<2x32xf32> to vector<2x16xf32>
    %612 = vector.extract_strided_slice %570 {offsets = [0, 16], sizes = [2, 16], strides = [1, 1]} : vector<2x32xf32> to vector<2x16xf32>
    %613 = arith.addf %611, %612 : vector<2x16xf32>
    %614 = vector.extract_strided_slice %536 {offsets = [0, 0], sizes = [2, 16], strides = [1, 1]} : vector<2x32xf32> to vector<2x16xf32>
    %615 = vector.extract_strided_slice %553 {offsets = [0, 16], sizes = [2, 16], strides = [1, 1]} : vector<2x32xf32> to vector<2x16xf32>
    %616 = arith.addf %614, %615 : vector<2x16xf32>
    %617 = vector.extract_strided_slice %553 {offsets = [0, 0], sizes = [2, 16], strides = [1, 1]} : vector<2x32xf32> to vector<2x16xf32>
    %618 = vector.extract_strided_slice %536 {offsets = [0, 16], sizes = [2, 16], strides = [1, 1]} : vector<2x32xf32> to vector<2x16xf32>
    %619 = arith.addf %617, %618 : vector<2x16xf32>
    %620 = vector.extract_strided_slice %570 {offsets = [0, 0], sizes = [2, 16], strides = [1, 1]} : vector<2x32xf32> to vector<2x16xf32>
    %621 = vector.extract_strided_slice %519 {offsets = [0, 16], sizes = [2, 16], strides = [1, 1]} : vector<2x32xf32> to vector<2x16xf32>
    %622 = arith.addf %620, %621 : vector<2x16xf32>
    %623 = vector.extract_strided_slice %587 {offsets = [0, 0], sizes = [2, 16], strides = [1, 1]} : vector<2x32xf32> to vector<2x16xf32>
    %624 = vector.extract_strided_slice %502 {offsets = [0, 16], sizes = [2, 16], strides = [1, 1]} : vector<2x32xf32> to vector<2x16xf32>
    %625 = arith.addf %623, %624 : vector<2x16xf32>
    %626 = vector.extract_strided_slice %604 {offsets = [0, 0], sizes = [2, 16], strides = [1, 1]} : vector<2x32xf32> to vector<2x16xf32>
    %627 = vector.extract_strided_slice %485 {offsets = [0, 16], sizes = [2, 16], strides = [1, 1]} : vector<2x32xf32> to vector<2x16xf32>
    %628 = arith.addf %626, %627 : vector<2x16xf32>
    %629 = vector.extract_strided_slice %607 {offsets = [0, 0], sizes = [1, 16], strides = [1, 1]} : vector<2x16xf32> to vector<1x16xf32>
    %630 = vector.extract_strided_slice %610 {offsets = [0, 0], sizes = [1, 16], strides = [1, 1]} : vector<2x16xf32> to vector<1x16xf32>
    %631 = vector.extract_strided_slice %613 {offsets = [0, 0], sizes = [1, 16], strides = [1, 1]} : vector<2x16xf32> to vector<1x16xf32>
    %632 = vector.extract_strided_slice %616 {offsets = [0, 0], sizes = [1, 16], strides = [1, 1]} : vector<2x16xf32> to vector<1x16xf32>
    %633 = vector.extract_strided_slice %619 {offsets = [0, 0], sizes = [1, 16], strides = [1, 1]} : vector<2x16xf32> to vector<1x16xf32>
    %634 = vector.extract_strided_slice %622 {offsets = [0, 0], sizes = [1, 16], strides = [1, 1]} : vector<2x16xf32> to vector<1x16xf32>
    %635 = vector.extract_strided_slice %625 {offsets = [0, 0], sizes = [1, 16], strides = [1, 1]} : vector<2x16xf32> to vector<1x16xf32>
    %636 = vector.extract_strided_slice %628 {offsets = [0, 0], sizes = [1, 16], strides = [1, 1]} : vector<2x16xf32> to vector<1x16xf32>
    %637 = vector.extract_strided_slice %607 {offsets = [1, 0], sizes = [1, 16], strides = [1, 1]} : vector<2x16xf32> to vector<1x16xf32>
    %638 = vector.extract_strided_slice %610 {offsets = [1, 0], sizes = [1, 16], strides = [1, 1]} : vector<2x16xf32> to vector<1x16xf32>
    %639 = vector.extract_strided_slice %613 {offsets = [1, 0], sizes = [1, 16], strides = [1, 1]} : vector<2x16xf32> to vector<1x16xf32>
    %640 = vector.extract_strided_slice %616 {offsets = [1, 0], sizes = [1, 16], strides = [1, 1]} : vector<2x16xf32> to vector<1x16xf32>
    %641 = vector.extract_strided_slice %619 {offsets = [1, 0], sizes = [1, 16], strides = [1, 1]} : vector<2x16xf32> to vector<1x16xf32>
    %642 = vector.extract_strided_slice %622 {offsets = [1, 0], sizes = [1, 16], strides = [1, 1]} : vector<2x16xf32> to vector<1x16xf32>
    %643 = vector.extract_strided_slice %625 {offsets = [1, 0], sizes = [1, 16], strides = [1, 1]} : vector<2x16xf32> to vector<1x16xf32>
    %644 = vector.extract_strided_slice %628 {offsets = [1, 0], sizes = [1, 16], strides = [1, 1]} : vector<2x16xf32> to vector<1x16xf32>
    %645 = tpu.concatenate %629, %630, %631, %632, %633, %634, %635, %636, %637, %638, %639, %640, %641, %642, %643, %644 in 0 : vector<1x16xf32>, vector<1x16xf32>, vector<1x16xf32>, vector<1x16xf32>, vector<1x16xf32>, vector<1x16xf32>, vector<1x16xf32>, vector<1x16xf32>, vector<1x16xf32>, vector<1x16xf32>, vector<1x16xf32>, vector<1x16xf32>, vector<1x16xf32>, vector<1x16xf32>, vector<1x16xf32>, vector<1x16xf32> -> vector<16x16xf32>
    %cst_91 = arith.constant 0.000000e+00 : f32
    %646 = vector.broadcast %cst_91 : f32 to vector<16x16xf32>
    %647 = arith.cmpf oge, %645, %646 : vector<16x16xf32>
    %cst_92 = arith.constant 0.00999999977 : f32
    %648 = vector.broadcast %cst_92 : f32 to vector<16x16xf32>
    %649 = arith.mulf %648, %645 : vector<16x16xf32>
    %650 = arith.select %647, %645, %649 : vector<16x16xi1>, vector<16x16xf32>
    %c0_93 = arith.constant 0 : index
    %c0_94 = arith.constant 0 : index
    %651 = vector.load %arg10[%c0_93, %c0_94] : memref<16x16xf32, #tpu.memory_space<vmem>>, vector<16x16xf32>
    tpu.vector_store %arg10[%c0_93, %c0_94], %650 {strides = array<i32>} : memref<16x16xf32, #tpu.memory_space<vmem>>, vector<16x16xf32>,
    return
  }
}

</mosaic_0001>

<llo_original>
// kernel: bi_lstm_standard_forward.1
$region0: #{bi_lstm_standard_forward.1}
  #allocation0 [shape = 'u32[]', space=smem, size = 0x4, offset = 0x4, fixed_abs, tag = 'smem constant byte address 0x4 - core index']
  #allocation1 [shape = 'u32[72,128]{1,0:T(1,128)}', space=vmem, size = 0x9000, scoped, tag = 'internal scratch']
  %s0 = inlined_call_operand.hbm [shape: f32[16,8], index: 0, kind: input, shape index: {}]
  %s1 = inlined_call_operand.hbm [shape: f32[8,128], index: 1, kind: input, shape index: {}]
  %s2 = inlined_call_operand.hbm [shape: f32[32,128], index: 2, kind: input, shape index: {}]
  %s3 = inlined_call_operand.vmem [shape: f32[1,128], index: 3, kind: input, shape index: {}]
  %s4 = inlined_call_operand.hbm [shape: f32[16,256], index: 4, kind: input, shape index: {}]
  %s5 = inlined_call_operand.hbm [shape: f32[64,256], index: 5, kind: input, shape index: {}]
  %s6 = inlined_call_operand.vmem [shape: f32[1,256], index: 6, kind: input, shape index: {}]
  %s7 = inlined_call_operand.hbm [shape: f32[32,128], index: 7, kind: input, shape index: {}]
  %s8 = inlined_call_operand.hbm [shape: f32[32,128], index: 8, kind: input, shape index: {}]
  %s9 = inlined_call_operand.vmem [shape: f32[1,128], index: 9, kind: input, shape index: {}]
  %s10 = inlined_call_operand.hbm [shape: f32[16,16], index: 10, kind: output, shape index: {}]
  %s11 = sld [smem:[#allocation0]]
  $region78: #{bi_lstm_standard_forward.1} parent=0
    _
  %s13 = ssub.s32 1, %s11
  %s14 = scalar_select 0, %s13, %s11
  $region1: #{bi_lstm_standard_forward.1} parent=0
    #allocation2 [shape = 'u8[8192]{0}', space=vmem, size = 0x2000, scoped, tag = 'input window, operand 0, single buffered']
    #allocation3 [shape = 's32[1]{0}', space=sflag, size = 0x4, scoped, tag = 'scoped memory for bi_lstm_standard_forward.1']
    #allocation4 [shape = 's32[1]{0}', space=sflag, size = 0x4, scoped, tag = 'scoped memory for bi_lstm_standard_forward.1']
    #allocation5 [shape = 'u8[4096]{0}', space=vmem, size = 0x1000, scoped, tag = 'input window, operand 1, single buffered']
    #allocation6 [shape = 's32[1]{0}', space=sflag, size = 0x4, scoped, tag = 'scoped memory for bi_lstm_standard_forward.1']
    #allocation7 [shape = 'u8[16384]{0}', space=vmem, size = 0x4000, scoped, tag = 'input window, operand 2, single buffered']
    #allocation8 [shape = 'u8[16384]{0}', space=vmem, size = 0x4000, scoped, tag = 'input window, operand 4, single buffered']
    #allocation9 [shape = 's32[1]{0}', space=sflag, size = 0x4, scoped, tag = 'scoped memory for bi_lstm_standard_forward.1']
    #allocation10 [shape = 'u8[65536]{0}', space=vmem, size = 0x10000, scoped, tag = 'input window, operand 5, single buffered']
    #allocation11 [shape = 'u8[16384]{0}', space=vmem, size = 0x4000, scoped, tag = 'input window, operand 7, single buffered']
    #allocation12 [shape = 's32[1]{0}', space=sflag, size = 0x4, scoped, tag = 'scoped memory for bi_lstm_standard_forward.1']
    #allocation13 [shape = 'u8[16384]{0}', space=vmem, size = 0x4000, scoped, tag = 'input window, operand 8, single buffered']
    #allocation14 [shape = 'u8[8192]{0}', space=vmem, size = 0x2000, scoped, tag = 'output window, operand 0, single buffered']
    %15 = vsyncpa [#allocation3], 0
    %16 = vsyncpa [#allocation6], 0
    %17 = vsyncpa [#allocation9], 0
    %18 = vsyncpa [#allocation12], 0
    %19 = vsyncpa [#allocation4], 0
    // Predicated region
    $region2: #{bi_lstm_standard_forward.1} parent=1 // pred_check
      _
    $region3: #{bi_lstm_standard_forward.1} parent=1 // pred_check_branch
      %21 = sbr.rel (0) target = $region5
    $region4: #{bi_lstm_standard_forward.1} parent=1 // pred_region
      %23 = vsyncadd [#allocation3], 0
      %s24 = sshll.u32 %s0, 4
      %s25 = int_to_ptr.hbm [resolvable:$true] %s24
      %s26 = sshll.u32 [#allocation2], 4
      %s27 = int_to_ptr.vmem [resolvable:$true] %s26
      %32 = dma.hbm_to_vmem [thread:$0]  %s25, 256, %s27, [#allocation3], 128, 128, 8
    $region5: #{bi_lstm_standard_forward.1} parent=1 // pred_fallthru
      _
    // Predicated region
    $region6: #{bi_lstm_standard_forward.1} parent=1 // pred_check
      _
    $region7: #{bi_lstm_standard_forward.1} parent=1 // pred_check_branch
      %34 = sbr.rel (0) target = $region9
    $region8: #{bi_lstm_standard_forward.1} parent=1 // pred_region
      %36 = vsyncadd [#allocation6], 0
      %s38 = sshll.u32 %s1, 4
      %s39 = int_to_ptr.hbm [resolvable:$true] %s38
      %s40 = sshll.u32 [#allocation5], 4
      %s41 = int_to_ptr.vmem [resolvable:$true] %s40
      %43 = dma.hbm_to_vmem [thread:$0]  %s39, 128, %s41, [#allocation6]
    $region9: #{bi_lstm_standard_forward.1} parent=1 // pred_fallthru
      _
    // Predicated region
    $region10: #{bi_lstm_standard_forward.1} parent=1 // pred_check
      _
    $region11: #{bi_lstm_standard_forward.1} parent=1 // pred_check_branch
      %45 = sbr.rel (0) target = $region13
    $region12: #{bi_lstm_standard_forward.1} parent=1 // pred_region
      %47 = vsyncadd [#allocation6], 0
      %s48 = sshll.u32 %s2, 4
      %s49 = int_to_ptr.hbm [resolvable:$true] %s48
      %s50 = sshll.u32 [#allocation7], 4
      %s51 = int_to_ptr.vmem [resolvable:$true] %s50
      %56 = dma.hbm_to_vmem [thread:$0]  %s49, 512, %s51, [#allocation6], 128, 128, 8
    $region13: #{bi_lstm_standard_forward.1} parent=1 // pred_fallthru
      _
    // Predicated region
    $region14: #{bi_lstm_standard_forward.1} parent=1 // pred_check
      _
    $region15: #{bi_lstm_standard_forward.1} parent=1 // pred_check_branch
      %58 = sbr.rel (0) target = $region17
    $region16: #{bi_lstm_standard_forward.1} parent=1 // pred_region
      _
    $region17: #{bi_lstm_standard_forward.1} parent=1 // pred_fallthru
      _
    // Predicated region
    $region18: #{bi_lstm_standard_forward.1} parent=1 // pred_check
      _
    $region19: #{bi_lstm_standard_forward.1} parent=1 // pred_check_branch
      %60 = sbr.rel (0) target = $region21
    $region20: #{bi_lstm_standard_forward.1} parent=1 // pred_region
      %62 = vsyncadd [#allocation9], 0
      %s63 = sshll.u32 %s4, 4
      %s64 = int_to_ptr.hbm [resolvable:$true] %s63
      %s65 = sshll.u32 [#allocation8], 4
      %s66 = int_to_ptr.vmem [resolvable:$true] %s65
      %71 = dma.hbm_to_vmem [thread:$0]  %s64, 512, %s66, [#allocation9], 256, 256, 16
    $region21: #{bi_lstm_standard_forward.1} parent=1 // pred_fallthru
      _
    // Predicated region
    $region22: #{bi_lstm_standard_forward.1} parent=1 // pred_check
      _
    $region23: #{bi_lstm_standard_forward.1} parent=1 // pred_check_branch
      %73 = sbr.rel (0) target = $region25
    $region24: #{bi_lstm_standard_forward.1} parent=1 // pred_region
      %75 = vsyncadd [#allocation9], 0
      %s76 = sshll.u32 %s5, 4
      %s77 = int_to_ptr.hbm [resolvable:$true] %s76
      %s78 = sshll.u32 [#allocation10], 4
      %s79 = int_to_ptr.vmem [resolvable:$true] %s78
      %84 = dma.hbm_to_vmem [thread:$0]  %s77, 2048, %s79, [#allocation9], 256, 256, 16
    $region25: #{bi_lstm_standard_forward.1} parent=1 // pred_fallthru
      _
    // Predicated region
    $region26: #{bi_lstm_standard_forward.1} parent=1 // pred_check
      _
    $region27: #{bi_lstm_standard_forward.1} parent=1 // pred_check_branch
      %86 = sbr.rel (0) target = $region29
    $region28: #{bi_lstm_standard_forward.1} parent=1 // pred_region
      _
    $region29: #{bi_lstm_standard_forward.1} parent=1 // pred_fallthru
      _
    // Predicated region
    $region30: #{bi_lstm_standard_forward.1} parent=1 // pred_check
      _
    $region31: #{bi_lstm_standard_forward.1} parent=1 // pred_check_branch
      %88 = sbr.rel (0) target = $region33
    $region32: #{bi_lstm_standard_forward.1} parent=1 // pred_region
      %90 = vsyncadd [#allocation12], 0
      %s91 = sshll.u32 %s7, 4
      %s92 = int_to_ptr.hbm [resolvable:$true] %s91
      %s93 = sshll.u32 [#allocation11], 4
      %s94 = int_to_ptr.vmem [resolvable:$true] %s93
      %99 = dma.hbm_to_vmem [thread:$0]  %s92, 512, %s94, [#allocation12], 128, 128, 8
    $region33: #{bi_lstm_standard_forward.1} parent=1 // pred_fallthru
      _
    // Predicated region
    $region34: #{bi_lstm_standard_forward.1} parent=1 // pred_check
      _
    $region35: #{bi_lstm_standard_forward.1} parent=1 // pred_check_branch
      %101 = sbr.rel (0) target = $region37
    $region36: #{bi_lstm_standard_forward.1} parent=1 // pred_region
      %103 = vsyncadd [#allocation12], 0
      %s104 = sshll.u32 %s8, 4
      %s105 = int_to_ptr.hbm [resolvable:$true] %s104
      %s106 = sshll.u32 [#allocation13], 4
      %s107 = int_to_ptr.vmem [resolvable:$true] %s106
      %112 = dma.hbm_to_vmem [thread:$0]  %s105, 512, %s107, [#allocation12], 128, 128, 8
    $region37: #{bi_lstm_standard_forward.1} parent=1 // pred_fallthru
      _
    // Predicated region
    $region38: #{bi_lstm_standard_forward.1} parent=1 // pred_check
      _
    $region39: #{bi_lstm_standard_forward.1} parent=1 // pred_check_branch
      %114 = sbr.rel (0) target = $region41
    $region40: #{bi_lstm_standard_forward.1} parent=1 // pred_region
      _
    $region41: #{bi_lstm_standard_forward.1} parent=1 // pred_fallthru
      _
    // Predicated region
    $region42: #{bi_lstm_standard_forward.1} parent=1 // pred_check
      _
    $region43: #{bi_lstm_standard_forward.1} parent=1 // pred_check_branch
      %116 = sbr.rel (0) target = $region45
    $region44: #{bi_lstm_standard_forward.1} parent=1 // pred_region
      %118 = dma.done [#allocation3], 256
    $region45: #{bi_lstm_standard_forward.1} parent=1 // pred_fallthru
      _
    // Predicated region
    $region46: #{bi_lstm_standard_forward.1} parent=1 // pred_check
      _
    $region47: #{bi_lstm_standard_forward.1} parent=1 // pred_check_branch
      %120 = sbr.rel (0) target = $region49
    $region48: #{bi_lstm_standard_forward.1} parent=1 // pred_region
      %122 = dma.done [#allocation6], 128
    $region49: #{bi_lstm_standard_forward.1} parent=1 // pred_fallthru
      _
    // Predicated region
    $region50: #{bi_lstm_standard_forward.1} parent=1 // pred_check
      _
    $region51: #{bi_lstm_standard_forward.1} parent=1 // pred_check_branch
      %124 = sbr.rel (0) target = $region53
    $region52: #{bi_lstm_standard_forward.1} parent=1 // pred_region
      %126 = dma.done [#allocation6], 512
    $region53: #{bi_lstm_standard_forward.1} parent=1 // pred_fallthru
      _
    // Predicated region
    $region54: #{bi_lstm_standard_forward.1} parent=1 // pred_check
      _
    $region55: #{bi_lstm_standard_forward.1} parent=1 // pred_check_branch
      %128 = sbr.rel (0) target = $region57
    $region56: #{bi_lstm_standard_forward.1} parent=1 // pred_region
      %130 = dma.done [#allocation9], 512
    $region57: #{bi_lstm_standard_forward.1} parent=1 // pred_fallthru
      _
    // Predicated region
    $region58: #{bi_lstm_standard_forward.1} parent=1 // pred_check
      _
    $region59: #{bi_lstm_standard_forward.1} parent=1 // pred_check_branch
      %132 = sbr.rel (0) target = $region61
    $region60: #{bi_lstm_standard_forward.1} parent=1 // pred_region
      %134 = dma.done [#allocation9], 2048
    $region61: #{bi_lstm_standard_forward.1} parent=1 // pred_fallthru
      _
    // Predicated region
    $region62: #{bi_lstm_standard_forward.1} parent=1 // pred_check
      _
    $region63: #{bi_lstm_standard_forward.1} parent=1 // pred_check_branch
      %136 = sbr.rel (0) target = $region65
    $region64: #{bi_lstm_standard_forward.1} parent=1 // pred_region
      %138 = dma.done [#allocation12], 512
    $region65: #{bi_lstm_standard_forward.1} parent=1 // pred_fallthru
      _
    // Predicated region
    $region66: #{bi_lstm_standard_forward.1} parent=1 // pred_check
      _
    $region67: #{bi_lstm_standard_forward.1} parent=1 // pred_check_branch
      %140 = sbr.rel (0) target = $region69
    $region68: #{bi_lstm_standard_forward.1} parent=1 // pred_region
      %142 = dma.done [#allocation12], 512
    $region69: #{bi_lstm_standard_forward.1} parent=1 // pred_fallthru
      _
    %v143 = vld [vmem:[#allocation2] sm:$0xff]
    %v144 = vld [vmem:[#allocation2 + $0x8] sm:$0xff]
    %v146 = vrot.slane %v144, 7
    %v149 = vrot.slane %v143, 7
    %v151 = vrot.slane %v144, 6
    %v153 = vrot.slane %v143, 6
    %v155 = vrot.slane %v144, 5
    %v157 = vrot.slane %v143, 5
    %v159 = vrot.slane %v144, 4
    %v161 = vrot.slane %v143, 4
    %v163 = vrot.slane %v144, 3
    %v165 = vrot.slane %v143, 3
    %v167 = vrot.slane %v144, 2
    %v169 = vrot.slane %v143, 2
    %v171 = vrot.slane %v144, 1
    %v173 = vrot.slane %v143, 1
    %vm175 = vcmask 1040384
    %v176 = vsel %vm175, %v143, %v146
    %vm177 = vcmask 1041408
    %v178 = vsel %vm177, %v176, %v149
    %vm179 = vcmask 1042432
    %v180 = vsel %vm179, %v178, %v151
    %vm181 = vcmask 1043456
    %v182 = vsel %vm181, %v180, %v153
    %vm183 = vcmask 1044480
    %v184 = vsel %vm183, %v182, %v155
    %vm185 = vcmask 1045504
    %v186 = vsel %vm185, %v184, %v157
    %vm187 = vcmask 1046528
    %v188 = vsel %vm187, %v186, %v159
    %v189 = vsel %vm175, %v161, %v163
    %v190 = vsel %vm177, %v189, %v165
    %v191 = vsel %vm179, %v190, %v167
    %v192 = vsel %vm181, %v191, %v169
    %v193 = vsel %vm183, %v192, %v171
    %v194 = vsel %vm185, %v193, %v173
    %v195 = vsel %vm187, %v194, %v144
    %v196 = vld [vmem:[#allocation5] sm:$0xff]
    %v197 = vld [vmem:[%s3] sm:$0x1]
    %v199 = vperm.slane %v197, 0
    %vm201 = vcmask 64512
    %v203 = vsel %vm201, %v188, 0
    %v206 = vsel %vm201, %v195, 0
    %208 = vmatpush.msra.mxu0 0.0
    %209 = vmatpush.msra.mxu0 0.0
    %210 = vmatpush.msra.mxu0 0.0
    %211 = vmatpush.msra.mxu0 0.0
    %212 = vmatpush.msra.mxu0 0.0
    %213 = vmatpush.msra.mxu0 0.0
    %214 = vmatpush.msra.mxu0 0.0
    %215 = vmatpush.msra.mxu0 0.0
    %216 = vmatpush.msra.mxu0 0.0
    %217 = vmatpush.msra.mxu0 0.0
    %218 = vmatpush.msra.mxu0 0.0
    %219 = vmatpush.msra.mxu0 0.0
    %220 = vmatpush.msra.mxu0 0.0
    %221 = vmatpush.msra.mxu0 0.0
    %222 = vmatpush.msra.mxu0 0.0
    %223 = vmatpush.msra.mxu0 %v196
    %224 = vmatmul.f32.gmra.mxu0 %v203
    %v225 = vpop.f32.mrf.mxu0
    %v226 = vadd.f32 %v199, %v225
    %227 = vmatmul.f32.gmra.mxu0 %v206
    %v228 = vpop.f32.mrf.mxu0
    %v229 = vadd.f32 %v199, %v228
    %230 = vdwg.mxu0
    %v231 = vlaneseq
    %v232 = vand.u32 %v231, 127
    %vm233 = vcmp.lt.s32.totalorder %v232, 0
    %v234 = vsub.s32 0, %v232
    %v235 = vsel %vm233, %v234, %v232
    %v236 = vshrl.u32 %v235, 5
    %v237 = vand.u32 %v235, 31
    %v238 = vsub.s32 0, %v237
    %v239 = vsel %vm233, %v238, %v237
    %vm240 = vcmp.ne.s32.totalorder %v239, 0
    %vm241 = vcmp.lt.s32.totalorder %v239, 0
    %vm242 = vmand %vm241, %vm240
    %v243 = vadd.s32 %v239, 32
    %v244 = vsel %vm242, %v243, %v239
    %vm245 = vcmp.ge.s32.totalorder %v244, 16
    %v247 = vrot.slane %v226, 2
    %v249 = vsel %vm245, %v229, %v247
    %v250 = vrot.slane %v226, 6
    %v252 = vsel %vm245, %v229, %v250
    %v254 = vrot.slane %v229, 2
    %v256 = vsel %vm245, %v226, %v254
    %v257 = vrot.slane %v229, 6
    %v259 = vsel %vm245, %v226, %v257
    %v260 = vld [vmem:[#allocation7] sm:$0xff]
    %v261 = vld [vmem:[#allocation7 + $0x8] sm:$0xff]
    %v262 = vld [vmem:[#allocation7 + $0x10] sm:$0xff]
    %v263 = vld [vmem:[#allocation7 + $0x18] sm:$0xff]
    %vm264 = vcmask 261120
    %v266 = vsel %vm264, 0.0, 0
    %268 = vmatpush.msra.mxu0 0.0
    %269 = vmatpush.msra.mxu0 0.0
    %270 = vmatpush.msra.mxu0 0.0
    %271 = vmatpush.msra.mxu0 0.0
    %272 = vmatpush.msra.mxu0 0.0
    %273 = vmatpush.msra.mxu0 0.0
    %274 = vmatpush.msra.mxu0 0.0
    %275 = vmatpush.msra.mxu0 0.0
    %276 = vmatpush.msra.mxu0 0.0
    %277 = vmatpush.msra.mxu0 0.0
    %278 = vmatpush.msra.mxu0 0.0
    %279 = vmatpush.msra.mxu0 0.0
    %280 = vmatpush.msra.mxu0 %v263
    %281 = vmatpush.msra.mxu0 %v262
    %282 = vmatpush.msra.mxu0 %v261
    %283 = vmatpush.msra.mxu0 %v260
    %284 = vmatmul.f32.gmra.mxu0 %v266
    %v285 = vpop.f32.mrf.mxu0
    %v286 = vadd.f32 0.0, %v285
    %287 = vdwg.mxu0
    %v289 = vrot.slane %v286, 2
    %v291 = vadd.f32 %v249, %v289
    %v292 = vxor.u32 %v291, 2147483648
    %v293 = vmul.f32 %v292, 1.442695
    %v294 = vpow.pop %v293
    %v295 = vadd.f32 %v294, 1.0
    %v296 = vrcp.pop %v295
    %v297 = vmul.f32 %v295, %v296
    %v298 = vsub.f32 1.0, %v297
    %v299 = vmul.f32 %v296, %v298
    %v300 = vadd.f32 %v296, %v299
    %vm301 = vweird.f32 %v295
    %vm302 = vweird.f32 %v296
    %vm303 = vmor %vm301, %vm302
    %v304 = vsel %vm303, %v296, %v300
    %v305 = vand.u32 2147483647, %v295
    %vm306 = vcmp.eq.f32.partialorder %v305, 8.507059e+37
    %v307 = vand.u32 %v295, 2147483648
    %v308 = vor.u32 1.1754944e-38, %v307
    %v309 = vsel %vm306, %v308, %v304
    %v310 = vmul.f32 1.0, %v309
    %v311 = vtanh.pop %v291
    %v312 = vmul.f32 %v310, 0.0
    %314 = vrot.lane.b32.xlu0 %v311, 32
    %v315 = vpop.permute.xlu0 %314
    %v317 = vmul.f32 %v310, %v315
    %319 = vrot.lane.b32.xlu0 %v317, 32
    %v320 = vpop.permute.xlu0 %319
    %v322 = vadd.f32 %v312, %v320
    %v323 = vtanh.pop %v322
    %325 = vrot.lane.b32.xlu0 %v323, 32
    %v326 = vpop.permute.xlu0 %325
    %v328 = vmul.f32 %v310, %v326
    %v330 = vrot.slane %v328, 6
    %331 = vrot.lane.b32.xlu0 %v330, 64
    %v332 = vpop.permute.xlu0 %331
    %v333 = vsel %vm264, %v332, 0
    %335 = vmatpush.msra.mxu0 0.0
    %336 = vmatpush.msra.mxu0 0.0
    %337 = vmatpush.msra.mxu0 0.0
    %338 = vmatpush.msra.mxu0 0.0
    %339 = vmatpush.msra.mxu0 0.0
    %340 = vmatpush.msra.mxu0 0.0
    %341 = vmatpush.msra.mxu0 0.0
    %342 = vmatpush.msra.mxu0 0.0
    %343 = vmatpush.msra.mxu0 0.0
    %344 = vmatpush.msra.mxu0 0.0
    %345 = vmatpush.msra.mxu0 0.0
    %346 = vmatpush.msra.mxu0 0.0
    %347 = vmatpush.msra.mxu0 %v263
    %348 = vmatpush.msra.mxu0 %v262
    %349 = vmatpush.msra.mxu0 %v261
    %350 = vmatpush.msra.mxu0 %v260
    %351 = vmatmul.f32.gmra.mxu0 %v333
    %v352 = vpop.f32.mrf.mxu0
    %v353 = vadd.f32 0.0, %v352
    %354 = vdwg.mxu0
    %v356 = vrot.slane %v353, 4
    %v358 = vadd.f32 %v252, %v356
    %v359 = vxor.u32 %v358, 2147483648
    %v360 = vmul.f32 %v359, 1.442695
    %v361 = vpow.pop %v360
    %v362 = vadd.f32 %v361, 1.0
    %v363 = vrcp.pop %v362
    %v364 = vmul.f32 %v362, %v363
    %v365 = vsub.f32 1.0, %v364
    %v366 = vmul.f32 %v363, %v365
    %v367 = vadd.f32 %v363, %v366
    %vm368 = vweird.f32 %v362
    %vm369 = vweird.f32 %v363
    %vm370 = vmor %vm368, %vm369
    %v371 = vsel %vm370, %v363, %v367
    %v372 = vand.u32 2147483647, %v362
    %vm373 = vcmp.eq.f32.partialorder %v372, 8.507059e+37
    %v374 = vand.u32 %v362, 2147483648
    %v375 = vor.u32 1.1754944e-38, %v374
    %v376 = vsel %vm373, %v375, %v371
    %v377 = vmul.f32 1.0, %v376
    %v378 = vtanh.pop %v358
    %v380 = vrot.slane %v322, 2
    %v382 = vmul.f32 %v377, %v380
    %384 = vrot.lane.b32.xlu0 %v378, 32
    %v385 = vpop.permute.xlu0 %384
    %v387 = vmul.f32 %v377, %v385
    %389 = vrot.lane.b32.xlu0 %v387, 32
    %v390 = vpop.permute.xlu0 %389
    %v392 = vadd.f32 %v382, %v390
    %v393 = vtanh.pop %v392
    %395 = vrot.lane.b32.xlu0 %v393, 32
    %v396 = vpop.permute.xlu0 %395
    %v398 = vmul.f32 %v377, %v396
    %v400 = vrot.slane %v398, 4
    %401 = vrot.lane.b32.xlu0 %v400, 64
    %v402 = vpop.permute.xlu0 %401
    %v403 = vsel %vm264, %v402, 0
    %405 = vmatpush.msra.mxu0 0.0
    %406 = vmatpush.msra.mxu0 0.0
    %407 = vmatpush.msra.mxu0 0.0
    %408 = vmatpush.msra.mxu0 0.0
    %409 = vmatpush.msra.mxu0 0.0
    %410 = vmatpush.msra.mxu0 0.0
    %411 = vmatpush.msra.mxu0 0.0
    %412 = vmatpush.msra.mxu0 0.0
    %413 = vmatpush.msra.mxu0 0.0
    %414 = vmatpush.msra.mxu0 0.0
    %415 = vmatpush.msra.mxu0 0.0
    %416 = vmatpush.msra.mxu0 0.0
    %417 = vmatpush.msra.mxu0 %v263
    %418 = vmatpush.msra.mxu0 %v262
    %419 = vmatpush.msra.mxu0 %v261
    %420 = vmatpush.msra.mxu0 %v260
    %421 = vmatmul.f32.gmra.mxu0 %v403
    %v422 = vpop.f32.mrf.mxu0
    %v423 = vadd.f32 0.0, %v422
    %424 = vdwg.mxu0
    %v426 = vrot.slane %v423, 6
    %v428 = vadd.f32 %v249, %v426
    %v429 = vxor.u32 %v428, 2147483648
    %v430 = vmul.f32 %v429, 1.442695
    %v431 = vpow.pop %v430
    %v432 = vadd.f32 %v431, 1.0
    %v433 = vrcp.pop %v432
    %v434 = vmul.f32 %v432, %v433
    %v435 = vsub.f32 1.0, %v434
    %v436 = vmul.f32 %v433, %v435
    %v437 = vadd.f32 %v433, %v436
    %vm438 = vweird.f32 %v432
    %vm439 = vweird.f32 %v433
    %vm440 = vmor %vm438, %vm439
    %v441 = vsel %vm440, %v433, %v437
    %v442 = vand.u32 2147483647, %v432
    %vm443 = vcmp.eq.f32.partialorder %v442, 8.507059e+37
    %v444 = vand.u32 %v432, 2147483648
    %v445 = vor.u32 1.1754944e-38, %v444
    %v446 = vsel %vm443, %v445, %v441
    %v447 = vmul.f32 1.0, %v446
    %v448 = vtanh.pop %v428
    %v450 = vrot.slane %v392, 2
    %v452 = vmul.f32 %v447, %v450
    %454 = vrot.lane.b32.xlu0 %v448, 32
    %v455 = vpop.permute.xlu0 %454
    %v457 = vmul.f32 %v447, %v455
    %459 = vrot.lane.b32.xlu0 %v457, 32
    %v460 = vpop.permute.xlu0 %459
    %v462 = vadd.f32 %v452, %v460
    %v463 = vtanh.pop %v462
    %465 = vrot.lane.b32.xlu0 %v463, 32
    %v466 = vpop.permute.xlu0 %465
    %v468 = vmul.f32 %v447, %v466
    %v470 = vrot.slane %v468, 2
    %471 = vrot.lane.b32.xlu0 %v470, 64
    %v472 = vpop.permute.xlu0 %471
    %v473 = vsel %vm264, %v472, 0
    %475 = vmatpush.msra.mxu0 0.0
    %476 = vmatpush.msra.mxu0 0.0
    %477 = vmatpush.msra.mxu0 0.0
    %478 = vmatpush.msra.mxu0 0.0
    %479 = vmatpush.msra.mxu0 0.0
    %480 = vmatpush.msra.mxu0 0.0
    %481 = vmatpush.msra.mxu0 0.0
    %482 = vmatpush.msra.mxu0 0.0
    %483 = vmatpush.msra.mxu0 0.0
    %484 = vmatpush.msra.mxu0 0.0
    %485 = vmatpush.msra.mxu0 0.0
    %486 = vmatpush.msra.mxu0 0.0
    %487 = vmatpush.msra.mxu0 %v263
    %488 = vmatpush.msra.mxu0 %v262
    %489 = vmatpush.msra.mxu0 %v261
    %490 = vmatpush.msra.mxu0 %v260
    %491 = vmatmul.f32.gmra.mxu0 %v473
    %v492 = vpop.f32.mrf.mxu0
    %v493 = vadd.f32 0.0, %v492
    %494 = vdwg.mxu0
    %v495 = vadd.f32 %v252, %v493
    %v496 = vxor.u32 %v495, 2147483648
    %v497 = vmul.f32 %v496, 1.442695
    %v498 = vpow.pop %v497
    %v499 = vadd.f32 %v498, 1.0
    %v500 = vrcp.pop %v499
    %v501 = vmul.f32 %v499, %v500
    %v502 = vsub.f32 1.0, %v501
    %v503 = vmul.f32 %v500, %v502
    %v504 = vadd.f32 %v500, %v503
    %vm505 = vweird.f32 %v499
    %vm506 = vweird.f32 %v500
    %vm507 = vmor %vm505, %vm506
    %v508 = vsel %vm507, %v500, %v504
    %v509 = vand.u32 2147483647, %v499
    %vm510 = vcmp.eq.f32.partialorder %v509, 8.507059e+37
    %v511 = vand.u32 %v499, 2147483648
    %v512 = vor.u32 1.1754944e-38, %v511
    %v513 = vsel %vm510, %v512, %v508
    %v514 = vmul.f32 1.0, %v513
    %v515 = vtanh.pop %v495
    %v517 = vrot.slane %v462, 2
    %v519 = vmul.f32 %v514, %v517
    %521 = vrot.lane.b32.xlu0 %v515, 32
    %v522 = vpop.permute.xlu0 %521
    %v524 = vmul.f32 %v514, %v522
    %526 = vrot.lane.b32.xlu0 %v524, 32
    %v527 = vpop.permute.xlu0 %526
    %v529 = vadd.f32 %v519, %v527
    %v530 = vtanh.pop %v529
    %532 = vrot.lane.b32.xlu0 %v530, 32
    %v533 = vpop.permute.xlu0 %532
    %v535 = vmul.f32 %v514, %v533
    %537 = vrot.lane.b32.xlu0 %v535, 64
    %v538 = vpop.permute.xlu0 %537
    %v539 = vsel %vm264, %v538, 0
    %541 = vmatpush.msra.mxu0 0.0
    %542 = vmatpush.msra.mxu0 0.0
    %543 = vmatpush.msra.mxu0 0.0
    %544 = vmatpush.msra.mxu0 0.0
    %545 = vmatpush.msra.mxu0 0.0
    %546 = vmatpush.msra.mxu0 0.0
    %547 = vmatpush.msra.mxu0 0.0
    %548 = vmatpush.msra.mxu0 0.0
    %549 = vmatpush.msra.mxu0 0.0
    %550 = vmatpush.msra.mxu0 0.0
    %551 = vmatpush.msra.mxu0 0.0
    %552 = vmatpush.msra.mxu0 0.0
    %553 = vmatpush.msra.mxu0 %v263
    %554 = vmatpush.msra.mxu0 %v262
    %555 = vmatpush.msra.mxu0 %v261
    %556 = vmatpush.msra.mxu0 %v260
    %557 = vmatmul.f32.gmra.mxu0 %v539
    %v558 = vpop.f32.mrf.mxu0
    %v559 = vadd.f32 0.0, %v558
    %560 = vdwg.mxu0
    %v562 = vrot.slane %v559, 2
    %v564 = vadd.f32 %v256, %v562
    %v565 = vxor.u32 %v564, 2147483648
    %v566 = vmul.f32 %v565, 1.442695
    %v567 = vpow.pop %v566
    %v568 = vadd.f32 %v567, 1.0
    %v569 = vrcp.pop %v568
    %v570 = vmul.f32 %v568, %v569
    %v571 = vsub.f32 1.0, %v570
    %v572 = vmul.f32 %v569, %v571
    %v573 = vadd.f32 %v569, %v572
    %vm574 = vweird.f32 %v568
    %vm575 = vweird.f32 %v569
    %vm576 = vmor %vm574, %vm575
    %v577 = vsel %vm576, %v569, %v573
    %v578 = vand.u32 2147483647, %v568
    %vm579 = vcmp.eq.f32.partialorder %v578, 8.507059e+37
    %v580 = vand.u32 %v568, 2147483648
    %v581 = vor.u32 1.1754944e-38, %v580
    %v582 = vsel %vm579, %v581, %v577
    %v583 = vmul.f32 1.0, %v582
    %v584 = vtanh.pop %v564
    %v586 = vrot.slane %v529, 2
    %v588 = vmul.f32 %v583, %v586
    %590 = vrot.lane.b32.xlu0 %v584, 32
    %v591 = vpop.permute.xlu0 %590
    %v593 = vmul.f32 %v583, %v591
    %595 = vrot.lane.b32.xlu0 %v593, 32
    %v596 = vpop.permute.xlu0 %595
    %v598 = vadd.f32 %v588, %v596
    %v599 = vtanh.pop %v598
    %601 = vrot.lane.b32.xlu0 %v599, 32
    %v602 = vpop.permute.xlu0 %601
    %v604 = vmul.f32 %v583, %v602
    %v606 = vrot.slane %v604, 6
    %607 = vrot.lane.b32.xlu0 %v606, 64
    %v608 = vpop.permute.xlu0 %607
    %v609 = vsel %vm264, %v608, 0
    %611 = vmatpush.msra.mxu0 0.0
    %612 = vmatpush.msra.mxu0 0.0
    %613 = vmatpush.msra.mxu0 0.0
    %614 = vmatpush.msra.mxu0 0.0
    %615 = vmatpush.msra.mxu0 0.0
    %616 = vmatpush.msra.mxu0 0.0
    %617 = vmatpush.msra.mxu0 0.0
    %618 = vmatpush.msra.mxu0 0.0
    %619 = vmatpush.msra.mxu0 0.0
    %620 = vmatpush.msra.mxu0 0.0
    %621 = vmatpush.msra.mxu0 0.0
    %622 = vmatpush.msra.mxu0 0.0
    %623 = vmatpush.msra.mxu0 %v263
    %624 = vmatpush.msra.mxu0 %v262
    %625 = vmatpush.msra.mxu0 %v261
    %626 = vmatpush.msra.mxu0 %v260
    %627 = vmatmul.f32.gmra.mxu0 %v609
    %v628 = vpop.f32.mrf.mxu0
    %v629 = vadd.f32 0.0, %v628
    %630 = vdwg.mxu0
    %v632 = vrot.slane %v629, 4
    %v634 = vadd.f32 %v259, %v632
    %v635 = vxor.u32 %v634, 2147483648
    %v636 = vmul.f32 %v635, 1.442695
    %v637 = vpow.pop %v636
    %v638 = vadd.f32 %v637, 1.0
    %v639 = vrcp.pop %v638
    %v640 = vmul.f32 %v638, %v639
    %v641 = vsub.f32 1.0, %v640
    %v642 = vmul.f32 %v639, %v641
    %v643 = vadd.f32 %v639, %v642
    %vm644 = vweird.f32 %v638
    %vm645 = vweird.f32 %v639
    %vm646 = vmor %vm644, %vm645
    %v647 = vsel %vm646, %v639, %v643
    %v648 = vand.u32 2147483647, %v638
    %vm649 = vcmp.eq.f32.partialorder %v648, 8.507059e+37
    %v650 = vand.u32 %v638, 2147483648
    %v651 = vor.u32 1.1754944e-38, %v650
    %v652 = vsel %vm649, %v651, %v647
    %v653 = vmul.f32 1.0, %v652
    %v654 = vtanh.pop %v634
    %v656 = vrot.slane %v598, 2
    %v658 = vmul.f32 %v653, %v656
    %660 = vrot.lane.b32.xlu0 %v654, 32
    %v661 = vpop.permute.xlu0 %660
    %v663 = vmul.f32 %v653, %v661
    %665 = vrot.lane.b32.xlu0 %v663, 32
    %v666 = vpop.permute.xlu0 %665
    %v668 = vadd.f32 %v658, %v666
    %v669 = vtanh.pop %v668
    %671 = vrot.lane.b32.xlu0 %v669, 32
    %v672 = vpop.permute.xlu0 %671
    %v674 = vmul.f32 %v653, %v672
    %v676 = vrot.slane %v674, 4
    %677 = vrot.lane.b32.xlu0 %v676, 64
    %v678 = vpop.permute.xlu0 %677
    %v679 = vsel %vm264, %v678, 0
    %681 = vmatpush.msra.mxu0 0.0
    %682 = vmatpush.msra.mxu0 0.0
    %683 = vmatpush.msra.mxu0 0.0
    %684 = vmatpush.msra.mxu0 0.0
    %685 = vmatpush.msra.mxu0 0.0
    %686 = vmatpush.msra.mxu0 0.0
    %687 = vmatpush.msra.mxu0 0.0
    %688 = vmatpush.msra.mxu0 0.0
    %689 = vmatpush.msra.mxu0 0.0
    %690 = vmatpush.msra.mxu0 0.0
    %691 = vmatpush.msra.mxu0 0.0
    %692 = vmatpush.msra.mxu0 0.0
    %693 = vmatpush.msra.mxu0 %v263
    %694 = vmatpush.msra.mxu0 %v262
    %695 = vmatpush.msra.mxu0 %v261
    %696 = vmatpush.msra.mxu0 %v260
    %697 = vmatmul.f32.gmra.mxu0 %v679
    %v698 = vpop.f32.mrf.mxu0
    %v699 = vadd.f32 0.0, %v698
    %700 = vdwg.mxu0
    %v702 = vrot.slane %v699, 6
    %v704 = vadd.f32 %v256, %v702
    %v705 = vxor.u32 %v704, 2147483648
    %v706 = vmul.f32 %v705, 1.442695
    %v707 = vpow.pop %v706
    %v708 = vadd.f32 %v707, 1.0
    %v709 = vrcp.pop %v708
    %v710 = vmul.f32 %v708, %v709
    %v711 = vsub.f32 1.0, %v710
    %v712 = vmul.f32 %v709, %v711
    %v713 = vadd.f32 %v709, %v712
    %vm714 = vweird.f32 %v708
    %vm715 = vweird.f32 %v709
    %vm716 = vmor %vm714, %vm715
    %v717 = vsel %vm716, %v709, %v713
    %v718 = vand.u32 2147483647, %v708
    %vm719 = vcmp.eq.f32.partialorder %v718, 8.507059e+37
    %v720 = vand.u32 %v708, 2147483648
    %v721 = vor.u32 1.1754944e-38, %v720
    %v722 = vsel %vm719, %v721, %v717
    %v723 = vmul.f32 1.0, %v722
    %v724 = vtanh.pop %v704
    %v726 = vrot.slane %v668, 2
    %v728 = vmul.f32 %v723, %v726
    %730 = vrot.lane.b32.xlu0 %v724, 32
    %v731 = vpop.permute.xlu0 %730
    %v733 = vmul.f32 %v723, %v731
    %735 = vrot.lane.b32.xlu0 %v733, 32
    %v736 = vpop.permute.xlu0 %735
    %v738 = vadd.f32 %v728, %v736
    %v739 = vtanh.pop %v738
    %741 = vrot.lane.b32.xlu0 %v739, 32
    %v742 = vpop.permute.xlu0 %741
    %v744 = vmul.f32 %v723, %v742
    %v746 = vrot.slane %v744, 2
    %747 = vrot.lane.b32.xlu0 %v746, 64
    %v748 = vpop.permute.xlu0 %747
    %v749 = vsel %vm264, %v748, 0
    %751 = vmatpush.msra.mxu0 0.0
    %752 = vmatpush.msra.mxu0 0.0
    %753 = vmatpush.msra.mxu0 0.0
    %754 = vmatpush.msra.mxu0 0.0
    %755 = vmatpush.msra.mxu0 0.0
    %756 = vmatpush.msra.mxu0 0.0
    %757 = vmatpush.msra.mxu0 0.0
    %758 = vmatpush.msra.mxu0 0.0
    %759 = vmatpush.msra.mxu0 0.0
    %760 = vmatpush.msra.mxu0 0.0
    %761 = vmatpush.msra.mxu0 0.0
    %762 = vmatpush.msra.mxu0 0.0
    %763 = vmatpush.msra.mxu0 %v263
    %764 = vmatpush.msra.mxu0 %v262
    %765 = vmatpush.msra.mxu0 %v261
    %766 = vmatpush.msra.mxu0 %v260
    %767 = vmatmul.f32.gmra.mxu0 %v749
    %v768 = vpop.f32.mrf.mxu0
    %v769 = vadd.f32 0.0, %v768
    %770 = vdwg.mxu0
    %v771 = vadd.f32 %v259, %v769
    %v772 = vxor.u32 %v771, 2147483648
    %v773 = vmul.f32 %v772, 1.442695
    %v774 = vpow.pop %v773
    %v775 = vadd.f32 %v774, 1.0
    %v776 = vrcp.pop %v775
    %v777 = vmul.f32 %v775, %v776
    %v778 = vsub.f32 1.0, %v777
    %v779 = vmul.f32 %v776, %v778
    %v780 = vadd.f32 %v776, %v779
    %vm781 = vweird.f32 %v775
    %vm782 = vweird.f32 %v776
    %vm783 = vmor %vm781, %vm782
    %v784 = vsel %vm783, %v776, %v780
    %v785 = vand.u32 2147483647, %v775
    %vm786 = vcmp.eq.f32.partialorder %v785, 8.507059e+37
    %v787 = vand.u32 %v775, 2147483648
    %v788 = vor.u32 1.1754944e-38, %v787
    %v789 = vsel %vm786, %v788, %v784
    %v790 = vmul.f32 1.0, %v789
    %v791 = vtanh.pop %v771
    %v793 = vrot.slane %v738, 2
    %v795 = vmul.f32 %v790, %v793
    %797 = vrot.lane.b32.xlu0 %v791, 32
    %v798 = vpop.permute.xlu0 %797
    %v800 = vmul.f32 %v790, %v798
    %802 = vrot.lane.b32.xlu0 %v800, 32
    %v803 = vpop.permute.xlu0 %802
    %v805 = vadd.f32 %v795, %v803
    %v806 = vtanh.pop %v805
    %808 = vrot.lane.b32.xlu0 %v806, 32
    %v809 = vpop.permute.xlu0 %808
    %v811 = vmul.f32 %v790, %v809
    %v813 = vrot.slane %v811, 2
    %814 = vrot.lane.b32.xlu0 %v813, 112
    %v815 = vpop.permute.xlu0 %814
    %v817 = vadd.f32 %v328, %v815
    %v818 = vrot.slane %v744, 6
    %819 = vrot.lane.b32.xlu0 %v818, 112
    %v820 = vpop.permute.xlu0 %819
    %v822 = vadd.f32 %v398, %v820
    %v823 = vrot.slane %v674, 2
    %824 = vrot.lane.b32.xlu0 %v823, 112
    %v825 = vpop.permute.xlu0 %824
    %v827 = vadd.f32 %v468, %v825
    %828 = vrot.lane.b32.xlu0 %v606, 112
    %v829 = vpop.permute.xlu0 %828
    %v831 = vadd.f32 %v535, %v829
    %v832 = vrot.slane %v535, 2
    %833 = vrot.lane.b32.xlu0 %v832, 112
    %v834 = vpop.permute.xlu0 %833
    %v836 = vadd.f32 %v604, %v834
    %v837 = vrot.slane %v468, 6
    %838 = vrot.lane.b32.xlu0 %v837, 112
    %v839 = vpop.permute.xlu0 %838
    %v841 = vadd.f32 %v674, %v839
    %v842 = vrot.slane %v398, 2
    %843 = vrot.lane.b32.xlu0 %v842, 112
    %v844 = vpop.permute.xlu0 %843
    %v846 = vadd.f32 %v744, %v844
    %847 = vrot.lane.b32.xlu0 %v330, 112
    %v848 = vpop.permute.xlu0 %847
    %v850 = vadd.f32 %v811, %v848
    %v852 = vrot.slane %v817, 6
    %v855 = vrot.slane %v822, 2
    %v858 = vrot.slane %v827, 6
    %v861 = vrot.slane %v831, 2
    %v864 = vrot.slane %v836, 6
    %v867 = vrot.slane %v841, 2
    %v870 = vrot.slane %v846, 6
    %v873 = vrot.slane %v850, 2
    %v875 = vsel %vm177, %v852, %v855
    %v876 = vsel %vm181, %v875, %v858
    %v877 = vsel %vm185, %v876, %v861
    %v878 = vsel %vm177, %v864, %v867
    %v879 = vsel %vm181, %v878, %v870
    %v880 = vsel %vm185, %v879, %v873
    %v881 = vld [vmem:[#allocation8] sm:$0xff]
    %v882 = vld [vmem:[#allocation8 + $0x8] sm:$0xff]
    %v883 = vld [vmem:[#allocation8 + $0x10] sm:$0xff]
    %v884 = vld [vmem:[#allocation8 + $0x18] sm:$0xff]
    %v885 = vld [vmem:[%s6] sm:$0x3]
    %v887 = vperm.slane %v885, 0
    %v888 = vperm.slane %v885, 1
    %893 = vrot.lane.b32.xlu0 %v877, 64
    %v894 = vpop.permute.xlu0 %893
    %895 = vrot.lane.b32.xlu0 %v880, 64
    %v896 = vpop.permute.xlu0 %895
    %vm897 = vcmask 130048
    %v898 = vsel %vm897, %v894, 0
    %v900 = vsel %vm897, %v896, 0
    %902 = vmatpush.msra.mxu0 0.0
    %903 = vmatpush.msra.mxu0 0.0
    %904 = vmatpush.msra.mxu0 0.0
    %905 = vmatpush.msra.mxu0 0.0
    %906 = vmatpush.msra.mxu0 0.0
    %907 = vmatpush.msra.mxu0 0.0
    %908 = vmatpush.msra.mxu0 0.0
    %909 = vmatpush.msra.mxu0 0.0
    %910 = vmatpush.msra.mxu0 0.0
    %911 = vmatpush.msra.mxu0 0.0
    %912 = vmatpush.msra.mxu0 0.0
    %913 = vmatpush.msra.mxu0 0.0
    %914 = vmatpush.msra.mxu0 0.0
    %915 = vmatpush.msra.mxu0 0.0
    %916 = vmatpush.msra.mxu0 %v883
    %917 = vmatpush.msra.mxu0 %v881
    %918 = vmatmul.f32.gmra.mxu0 %v898
    %v919 = vpop.f32.mrf.mxu0
    %v920 = vadd.f32 %v887, %v919
    %921 = vmatmul.f32.gmra.mxu0 %v900
    %v922 = vpop.f32.mrf.mxu0
    %v923 = vadd.f32 %v887, %v922
    %924 = vdwg.mxu0
    %925 = vmatpush.msra.mxu0 0.0
    %926 = vmatpush.msra.mxu0 0.0
    %927 = vmatpush.msra.mxu0 0.0
    %928 = vmatpush.msra.mxu0 0.0
    %929 = vmatpush.msra.mxu0 0.0
    %930 = vmatpush.msra.mxu0 0.0
    %931 = vmatpush.msra.mxu0 0.0
    %932 = vmatpush.msra.mxu0 0.0
    %933 = vmatpush.msra.mxu0 0.0
    %934 = vmatpush.msra.mxu0 0.0
    %935 = vmatpush.msra.mxu0 0.0
    %936 = vmatpush.msra.mxu0 0.0
    %937 = vmatpush.msra.mxu0 0.0
    %938 = vmatpush.msra.mxu0 0.0
    %939 = vmatpush.msra.mxu0 %v884
    %940 = vmatpush.msra.mxu0 %v882
    %941 = vmatmul.f32.gmra.mxu0 %v898
    %v942 = vpop.f32.mrf.mxu0
    %v943 = vadd.f32 %v888, %v942
    %944 = vmatmul.f32.gmra.mxu0 %v900
    %v945 = vpop.f32.mrf.mxu0
    %v946 = vadd.f32 %v888, %v945
    %947 = vdwg.mxu0
    %v948 = vadd.s32 %v232, 128
    %vm949 = vcmp.lt.s32.totalorder %v232, 0
    %v950 = vsub.s32 0, %v232
    %v951 = vsel %vm949, %v950, %v232
    %v952 = vshrl.u32 %v951, 6
    %v953 = vand.u32 %v951, 63
    %v954 = vsub.s32 0, %v953
    %v955 = vsel %vm949, %v954, %v953
    %vm956 = vcmp.lt.s32.totalorder %v948, 0
    %v957 = vsub.s32 0, %v948
    %v958 = vsel %vm956, %v957, %v948
    %v959 = vshrl.u32 %v958, 6
    %v960 = vand.u32 %v958, 63
    %v961 = vsub.s32 0, %v960
    %v962 = vsel %vm956, %v961, %v960
    %vm963 = vcmp.ne.s32.totalorder %v955, 0
    %vm964 = vcmp.ne.s32.totalorder %v962, 0
    %vm965 = vcmp.lt.s32.totalorder %v955, 0
    %vm966 = vcmp.lt.s32.totalorder %v962, 0
    %vm967 = vmand %vm965, %vm963
    %vm968 = vmand %vm966, %vm964
    %v969 = vadd.s32 %v955, 64
    %v970 = vadd.s32 %v962, 64
    %v971 = vsel %vm967, %v969, %v955
    %v972 = vsel %vm968, %v970, %v962
    %vm973 = vcmp.ge.s32.totalorder %v971, 32
    %vm974 = vcmp.ge.s32.totalorder %v972, 32
    %v977 = vrot.slane %v920, 2
    %v978 = vrot.slane %v943, 2
    %v981 = vsel %vm973, %v923, %v977
    %v982 = vsel %vm974, %v946, %v978
    %v983 = vrot.slane %v920, 6
    %v984 = vrot.slane %v943, 6
    %v987 = vsel %vm973, %v923, %v983
    %v988 = vsel %vm974, %v946, %v984
    %v991 = vrot.slane %v923, 2
    %v992 = vrot.slane %v946, 2
    %v995 = vsel %vm973, %v920, %v991
    %v996 = vsel %vm974, %v943, %v992
    %v997 = vrot.slane %v923, 6
    %v998 = vrot.slane %v946, 6
    %v1001 = vsel %vm973, %v920, %v997
    %v1002 = vsel %vm974, %v943, %v998
    %v1003 = vld [vmem:[#allocation10] sm:$0xff]
    %v1004 = vld [vmem:[#allocation10 + $0x8] sm:$0xff]
    %v1005 = vld [vmem:[#allocation10 + $0x10] sm:$0xff]
    %v1006 = vld [vmem:[#allocation10 + $0x18] sm:$0xff]
    %v1007 = vld [vmem:[#allocation10 + $0x20] sm:$0xff]
    %v1008 = vld [vmem:[#allocation10 + $0x28] sm:$0xff]
    %v1009 = vld [vmem:[#allocation10 + $0x30] sm:$0xff]
    %v1010 = vld [vmem:[#allocation10 + $0x38] sm:$0xff]
    %v1011 = vld [vmem:[#allocation10 + $0x40] sm:$0xff]
    %v1012 = vld [vmem:[#allocation10 + $0x48] sm:$0xff]
    %v1013 = vld [vmem:[#allocation10 + $0x50] sm:$0xff]
    %v1014 = vld [vmem:[#allocation10 + $0x58] sm:$0xff]
    %v1015 = vld [vmem:[#allocation10 + $0x60] sm:$0xff]
    %v1016 = vld [vmem:[#allocation10 + $0x68] sm:$0xff]
    %v1017 = vld [vmem:[#allocation10 + $0x70] sm:$0xff]
    %v1018 = vld [vmem:[#allocation10 + $0x78] sm:$0xff]
    %vm1019 = vcmask 523264
    %v1020 = vsel %vm1019, 0.0, 0
    %1022 = vmatpush.msra.mxu0 0.0
    %1023 = vmatpush.msra.mxu0 0.0
    %1024 = vmatpush.msra.mxu0 0.0
    %1025 = vmatpush.msra.mxu0 0.0
    %1026 = vmatpush.msra.mxu0 0.0
    %1027 = vmatpush.msra.mxu0 0.0
    %1028 = vmatpush.msra.mxu0 0.0
    %1029 = vmatpush.msra.mxu0 0.0
    %1030 = vmatpush.msra.mxu0 %v1017
    %1031 = vmatpush.msra.mxu0 %v1015
    %1032 = vmatpush.msra.mxu0 %v1013
    %1033 = vmatpush.msra.mxu0 %v1011
    %1034 = vmatpush.msra.mxu0 %v1009
    %1035 = vmatpush.msra.mxu0 %v1007
    %1036 = vmatpush.msra.mxu0 %v1005
    %1037 = vmatpush.msra.mxu0 %v1003
    %1038 = vmatmul.f32.gmra.mxu0 %v1020
    %v1039 = vpop.f32.mrf.mxu0
    %v1040 = vadd.f32 0.0, %v1039
    %1041 = vdwg.mxu0
    %1042 = vmatpush.msra.mxu0 0.0
    %1043 = vmatpush.msra.mxu0 0.0
    %1044 = vmatpush.msra.mxu0 0.0
    %1045 = vmatpush.msra.mxu0 0.0
    %1046 = vmatpush.msra.mxu0 0.0
    %1047 = vmatpush.msra.mxu0 0.0
    %1048 = vmatpush.msra.mxu0 0.0
    %1049 = vmatpush.msra.mxu0 0.0
    %1050 = vmatpush.msra.mxu0 %v1018
    %1051 = vmatpush.msra.mxu0 %v1016
    %1052 = vmatpush.msra.mxu0 %v1014
    %1053 = vmatpush.msra.mxu0 %v1012
    %1054 = vmatpush.msra.mxu0 %v1010
    %1055 = vmatpush.msra.mxu0 %v1008
    %1056 = vmatpush.msra.mxu0 %v1006
    %1057 = vmatpush.msra.mxu0 %v1004
    %1058 = vmatmul.f32.gmra.mxu0 %v1020
    %v1059 = vpop.f32.mrf.mxu0
    %v1060 = vadd.f32 0.0, %v1059
    %1061 = vdwg.mxu0
    %v1064 = vrot.slane %v1040, 2
    %v1065 = vrot.slane %v1060, 2
    %v1068 = vadd.f32 %v981, %v1064
    %v1069 = vadd.f32 %v982, %v1065
    %v1070 = vxor.u32 %v1068, 2147483648
    %v1071 = vxor.u32 %v1069, 2147483648
    %v1072 = vmul.f32 %v1070, 1.442695
    %v1073 = vpow.pop %v1072
    %v1074 = vmul.f32 %v1071, 1.442695
    %v1075 = vpow.pop %v1074
    %v1076 = vadd.f32 %v1073, 1.0
    %v1077 = vadd.f32 %v1075, 1.0
    %v1078 = vrcp.pop %v1076
    %v1079 = vmul.f32 %v1076, %v1078
    %v1080 = vsub.f32 1.0, %v1079
    %v1081 = vmul.f32 %v1078, %v1080
    %v1082 = vadd.f32 %v1078, %v1081
    %vm1083 = vweird.f32 %v1076
    %vm1084 = vweird.f32 %v1078
    %vm1085 = vmor %vm1083, %vm1084
    %v1086 = vsel %vm1085, %v1078, %v1082
    %v1087 = vand.u32 2147483647, %v1076
    %vm1088 = vcmp.eq.f32.partialorder %v1087, 8.507059e+37
    %v1089 = vand.u32 %v1076, 2147483648
    %v1090 = vor.u32 1.1754944e-38, %v1089
    %v1091 = vsel %vm1088, %v1090, %v1086
    %v1092 = vmul.f32 1.0, %v1091
    %v1093 = vrcp.pop %v1077
    %v1094 = vmul.f32 %v1077, %v1093
    %v1095 = vsub.f32 1.0, %v1094
    %v1096 = vmul.f32 %v1093, %v1095
    %v1097 = vadd.f32 %v1093, %v1096
    %vm1098 = vweird.f32 %v1077
    %vm1099 = vweird.f32 %v1093
    %vm1100 = vmor %vm1098, %vm1099
    %v1101 = vsel %vm1100, %v1093, %v1097
    %v1102 = vand.u32 2147483647, %v1077
    %vm1103 = vcmp.eq.f32.partialorder %v1102, 8.507059e+37
    %v1104 = vand.u32 %v1077, 2147483648
    %v1105 = vor.u32 1.1754944e-38, %v1104
    %v1106 = vsel %vm1103, %v1105, %v1101
    %v1107 = vmul.f32 1.0, %v1106
    %v1108 = vtanh.pop %v1069
    %v1109 = vmul.f32 %v1092, 0.0
    %1111 = vrot.lane.b32.xlu0 %v1108, 64
    %v1112 = vpop.permute.xlu0 %1111
    %v1114 = vmul.f32 %v1092, %v1112
    %1116 = vrot.lane.b32.xlu0 %v1114, 64
    %v1117 = vpop.permute.xlu0 %1116
    %v1119 = vadd.f32 %v1109, %v1117
    %v1120 = vtanh.pop %v1119
    %1122 = vrot.lane.b32.xlu0 %v1120, 64
    %v1123 = vpop.permute.xlu0 %1122
    %v1125 = vmul.f32 %v1107, %v1123
    %v1127 = vrot.slane %v1125, 6
    %v1128 = vsel %vm1019, %v1127, 0
    %1130 = vmatpush.msra.mxu0 0.0
    %1131 = vmatpush.msra.mxu0 0.0
    %1132 = vmatpush.msra.mxu0 0.0
    %1133 = vmatpush.msra.mxu0 0.0
    %1134 = vmatpush.msra.mxu0 0.0
    %1135 = vmatpush.msra.mxu0 0.0
    %1136 = vmatpush.msra.mxu0 0.0
    %1137 = vmatpush.msra.mxu0 0.0
    %1138 = vmatpush.msra.mxu0 %v1017
    %1139 = vmatpush.msra.mxu0 %v1015
    %1140 = vmatpush.msra.mxu0 %v1013
    %1141 = vmatpush.msra.mxu0 %v1011
    %1142 = vmatpush.msra.mxu0 %v1009
    %1143 = vmatpush.msra.mxu0 %v1007
    %1144 = vmatpush.msra.mxu0 %v1005
    %1145 = vmatpush.msra.mxu0 %v1003
    %1146 = vmatmul.f32.gmra.mxu0 %v1128
    %v1147 = vpop.f32.mrf.mxu0
    %v1148 = vadd.f32 0.0, %v1147
    %1149 = vdwg.mxu0
    %1150 = vmatpush.msra.mxu0 0.0
    %1151 = vmatpush.msra.mxu0 0.0
    %1152 = vmatpush.msra.mxu0 0.0
    %1153 = vmatpush.msra.mxu0 0.0
    %1154 = vmatpush.msra.mxu0 0.0
    %1155 = vmatpush.msra.mxu0 0.0
    %1156 = vmatpush.msra.mxu0 0.0
    %1157 = vmatpush.msra.mxu0 0.0
    %1158 = vmatpush.msra.mxu0 %v1018
    %1159 = vmatpush.msra.mxu0 %v1016
    %1160 = vmatpush.msra.mxu0 %v1014
    %1161 = vmatpush.msra.mxu0 %v1012
    %1162 = vmatpush.msra.mxu0 %v1010
    %1163 = vmatpush.msra.mxu0 %v1008
    %1164 = vmatpush.msra.mxu0 %v1006
    %1165 = vmatpush.msra.mxu0 %v1004
    %1166 = vmatmul.f32.gmra.mxu0 %v1128
    %v1167 = vpop.f32.mrf.mxu0
    %v1168 = vadd.f32 0.0, %v1167
    %1169 = vdwg.mxu0
    %v1172 = vrot.slane %v1148, 4
    %v1173 = vrot.slane %v1168, 4
    %v1176 = vadd.f32 %v987, %v1172
    %v1177 = vadd.f32 %v988, %v1173
    %v1178 = vxor.u32 %v1176, 2147483648
    %v1179 = vxor.u32 %v1177, 2147483648
    %v1180 = vmul.f32 %v1178, 1.442695
    %v1181 = vpow.pop %v1180
    %v1182 = vmul.f32 %v1179, 1.442695
    %v1183 = vpow.pop %v1182
    %v1184 = vadd.f32 %v1181, 1.0
    %v1185 = vadd.f32 %v1183, 1.0
    %v1186 = vrcp.pop %v1184
    %v1187 = vmul.f32 %v1184, %v1186
    %v1188 = vsub.f32 1.0, %v1187
    %v1189 = vmul.f32 %v1186, %v1188
    %v1190 = vadd.f32 %v1186, %v1189
    %vm1191 = vweird.f32 %v1184
    %vm1192 = vweird.f32 %v1186
    %vm1193 = vmor %vm1191, %vm1192
    %v1194 = vsel %vm1193, %v1186, %v1190
    %v1195 = vand.u32 2147483647, %v1184
    %vm1196 = vcmp.eq.f32.partialorder %v1195, 8.507059e+37
    %v1197 = vand.u32 %v1184, 2147483648
    %v1198 = vor.u32 1.1754944e-38, %v1197
    %v1199 = vsel %vm1196, %v1198, %v1194
    %v1200 = vmul.f32 1.0, %v1199
    %v1201 = vrcp.pop %v1185
    %v1202 = vmul.f32 %v1185, %v1201
    %v1203 = vsub.f32 1.0, %v1202
    %v1204 = vmul.f32 %v1201, %v1203
    %v1205 = vadd.f32 %v1201, %v1204
    %vm1206 = vweird.f32 %v1185
    %vm1207 = vweird.f32 %v1201
    %vm1208 = vmor %vm1206, %vm1207
    %v1209 = vsel %vm1208, %v1201, %v1205
    %v1210 = vand.u32 2147483647, %v1185
    %vm1211 = vcmp.eq.f32.partialorder %v1210, 8.507059e+37
    %v1212 = vand.u32 %v1185, 2147483648
    %v1213 = vor.u32 1.1754944e-38, %v1212
    %v1214 = vsel %vm1211, %v1213, %v1209
    %v1215 = vmul.f32 1.0, %v1214
    %v1216 = vtanh.pop %v1177
    %v1218 = vrot.slane %v1119, 2
    %v1220 = vmul.f32 %v1200, %v1218
    %1222 = vrot.lane.b32.xlu0 %v1216, 64
    %v1223 = vpop.permute.xlu0 %1222
    %v1225 = vmul.f32 %v1200, %v1223
    %1227 = vrot.lane.b32.xlu0 %v1225, 64
    %v1228 = vpop.permute.xlu0 %1227
    %v1230 = vadd.f32 %v1220, %v1228
    %v1231 = vtanh.pop %v1230
    %1233 = vrot.lane.b32.xlu0 %v1231, 64
    %v1234 = vpop.permute.xlu0 %1233
    %v1236 = vmul.f32 %v1215, %v1234
    %v1238 = vrot.slane %v1236, 4
    %v1239 = vsel %vm1019, %v1238, 0
    %1241 = vmatpush.msra.mxu0 0.0
    %1242 = vmatpush.msra.mxu0 0.0
    %1243 = vmatpush.msra.mxu0 0.0
    %1244 = vmatpush.msra.mxu0 0.0
    %1245 = vmatpush.msra.mxu0 0.0
    %1246 = vmatpush.msra.mxu0 0.0
    %1247 = vmatpush.msra.mxu0 0.0
    %1248 = vmatpush.msra.mxu0 0.0
    %1249 = vmatpush.msra.mxu0 %v1017
    %1250 = vmatpush.msra.mxu0 %v1015
    %1251 = vmatpush.msra.mxu0 %v1013
    %1252 = vmatpush.msra.mxu0 %v1011
    %1253 = vmatpush.msra.mxu0 %v1009
    %1254 = vmatpush.msra.mxu0 %v1007
    %1255 = vmatpush.msra.mxu0 %v1005
    %1256 = vmatpush.msra.mxu0 %v1003
    %1257 = vmatmul.f32.gmra.mxu0 %v1239
    %v1258 = vpop.f32.mrf.mxu0
    %v1259 = vadd.f32 0.0, %v1258
    %1260 = vdwg.mxu0
    %1261 = vmatpush.msra.mxu0 0.0
    %1262 = vmatpush.msra.mxu0 0.0
    %1263 = vmatpush.msra.mxu0 0.0
    %1264 = vmatpush.msra.mxu0 0.0
    %1265 = vmatpush.msra.mxu0 0.0
    %1266 = vmatpush.msra.mxu0 0.0
    %1267 = vmatpush.msra.mxu0 0.0
    %1268 = vmatpush.msra.mxu0 0.0
    %1269 = vmatpush.msra.mxu0 %v1018
    %1270 = vmatpush.msra.mxu0 %v1016
    %1271 = vmatpush.msra.mxu0 %v1014
    %1272 = vmatpush.msra.mxu0 %v1012
    %1273 = vmatpush.msra.mxu0 %v1010
    %1274 = vmatpush.msra.mxu0 %v1008
    %1275 = vmatpush.msra.mxu0 %v1006
    %1276 = vmatpush.msra.mxu0 %v1004
    %1277 = vmatmul.f32.gmra.mxu0 %v1239
    %v1278 = vpop.f32.mrf.mxu0
    %v1279 = vadd.f32 0.0, %v1278
    %1280 = vdwg.mxu0
    %v1283 = vrot.slane %v1259, 6
    %v1284 = vrot.slane %v1279, 6
    %v1287 = vadd.f32 %v981, %v1283
    %v1288 = vadd.f32 %v982, %v1284
    %v1289 = vxor.u32 %v1287, 2147483648
    %v1290 = vxor.u32 %v1288, 2147483648
    %v1291 = vmul.f32 %v1289, 1.442695
    %v1292 = vpow.pop %v1291
    %v1293 = vmul.f32 %v1290, 1.442695
    %v1294 = vpow.pop %v1293
    %v1295 = vadd.f32 %v1292, 1.0
    %v1296 = vadd.f32 %v1294, 1.0
    %v1297 = vrcp.pop %v1295
    %v1298 = vmul.f32 %v1295, %v1297
    %v1299 = vsub.f32 1.0, %v1298
    %v1300 = vmul.f32 %v1297, %v1299
    %v1301 = vadd.f32 %v1297, %v1300
    %vm1302 = vweird.f32 %v1295
    %vm1303 = vweird.f32 %v1297
    %vm1304 = vmor %vm1302, %vm1303
    %v1305 = vsel %vm1304, %v1297, %v1301
    %v1306 = vand.u32 2147483647, %v1295
    %vm1307 = vcmp.eq.f32.partialorder %v1306, 8.507059e+37
    %v1308 = vand.u32 %v1295, 2147483648
    %v1309 = vor.u32 1.1754944e-38, %v1308
    %v1310 = vsel %vm1307, %v1309, %v1305
    %v1311 = vmul.f32 1.0, %v1310
    %v1312 = vrcp.pop %v1296
    %v1313 = vmul.f32 %v1296, %v1312
    %v1314 = vsub.f32 1.0, %v1313
    %v1315 = vmul.f32 %v1312, %v1314
    %v1316 = vadd.f32 %v1312, %v1315
    %vm1317 = vweird.f32 %v1296
    %vm1318 = vweird.f32 %v1312
    %vm1319 = vmor %vm1317, %vm1318
    %v1320 = vsel %vm1319, %v1312, %v1316
    %v1321 = vand.u32 2147483647, %v1296
    %vm1322 = vcmp.eq.f32.partialorder %v1321, 8.507059e+37
    %v1323 = vand.u32 %v1296, 2147483648
    %v1324 = vor.u32 1.1754944e-38, %v1323
    %v1325 = vsel %vm1322, %v1324, %v1320
    %v1326 = vmul.f32 1.0, %v1325
    %v1327 = vtanh.pop %v1288
    %v1329 = vrot.slane %v1230, 2
    %v1331 = vmul.f32 %v1311, %v1329
    %1333 = vrot.lane.b32.xlu0 %v1327, 64
    %v1334 = vpop.permute.xlu0 %1333
    %v1336 = vmul.f32 %v1311, %v1334
    %1338 = vrot.lane.b32.xlu0 %v1336, 64
    %v1339 = vpop.permute.xlu0 %1338
    %v1341 = vadd.f32 %v1331, %v1339
    %v1342 = vtanh.pop %v1341
    %1344 = vrot.lane.b32.xlu0 %v1342, 64
    %v1345 = vpop.permute.xlu0 %1344
    %v1347 = vmul.f32 %v1326, %v1345
    %v1349 = vrot.slane %v1347, 2
    %v1350 = vsel %vm1019, %v1349, 0
    %1352 = vmatpush.msra.mxu0 0.0
    %1353 = vmatpush.msra.mxu0 0.0
    %1354 = vmatpush.msra.mxu0 0.0
    %1355 = vmatpush.msra.mxu0 0.0
    %1356 = vmatpush.msra.mxu0 0.0
    %1357 = vmatpush.msra.mxu0 0.0
    %1358 = vmatpush.msra.mxu0 0.0
    %1359 = vmatpush.msra.mxu0 0.0
    %1360 = vmatpush.msra.mxu0 %v1017
    %1361 = vmatpush.msra.mxu0 %v1015
    %1362 = vmatpush.msra.mxu0 %v1013
    %1363 = vmatpush.msra.mxu0 %v1011
    %1364 = vmatpush.msra.mxu0 %v1009
    %1365 = vmatpush.msra.mxu0 %v1007
    %1366 = vmatpush.msra.mxu0 %v1005
    %1367 = vmatpush.msra.mxu0 %v1003
    %1368 = vmatmul.f32.gmra.mxu0 %v1350
    %v1369 = vpop.f32.mrf.mxu0
    %v1370 = vadd.f32 0.0, %v1369
    %1371 = vdwg.mxu0
    %1372 = vmatpush.msra.mxu0 0.0
    %1373 = vmatpush.msra.mxu0 0.0
    %1374 = vmatpush.msra.mxu0 0.0
    %1375 = vmatpush.msra.mxu0 0.0
    %1376 = vmatpush.msra.mxu0 0.0
    %1377 = vmatpush.msra.mxu0 0.0
    %1378 = vmatpush.msra.mxu0 0.0
    %1379 = vmatpush.msra.mxu0 0.0
    %1380 = vmatpush.msra.mxu0 %v1018
    %1381 = vmatpush.msra.mxu0 %v1016
    %1382 = vmatpush.msra.mxu0 %v1014
    %1383 = vmatpush.msra.mxu0 %v1012
    %1384 = vmatpush.msra.mxu0 %v1010
    %1385 = vmatpush.msra.mxu0 %v1008
    %1386 = vmatpush.msra.mxu0 %v1006
    %1387 = vmatpush.msra.mxu0 %v1004
    %1388 = vmatmul.f32.gmra.mxu0 %v1350
    %v1389 = vpop.f32.mrf.mxu0
    %v1390 = vadd.f32 0.0, %v1389
    %1391 = vdwg.mxu0
    %v1392 = vadd.f32 %v987, %v1370
    %v1393 = vadd.f32 %v988, %v1390
    %v1394 = vxor.u32 %v1392, 2147483648
    %v1395 = vxor.u32 %v1393, 2147483648
    %v1396 = vmul.f32 %v1394, 1.442695
    %v1397 = vpow.pop %v1396
    %v1398 = vmul.f32 %v1395, 1.442695
    %v1399 = vpow.pop %v1398
    %v1400 = vadd.f32 %v1397, 1.0
    %v1401 = vadd.f32 %v1399, 1.0
    %v1402 = vrcp.pop %v1400
    %v1403 = vmul.f32 %v1400, %v1402
    %v1404 = vsub.f32 1.0, %v1403
    %v1405 = vmul.f32 %v1402, %v1404
    %v1406 = vadd.f32 %v1402, %v1405
    %vm1407 = vweird.f32 %v1400
    %vm1408 = vweird.f32 %v1402
    %vm1409 = vmor %vm1407, %vm1408
    %v1410 = vsel %vm1409, %v1402, %v1406
    %v1411 = vand.u32 2147483647, %v1400
    %vm1412 = vcmp.eq.f32.partialorder %v1411, 8.507059e+37
    %v1413 = vand.u32 %v1400, 2147483648
    %v1414 = vor.u32 1.1754944e-38, %v1413
    %v1415 = vsel %vm1412, %v1414, %v1410
    %v1416 = vmul.f32 1.0, %v1415
    %v1417 = vrcp.pop %v1401
    %v1418 = vmul.f32 %v1401, %v1417
    %v1419 = vsub.f32 1.0, %v1418
    %v1420 = vmul.f32 %v1417, %v1419
    %v1421 = vadd.f32 %v1417, %v1420
    %vm1422 = vweird.f32 %v1401
    %vm1423 = vweird.f32 %v1417
    %vm1424 = vmor %vm1422, %vm1423
    %v1425 = vsel %vm1424, %v1417, %v1421
    %v1426 = vand.u32 2147483647, %v1401
    %vm1427 = vcmp.eq.f32.partialorder %v1426, 8.507059e+37
    %v1428 = vand.u32 %v1401, 2147483648
    %v1429 = vor.u32 1.1754944e-38, %v1428
    %v1430 = vsel %vm1427, %v1429, %v1425
    %v1431 = vmul.f32 1.0, %v1430
    %v1432 = vtanh.pop %v1393
    %v1434 = vrot.slane %v1341, 2
    %v1436 = vmul.f32 %v1416, %v1434
    %1438 = vrot.lane.b32.xlu0 %v1432, 64
    %v1439 = vpop.permute.xlu0 %1438
    %v1441 = vmul.f32 %v1416, %v1439
    %1443 = vrot.lane.b32.xlu0 %v1441, 64
    %v1444 = vpop.permute.xlu0 %1443
    %v1446 = vadd.f32 %v1436, %v1444
    %v1447 = vtanh.pop %v1446
    %1449 = vrot.lane.b32.xlu0 %v1447, 64
    %v1450 = vpop.permute.xlu0 %1449
    %v1452 = vmul.f32 %v1431, %v1450
    %v1454 = vsel %vm1019, %v1452, 0
    %1456 = vmatpush.msra.mxu0 0.0
    %1457 = vmatpush.msra.mxu0 0.0
    %1458 = vmatpush.msra.mxu0 0.0
    %1459 = vmatpush.msra.mxu0 0.0
    %1460 = vmatpush.msra.mxu0 0.0
    %1461 = vmatpush.msra.mxu0 0.0
    %1462 = vmatpush.msra.mxu0 0.0
    %1463 = vmatpush.msra.mxu0 0.0
    %1464 = vmatpush.msra.mxu0 %v1017
    %1465 = vmatpush.msra.mxu0 %v1015
    %1466 = vmatpush.msra.mxu0 %v1013
    %1467 = vmatpush.msra.mxu0 %v1011
    %1468 = vmatpush.msra.mxu0 %v1009
    %1469 = vmatpush.msra.mxu0 %v1007
    %1470 = vmatpush.msra.mxu0 %v1005
    %1471 = vmatpush.msra.mxu0 %v1003
    %1472 = vmatmul.f32.gmra.mxu0 %v1454
    %v1473 = vpop.f32.mrf.mxu0
    %v1474 = vadd.f32 0.0, %v1473
    %1475 = vdwg.mxu0
    %1476 = vmatpush.msra.mxu0 0.0
    %1477 = vmatpush.msra.mxu0 0.0
    %1478 = vmatpush.msra.mxu0 0.0
    %1479 = vmatpush.msra.mxu0 0.0
    %1480 = vmatpush.msra.mxu0 0.0
    %1481 = vmatpush.msra.mxu0 0.0
    %1482 = vmatpush.msra.mxu0 0.0
    %1483 = vmatpush.msra.mxu0 0.0
    %1484 = vmatpush.msra.mxu0 %v1018
    %1485 = vmatpush.msra.mxu0 %v1016
    %1486 = vmatpush.msra.mxu0 %v1014
    %1487 = vmatpush.msra.mxu0 %v1012
    %1488 = vmatpush.msra.mxu0 %v1010
    %1489 = vmatpush.msra.mxu0 %v1008
    %1490 = vmatpush.msra.mxu0 %v1006
    %1491 = vmatpush.msra.mxu0 %v1004
    %1492 = vmatmul.f32.gmra.mxu0 %v1454
    %v1493 = vpop.f32.mrf.mxu0
    %v1494 = vadd.f32 0.0, %v1493
    %1495 = vdwg.mxu0
    %v1498 = vrot.slane %v1474, 2
    %v1499 = vrot.slane %v1494, 2
    %v1502 = vadd.f32 %v995, %v1498
    %v1503 = vadd.f32 %v996, %v1499
    %v1504 = vxor.u32 %v1502, 2147483648
    %v1505 = vxor.u32 %v1503, 2147483648
    %v1506 = vmul.f32 %v1504, 1.442695
    %v1507 = vpow.pop %v1506
    %v1508 = vmul.f32 %v1505, 1.442695
    %v1509 = vpow.pop %v1508
    %v1510 = vadd.f32 %v1507, 1.0
    %v1511 = vadd.f32 %v1509, 1.0
    %v1512 = vrcp.pop %v1510
    %v1513 = vmul.f32 %v1510, %v1512
    %v1514 = vsub.f32 1.0, %v1513
    %v1515 = vmul.f32 %v1512, %v1514
    %v1516 = vadd.f32 %v1512, %v1515
    %vm1517 = vweird.f32 %v1510
    %vm1518 = vweird.f32 %v1512
    %vm1519 = vmor %vm1517, %vm1518
    %v1520 = vsel %vm1519, %v1512, %v1516
    %v1521 = vand.u32 2147483647, %v1510
    %vm1522 = vcmp.eq.f32.partialorder %v1521, 8.507059e+37
    %v1523 = vand.u32 %v1510, 2147483648
    %v1524 = vor.u32 1.1754944e-38, %v1523
    %v1525 = vsel %vm1522, %v1524, %v1520
    %v1526 = vmul.f32 1.0, %v1525
    %v1527 = vrcp.pop %v1511
    %v1528 = vmul.f32 %v1511, %v1527
    %v1529 = vsub.f32 1.0, %v1528
    %v1530 = vmul.f32 %v1527, %v1529
    %v1531 = vadd.f32 %v1527, %v1530
    %vm1532 = vweird.f32 %v1511
    %vm1533 = vweird.f32 %v1527
    %vm1534 = vmor %vm1532, %vm1533
    %v1535 = vsel %vm1534, %v1527, %v1531
    %v1536 = vand.u32 2147483647, %v1511
    %vm1537 = vcmp.eq.f32.partialorder %v1536, 8.507059e+37
    %v1538 = vand.u32 %v1511, 2147483648
    %v1539 = vor.u32 1.1754944e-38, %v1538
    %v1540 = vsel %vm1537, %v1539, %v1535
    %v1541 = vmul.f32 1.0, %v1540
    %v1542 = vtanh.pop %v1503
    %v1544 = vrot.slane %v1446, 2
    %v1546 = vmul.f32 %v1526, %v1544
    %1548 = vrot.lane.b32.xlu0 %v1542, 64
    %v1549 = vpop.permute.xlu0 %1548
    %v1551 = vmul.f32 %v1526, %v1549
    %1553 = vrot.lane.b32.xlu0 %v1551, 64
    %v1554 = vpop.permute.xlu0 %1553
    %v1556 = vadd.f32 %v1546, %v1554
    %v1557 = vtanh.pop %v1556
    %1559 = vrot.lane.b32.xlu0 %v1557, 64
    %v1560 = vpop.permute.xlu0 %1559
    %v1562 = vmul.f32 %v1541, %v1560
    %v1564 = vrot.slane %v1562, 6
    %v1565 = vsel %vm1019, %v1564, 0
    %1567 = vmatpush.msra.mxu0 0.0
    %1568 = vmatpush.msra.mxu0 0.0
    %1569 = vmatpush.msra.mxu0 0.0
    %1570 = vmatpush.msra.mxu0 0.0
    %1571 = vmatpush.msra.mxu0 0.0
    %1572 = vmatpush.msra.mxu0 0.0
    %1573 = vmatpush.msra.mxu0 0.0
    %1574 = vmatpush.msra.mxu0 0.0
    %1575 = vmatpush.msra.mxu0 %v1017
    %1576 = vmatpush.msra.mxu0 %v1015
    %1577 = vmatpush.msra.mxu0 %v1013
    %1578 = vmatpush.msra.mxu0 %v1011
    %1579 = vmatpush.msra.mxu0 %v1009
    %1580 = vmatpush.msra.mxu0 %v1007
    %1581 = vmatpush.msra.mxu0 %v1005
    %1582 = vmatpush.msra.mxu0 %v1003
    %1583 = vmatmul.f32.gmra.mxu0 %v1565
    %v1584 = vpop.f32.mrf.mxu0
    %v1585 = vadd.f32 0.0, %v1584
    %1586 = vdwg.mxu0
    %1587 = vmatpush.msra.mxu0 0.0
    %1588 = vmatpush.msra.mxu0 0.0
    %1589 = vmatpush.msra.mxu0 0.0
    %1590 = vmatpush.msra.mxu0 0.0
    %1591 = vmatpush.msra.mxu0 0.0
    %1592 = vmatpush.msra.mxu0 0.0
    %1593 = vmatpush.msra.mxu0 0.0
    %1594 = vmatpush.msra.mxu0 0.0
    %1595 = vmatpush.msra.mxu0 %v1018
    %1596 = vmatpush.msra.mxu0 %v1016
    %1597 = vmatpush.msra.mxu0 %v1014
    %1598 = vmatpush.msra.mxu0 %v1012
    %1599 = vmatpush.msra.mxu0 %v1010
    %1600 = vmatpush.msra.mxu0 %v1008
    %1601 = vmatpush.msra.mxu0 %v1006
    %1602 = vmatpush.msra.mxu0 %v1004
    %1603 = vmatmul.f32.gmra.mxu0 %v1565
    %v1604 = vpop.f32.mrf.mxu0
    %v1605 = vadd.f32 0.0, %v1604
    %1606 = vdwg.mxu0
    %v1609 = vrot.slane %v1585, 4
    %v1610 = vrot.slane %v1605, 4
    %v1613 = vadd.f32 %v1001, %v1609
    %v1614 = vadd.f32 %v1002, %v1610
    %v1615 = vxor.u32 %v1613, 2147483648
    %v1616 = vxor.u32 %v1614, 2147483648
    %v1617 = vmul.f32 %v1615, 1.442695
    %v1618 = vpow.pop %v1617
    %v1619 = vmul.f32 %v1616, 1.442695
    %v1620 = vpow.pop %v1619
    %v1621 = vadd.f32 %v1618, 1.0
    %v1622 = vadd.f32 %v1620, 1.0
    %v1623 = vrcp.pop %v1621
    %v1624 = vmul.f32 %v1621, %v1623
    %v1625 = vsub.f32 1.0, %v1624
    %v1626 = vmul.f32 %v1623, %v1625
    %v1627 = vadd.f32 %v1623, %v1626
    %vm1628 = vweird.f32 %v1621
    %vm1629 = vweird.f32 %v1623
    %vm1630 = vmor %vm1628, %vm1629
    %v1631 = vsel %vm1630, %v1623, %v1627
    %v1632 = vand.u32 2147483647, %v1621
    %vm1633 = vcmp.eq.f32.partialorder %v1632, 8.507059e+37
    %v1634 = vand.u32 %v1621, 2147483648
    %v1635 = vor.u32 1.1754944e-38, %v1634
    %v1636 = vsel %vm1633, %v1635, %v1631
    %v1637 = vmul.f32 1.0, %v1636
    %v1638 = vrcp.pop %v1622
    %v1639 = vmul.f32 %v1622, %v1638
    %v1640 = vsub.f32 1.0, %v1639
    %v1641 = vmul.f32 %v1638, %v1640
    %v1642 = vadd.f32 %v1638, %v1641
    %vm1643 = vweird.f32 %v1622
    %vm1644 = vweird.f32 %v1638
    %vm1645 = vmor %vm1643, %vm1644
    %v1646 = vsel %vm1645, %v1638, %v1642
    %v1647 = vand.u32 2147483647, %v1622
    %vm1648 = vcmp.eq.f32.partialorder %v1647, 8.507059e+37
    %v1649 = vand.u32 %v1622, 2147483648
    %v1650 = vor.u32 1.1754944e-38, %v1649
    %v1651 = vsel %vm1648, %v1650, %v1646
    %v1652 = vmul.f32 1.0, %v1651
    %v1653 = vtanh.pop %v1614
    %v1655 = vrot.slane %v1556, 2
    %v1657 = vmul.f32 %v1637, %v1655
    %1659 = vrot.lane.b32.xlu0 %v1653, 64
    %v1660 = vpop.permute.xlu0 %1659
    %v1662 = vmul.f32 %v1637, %v1660
    %1664 = vrot.lane.b32.xlu0 %v1662, 64
    %v1665 = vpop.permute.xlu0 %1664
    %v1667 = vadd.f32 %v1657, %v1665
    %v1668 = vtanh.pop %v1667
    %1670 = vrot.lane.b32.xlu0 %v1668, 64
    %v1671 = vpop.permute.xlu0 %1670
    %v1673 = vmul.f32 %v1652, %v1671
    %v1675 = vrot.slane %v1673, 4
    %v1676 = vsel %vm1019, %v1675, 0
    %1678 = vmatpush.msra.mxu0 0.0
    %1679 = vmatpush.msra.mxu0 0.0
    %1680 = vmatpush.msra.mxu0 0.0
    %1681 = vmatpush.msra.mxu0 0.0
    %1682 = vmatpush.msra.mxu0 0.0
    %1683 = vmatpush.msra.mxu0 0.0
    %1684 = vmatpush.msra.mxu0 0.0
    %1685 = vmatpush.msra.mxu0 0.0
    %1686 = vmatpush.msra.mxu0 %v1017
    %1687 = vmatpush.msra.mxu0 %v1015
    %1688 = vmatpush.msra.mxu0 %v1013
    %1689 = vmatpush.msra.mxu0 %v1011
    %1690 = vmatpush.msra.mxu0 %v1009
    %1691 = vmatpush.msra.mxu0 %v1007
    %1692 = vmatpush.msra.mxu0 %v1005
    %1693 = vmatpush.msra.mxu0 %v1003
    %1694 = vmatmul.f32.gmra.mxu0 %v1676
    %v1695 = vpop.f32.mrf.mxu0
    %v1696 = vadd.f32 0.0, %v1695
    %1697 = vdwg.mxu0
    %1698 = vmatpush.msra.mxu0 0.0
    %1699 = vmatpush.msra.mxu0 0.0
    %1700 = vmatpush.msra.mxu0 0.0
    %1701 = vmatpush.msra.mxu0 0.0
    %1702 = vmatpush.msra.mxu0 0.0
    %1703 = vmatpush.msra.mxu0 0.0
    %1704 = vmatpush.msra.mxu0 0.0
    %1705 = vmatpush.msra.mxu0 0.0
    %1706 = vmatpush.msra.mxu0 %v1018
    %1707 = vmatpush.msra.mxu0 %v1016
    %1708 = vmatpush.msra.mxu0 %v1014
    %1709 = vmatpush.msra.mxu0 %v1012
    %1710 = vmatpush.msra.mxu0 %v1010
    %1711 = vmatpush.msra.mxu0 %v1008
    %1712 = vmatpush.msra.mxu0 %v1006
    %1713 = vmatpush.msra.mxu0 %v1004
    %1714 = vmatmul.f32.gmra.mxu0 %v1676
    %v1715 = vpop.f32.mrf.mxu0
    %v1716 = vadd.f32 0.0, %v1715
    %1717 = vdwg.mxu0
    %v1720 = vrot.slane %v1696, 6
    %v1721 = vrot.slane %v1716, 6
    %v1724 = vadd.f32 %v995, %v1720
    %v1725 = vadd.f32 %v996, %v1721
    %v1726 = vxor.u32 %v1724, 2147483648
    %v1727 = vxor.u32 %v1725, 2147483648
    %v1728 = vmul.f32 %v1726, 1.442695
    %v1729 = vpow.pop %v1728
    %v1730 = vmul.f32 %v1727, 1.442695
    %v1731 = vpow.pop %v1730
    %v1732 = vadd.f32 %v1729, 1.0
    %v1733 = vadd.f32 %v1731, 1.0
    %v1734 = vrcp.pop %v1732
    %v1735 = vmul.f32 %v1732, %v1734
    %v1736 = vsub.f32 1.0, %v1735
    %v1737 = vmul.f32 %v1734, %v1736
    %v1738 = vadd.f32 %v1734, %v1737
    %vm1739 = vweird.f32 %v1732
    %vm1740 = vweird.f32 %v1734
    %vm1741 = vmor %vm1739, %vm1740
    %v1742 = vsel %vm1741, %v1734, %v1738
    %v1743 = vand.u32 2147483647, %v1732
    %vm1744 = vcmp.eq.f32.partialorder %v1743, 8.507059e+37
    %v1745 = vand.u32 %v1732, 2147483648
    %v1746 = vor.u32 1.1754944e-38, %v1745
    %v1747 = vsel %vm1744, %v1746, %v1742
    %v1748 = vmul.f32 1.0, %v1747
    %v1749 = vrcp.pop %v1733
    %v1750 = vmul.f32 %v1733, %v1749
    %v1751 = vsub.f32 1.0, %v1750
    %v1752 = vmul.f32 %v1749, %v1751
    %v1753 = vadd.f32 %v1749, %v1752
    %vm1754 = vweird.f32 %v1733
    %vm1755 = vweird.f32 %v1749
    %vm1756 = vmor %vm1754, %vm1755
    %v1757 = vsel %vm1756, %v1749, %v1753
    %v1758 = vand.u32 2147483647, %v1733
    %vm1759 = vcmp.eq.f32.partialorder %v1758, 8.507059e+37
    %v1760 = vand.u32 %v1733, 2147483648
    %v1761 = vor.u32 1.1754944e-38, %v1760
    %v1762 = vsel %vm1759, %v1761, %v1757
    %v1763 = vmul.f32 1.0, %v1762
    %v1764 = vtanh.pop %v1725
    %v1766 = vrot.slane %v1667, 2
    %v1768 = vmul.f32 %v1748, %v1766
    %1770 = vrot.lane.b32.xlu0 %v1764, 64
    %v1771 = vpop.permute.xlu0 %1770
    %v1773 = vmul.f32 %v1748, %v1771
    %1775 = vrot.lane.b32.xlu0 %v1773, 64
    %v1776 = vpop.permute.xlu0 %1775
    %v1778 = vadd.f32 %v1768, %v1776
    %v1779 = vtanh.pop %v1778
    %1781 = vrot.lane.b32.xlu0 %v1779, 64
    %v1782 = vpop.permute.xlu0 %1781
    %v1784 = vmul.f32 %v1763, %v1782
    %v1786 = vrot.slane %v1784, 2
    %v1787 = vsel %vm1019, %v1786, 0
    %1789 = vmatpush.msra.mxu0 0.0
    %1790 = vmatpush.msra.mxu0 0.0
    %1791 = vmatpush.msra.mxu0 0.0
    %1792 = vmatpush.msra.mxu0 0.0
    %1793 = vmatpush.msra.mxu0 0.0
    %1794 = vmatpush.msra.mxu0 0.0
    %1795 = vmatpush.msra.mxu0 0.0
    %1796 = vmatpush.msra.mxu0 0.0
    %1797 = vmatpush.msra.mxu0 %v1017
    %1798 = vmatpush.msra.mxu0 %v1015
    %1799 = vmatpush.msra.mxu0 %v1013
    %1800 = vmatpush.msra.mxu0 %v1011
    %1801 = vmatpush.msra.mxu0 %v1009
    %1802 = vmatpush.msra.mxu0 %v1007
    %1803 = vmatpush.msra.mxu0 %v1005
    %1804 = vmatpush.msra.mxu0 %v1003
    %1805 = vmatmul.f32.gmra.mxu0 %v1787
    %v1806 = vpop.f32.mrf.mxu0
    %v1807 = vadd.f32 0.0, %v1806
    %1808 = vdwg.mxu0
    %1809 = vmatpush.msra.mxu0 0.0
    %1810 = vmatpush.msra.mxu0 0.0
    %1811 = vmatpush.msra.mxu0 0.0
    %1812 = vmatpush.msra.mxu0 0.0
    %1813 = vmatpush.msra.mxu0 0.0
    %1814 = vmatpush.msra.mxu0 0.0
    %1815 = vmatpush.msra.mxu0 0.0
    %1816 = vmatpush.msra.mxu0 0.0
    %1817 = vmatpush.msra.mxu0 %v1018
    %1818 = vmatpush.msra.mxu0 %v1016
    %1819 = vmatpush.msra.mxu0 %v1014
    %1820 = vmatpush.msra.mxu0 %v1012
    %1821 = vmatpush.msra.mxu0 %v1010
    %1822 = vmatpush.msra.mxu0 %v1008
    %1823 = vmatpush.msra.mxu0 %v1006
    %1824 = vmatpush.msra.mxu0 %v1004
    %1825 = vmatmul.f32.gmra.mxu0 %v1787
    %v1826 = vpop.f32.mrf.mxu0
    %v1827 = vadd.f32 0.0, %v1826
    %1828 = vdwg.mxu0
    %v1829 = vadd.f32 %v1001, %v1807
    %v1830 = vadd.f32 %v1002, %v1827
    %v1831 = vxor.u32 %v1829, 2147483648
    %v1832 = vxor.u32 %v1830, 2147483648
    %v1833 = vmul.f32 %v1831, 1.442695
    %v1834 = vpow.pop %v1833
    %v1835 = vmul.f32 %v1832, 1.442695
    %v1836 = vpow.pop %v1835
    %v1837 = vadd.f32 %v1834, 1.0
    %v1838 = vadd.f32 %v1836, 1.0
    %v1839 = vrcp.pop %v1837
    %v1840 = vmul.f32 %v1837, %v1839
    %v1841 = vsub.f32 1.0, %v1840
    %v1842 = vmul.f32 %v1839, %v1841
    %v1843 = vadd.f32 %v1839, %v1842
    %vm1844 = vweird.f32 %v1837
    %vm1845 = vweird.f32 %v1839
    %vm1846 = vmor %vm1844, %vm1845
    %v1847 = vsel %vm1846, %v1839, %v1843
    %v1848 = vand.u32 2147483647, %v1837
    %vm1849 = vcmp.eq.f32.partialorder %v1848, 8.507059e+37
    %v1850 = vand.u32 %v1837, 2147483648
    %v1851 = vor.u32 1.1754944e-38, %v1850
    %v1852 = vsel %vm1849, %v1851, %v1847
    %v1853 = vmul.f32 1.0, %v1852
    %v1854 = vrcp.pop %v1838
    %v1855 = vmul.f32 %v1838, %v1854
    %v1856 = vsub.f32 1.0, %v1855
    %v1857 = vmul.f32 %v1854, %v1856
    %v1858 = vadd.f32 %v1854, %v1857
    %vm1859 = vweird.f32 %v1838
    %vm1860 = vweird.f32 %v1854
    %vm1861 = vmor %vm1859, %vm1860
    %v1862 = vsel %vm1861, %v1854, %v1858
    %v1863 = vand.u32 2147483647, %v1838
    %vm1864 = vcmp.eq.f32.partialorder %v1863, 8.507059e+37
    %v1865 = vand.u32 %v1838, 2147483648
    %v1866 = vor.u32 1.1754944e-38, %v1865
    %v1867 = vsel %vm1864, %v1866, %v1862
    %v1868 = vmul.f32 1.0, %v1867
    %v1869 = vtanh.pop %v1830
    %v1871 = vrot.slane %v1778, 2
    %v1873 = vmul.f32 %v1853, %v1871
    %1875 = vrot.lane.b32.xlu0 %v1869, 64
    %v1876 = vpop.permute.xlu0 %1875
    %v1878 = vmul.f32 %v1853, %v1876
    %1880 = vrot.lane.b32.xlu0 %v1878, 64
    %v1881 = vpop.permute.xlu0 %1880
    %v1883 = vadd.f32 %v1873, %v1881
    %v1884 = vtanh.pop %v1883
    %1886 = vrot.lane.b32.xlu0 %v1884, 64
    %v1887 = vpop.permute.xlu0 %1886
    %v1889 = vmul.f32 %v1868, %v1887
    %v1891 = vrot.slane %v1889, 2
    %1892 = vrot.lane.b32.xlu0 %v1891, 96
    %v1893 = vpop.permute.xlu0 %1892
    %v1895 = vadd.f32 %v1125, %v1893
    %v1896 = vrot.slane %v1784, 6
    %1897 = vrot.lane.b32.xlu0 %v1896, 96
    %v1898 = vpop.permute.xlu0 %1897
    %v1900 = vadd.f32 %v1236, %v1898
    %v1901 = vrot.slane %v1673, 2
    %1902 = vrot.lane.b32.xlu0 %v1901, 96
    %v1903 = vpop.permute.xlu0 %1902
    %v1905 = vadd.f32 %v1347, %v1903
    %1906 = vrot.lane.b32.xlu0 %v1564, 96
    %v1907 = vpop.permute.xlu0 %1906
    %v1909 = vadd.f32 %v1452, %v1907
    %v1910 = vrot.slane %v1452, 2
    %1911 = vrot.lane.b32.xlu0 %v1910, 96
    %v1912 = vpop.permute.xlu0 %1911
    %v1914 = vadd.f32 %v1562, %v1912
    %v1915 = vrot.slane %v1347, 6
    %1916 = vrot.lane.b32.xlu0 %v1915, 96
    %v1917 = vpop.permute.xlu0 %1916
    %v1919 = vadd.f32 %v1673, %v1917
    %v1920 = vrot.slane %v1236, 2
    %1921 = vrot.lane.b32.xlu0 %v1920, 96
    %v1922 = vpop.permute.xlu0 %1921
    %v1924 = vadd.f32 %v1784, %v1922
    %1925 = vrot.lane.b32.xlu0 %v1127, 96
    %v1926 = vpop.permute.xlu0 %1925
    %v1928 = vadd.f32 %v1889, %v1926
    %v1930 = vrot.slane %v1895, 6
    %v1933 = vrot.slane %v1900, 2
    %v1936 = vrot.slane %v1905, 6
    %v1939 = vrot.slane %v1909, 2
    %v1942 = vrot.slane %v1914, 6
    %v1945 = vrot.slane %v1919, 2
    %v1948 = vrot.slane %v1924, 6
    %v1951 = vrot.slane %v1928, 2
    %v1953 = vsel %vm177, %v1930, %v1933
    %v1954 = vsel %vm181, %v1953, %v1936
    %v1955 = vsel %vm185, %v1954, %v1939
    %v1956 = vsel %vm177, %v1942, %v1945
    %v1957 = vsel %vm181, %v1956, %v1948
    %v1958 = vsel %vm185, %v1957, %v1951
    %v1959 = vld [vmem:[#allocation11] sm:$0xff]
    %v1960 = vld [vmem:[#allocation11 + $0x8] sm:$0xff]
    %v1961 = vld [vmem:[#allocation11 + $0x10] sm:$0xff]
    %v1962 = vld [vmem:[#allocation11 + $0x18] sm:$0xff]
    %v1963 = vld [vmem:[%s9] sm:$0x1]
    %v1965 = vperm.slane %v1963, 0
    %v1968 = vsel %vm264, %v1955, 0
    %v1971 = vsel %vm264, %v1958, 0
    %1973 = vmatpush.msra.mxu0 0.0
    %1974 = vmatpush.msra.mxu0 0.0
    %1975 = vmatpush.msra.mxu0 0.0
    %1976 = vmatpush.msra.mxu0 0.0
    %1977 = vmatpush.msra.mxu0 0.0
    %1978 = vmatpush.msra.mxu0 0.0
    %1979 = vmatpush.msra.mxu0 0.0
    %1980 = vmatpush.msra.mxu0 0.0
    %1981 = vmatpush.msra.mxu0 0.0
    %1982 = vmatpush.msra.mxu0 0.0
    %1983 = vmatpush.msra.mxu0 0.0
    %1984 = vmatpush.msra.mxu0 0.0
    %1985 = vmatpush.msra.mxu0 %v1962
    %1986 = vmatpush.msra.mxu0 %v1961
    %1987 = vmatpush.msra.mxu0 %v1960
    %1988 = vmatpush.msra.mxu0 %v1959
    %1989 = vmatmul.f32.gmra.mxu0 %v1968
    %v1990 = vpop.f32.mrf.mxu0
    %v1991 = vadd.f32 %v1965, %v1990
    %1992 = vmatmul.f32.gmra.mxu0 %v1971
    %v1993 = vpop.f32.mrf.mxu0
    %v1994 = vadd.f32 %v1965, %v1993
    %1995 = vdwg.mxu0
    %v1997 = vrot.slane %v1991, 2
    %v1999 = vsel %vm245, %v1994, %v1997
    %v2000 = vrot.slane %v1991, 6
    %v2002 = vsel %vm245, %v1994, %v2000
    %v2004 = vrot.slane %v1994, 2
    %v2006 = vsel %vm245, %v1991, %v2004
    %v2007 = vrot.slane %v1994, 6
    %v2009 = vsel %vm245, %v1991, %v2007
    %v2010 = vld [vmem:[#allocation13] sm:$0xff]
    %v2011 = vld [vmem:[#allocation13 + $0x8] sm:$0xff]
    %v2012 = vld [vmem:[#allocation13 + $0x10] sm:$0xff]
    %v2013 = vld [vmem:[#allocation13 + $0x18] sm:$0xff]
    %2014 = vmatpush.msra.mxu0 0.0
    %2015 = vmatpush.msra.mxu0 0.0
    %2016 = vmatpush.msra.mxu0 0.0
    %2017 = vmatpush.msra.mxu0 0.0
    %2018 = vmatpush.msra.mxu0 0.0
    %2019 = vmatpush.msra.mxu0 0.0
    %2020 = vmatpush.msra.mxu0 0.0
    %2021 = vmatpush.msra.mxu0 0.0
    %2022 = vmatpush.msra.mxu0 0.0
    %2023 = vmatpush.msra.mxu0 0.0
    %2024 = vmatpush.msra.mxu0 0.0
    %2025 = vmatpush.msra.mxu0 0.0
    %2026 = vmatpush.msra.mxu0 %v2013
    %2027 = vmatpush.msra.mxu0 %v2012
    %2028 = vmatpush.msra.mxu0 %v2011
    %2029 = vmatpush.msra.mxu0 %v2010
    %2030 = vmatmul.f32.gmra.mxu0 %v266
    %v2031 = vpop.f32.mrf.mxu0
    %v2032 = vadd.f32 0.0, %v2031
    %2033 = vdwg.mxu0
    %v2035 = vrot.slane %v2032, 2
    %v2037 = vadd.f32 %v1999, %v2035
    %v2038 = vxor.u32 %v2037, 2147483648
    %v2039 = vmul.f32 %v2038, 1.442695
    %v2040 = vpow.pop %v2039
    %v2041 = vadd.f32 %v2040, 1.0
    %v2042 = vrcp.pop %v2041
    %v2043 = vmul.f32 %v2041, %v2042
    %v2044 = vsub.f32 1.0, %v2043
    %v2045 = vmul.f32 %v2042, %v2044
    %v2046 = vadd.f32 %v2042, %v2045
    %vm2047 = vweird.f32 %v2041
    %vm2048 = vweird.f32 %v2042
    %vm2049 = vmor %vm2047, %vm2048
    %v2050 = vsel %vm2049, %v2042, %v2046
    %v2051 = vand.u32 2147483647, %v2041
    %vm2052 = vcmp.eq.f32.partialorder %v2051, 8.507059e+37
    %v2053 = vand.u32 %v2041, 2147483648
    %v2054 = vor.u32 1.1754944e-38, %v2053
    %v2055 = vsel %vm2052, %v2054, %v2050
    %v2056 = vmul.f32 1.0, %v2055
    %v2057 = vtanh.pop %v2037
    %v2058 = vmul.f32 %v2056, 0.0
    %2060 = vrot.lane.b32.xlu0 %v2057, 32
    %v2061 = vpop.permute.xlu0 %2060
    %v2063 = vmul.f32 %v2056, %v2061
    %2065 = vrot.lane.b32.xlu0 %v2063, 32
    %v2066 = vpop.permute.xlu0 %2065
    %v2068 = vadd.f32 %v2058, %v2066
    %v2069 = vtanh.pop %v2068
    %2071 = vrot.lane.b32.xlu0 %v2069, 32
    %v2072 = vpop.permute.xlu0 %2071
    %v2074 = vmul.f32 %v2056, %v2072
    %v2076 = vrot.slane %v2074, 6
    %2077 = vrot.lane.b32.xlu0 %v2076, 64
    %v2078 = vpop.permute.xlu0 %2077
    %v2079 = vsel %vm264, %v2078, 0
    %2081 = vmatpush.msra.mxu0 0.0
    %2082 = vmatpush.msra.mxu0 0.0
    %2083 = vmatpush.msra.mxu0 0.0
    %2084 = vmatpush.msra.mxu0 0.0
    %2085 = vmatpush.msra.mxu0 0.0
    %2086 = vmatpush.msra.mxu0 0.0
    %2087 = vmatpush.msra.mxu0 0.0
    %2088 = vmatpush.msra.mxu0 0.0
    %2089 = vmatpush.msra.mxu0 0.0
    %2090 = vmatpush.msra.mxu0 0.0
    %2091 = vmatpush.msra.mxu0 0.0
    %2092 = vmatpush.msra.mxu0 0.0
    %2093 = vmatpush.msra.mxu0 %v2013
    %2094 = vmatpush.msra.mxu0 %v2012
    %2095 = vmatpush.msra.mxu0 %v2011
    %2096 = vmatpush.msra.mxu0 %v2010
    %2097 = vmatmul.f32.gmra.mxu0 %v2079
    %v2098 = vpop.f32.mrf.mxu0
    %v2099 = vadd.f32 0.0, %v2098
    %2100 = vdwg.mxu0
    %v2102 = vrot.slane %v2099, 4
    %v2104 = vadd.f32 %v2002, %v2102
    %v2105 = vxor.u32 %v2104, 2147483648
    %v2106 = vmul.f32 %v2105, 1.442695
    %v2107 = vpow.pop %v2106
    %v2108 = vadd.f32 %v2107, 1.0
    %v2109 = vrcp.pop %v2108
    %v2110 = vmul.f32 %v2108, %v2109
    %v2111 = vsub.f32 1.0, %v2110
    %v2112 = vmul.f32 %v2109, %v2111
    %v2113 = vadd.f32 %v2109, %v2112
    %vm2114 = vweird.f32 %v2108
    %vm2115 = vweird.f32 %v2109
    %vm2116 = vmor %vm2114, %vm2115
    %v2117 = vsel %vm2116, %v2109, %v2113
    %v2118 = vand.u32 2147483647, %v2108
    %vm2119 = vcmp.eq.f32.partialorder %v2118, 8.507059e+37
    %v2120 = vand.u32 %v2108, 2147483648
    %v2121 = vor.u32 1.1754944e-38, %v2120
    %v2122 = vsel %vm2119, %v2121, %v2117
    %v2123 = vmul.f32 1.0, %v2122
    %v2124 = vtanh.pop %v2104
    %v2126 = vrot.slane %v2068, 2
    %v2128 = vmul.f32 %v2123, %v2126
    %2130 = vrot.lane.b32.xlu0 %v2124, 32
    %v2131 = vpop.permute.xlu0 %2130
    %v2133 = vmul.f32 %v2123, %v2131
    %2135 = vrot.lane.b32.xlu0 %v2133, 32
    %v2136 = vpop.permute.xlu0 %2135
    %v2138 = vadd.f32 %v2128, %v2136
    %v2139 = vtanh.pop %v2138
    %2141 = vrot.lane.b32.xlu0 %v2139, 32
    %v2142 = vpop.permute.xlu0 %2141
    %v2144 = vmul.f32 %v2123, %v2142
    %v2146 = vrot.slane %v2144, 4
    %2147 = vrot.lane.b32.xlu0 %v2146, 64
    %v2148 = vpop.permute.xlu0 %2147
    %v2149 = vsel %vm264, %v2148, 0
    %2151 = vmatpush.msra.mxu0 0.0
    %2152 = vmatpush.msra.mxu0 0.0
    %2153 = vmatpush.msra.mxu0 0.0
    %2154 = vmatpush.msra.mxu0 0.0
    %2155 = vmatpush.msra.mxu0 0.0
    %2156 = vmatpush.msra.mxu0 0.0
    %2157 = vmatpush.msra.mxu0 0.0
    %2158 = vmatpush.msra.mxu0 0.0
    %2159 = vmatpush.msra.mxu0 0.0
    %2160 = vmatpush.msra.mxu0 0.0
    %2161 = vmatpush.msra.mxu0 0.0
    %2162 = vmatpush.msra.mxu0 0.0
    %2163 = vmatpush.msra.mxu0 %v2013
    %2164 = vmatpush.msra.mxu0 %v2012
    %2165 = vmatpush.msra.mxu0 %v2011
    %2166 = vmatpush.msra.mxu0 %v2010
    %2167 = vmatmul.f32.gmra.mxu0 %v2149
    %v2168 = vpop.f32.mrf.mxu0
    %v2169 = vadd.f32 0.0, %v2168
    %2170 = vdwg.mxu0
    %v2172 = vrot.slane %v2169, 6
    %v2174 = vadd.f32 %v1999, %v2172
    %v2175 = vxor.u32 %v2174, 2147483648
    %v2176 = vmul.f32 %v2175, 1.442695
    %v2177 = vpow.pop %v2176
    %v2178 = vadd.f32 %v2177, 1.0
    %v2179 = vrcp.pop %v2178
    %v2180 = vmul.f32 %v2178, %v2179
    %v2181 = vsub.f32 1.0, %v2180
    %v2182 = vmul.f32 %v2179, %v2181
    %v2183 = vadd.f32 %v2179, %v2182
    %vm2184 = vweird.f32 %v2178
    %vm2185 = vweird.f32 %v2179
    %vm2186 = vmor %vm2184, %vm2185
    %v2187 = vsel %vm2186, %v2179, %v2183
    %v2188 = vand.u32 2147483647, %v2178
    %vm2189 = vcmp.eq.f32.partialorder %v2188, 8.507059e+37
    %v2190 = vand.u32 %v2178, 2147483648
    %v2191 = vor.u32 1.1754944e-38, %v2190
    %v2192 = vsel %vm2189, %v2191, %v2187
    %v2193 = vmul.f32 1.0, %v2192
    %v2194 = vtanh.pop %v2174
    %v2196 = vrot.slane %v2138, 2
    %v2198 = vmul.f32 %v2193, %v2196
    %2200 = vrot.lane.b32.xlu0 %v2194, 32
    %v2201 = vpop.permute.xlu0 %2200
    %v2203 = vmul.f32 %v2193, %v2201
    %2205 = vrot.lane.b32.xlu0 %v2203, 32
    %v2206 = vpop.permute.xlu0 %2205
    %v2208 = vadd.f32 %v2198, %v2206
    %v2209 = vtanh.pop %v2208
    %2211 = vrot.lane.b32.xlu0 %v2209, 32
    %v2212 = vpop.permute.xlu0 %2211
    %v2214 = vmul.f32 %v2193, %v2212
    %v2216 = vrot.slane %v2214, 2
    %2217 = vrot.lane.b32.xlu0 %v2216, 64
    %v2218 = vpop.permute.xlu0 %2217
    %v2219 = vsel %vm264, %v2218, 0
    %2221 = vmatpush.msra.mxu0 0.0
    %2222 = vmatpush.msra.mxu0 0.0
    %2223 = vmatpush.msra.mxu0 0.0
    %2224 = vmatpush.msra.mxu0 0.0
    %2225 = vmatpush.msra.mxu0 0.0
    %2226 = vmatpush.msra.mxu0 0.0
    %2227 = vmatpush.msra.mxu0 0.0
    %2228 = vmatpush.msra.mxu0 0.0
    %2229 = vmatpush.msra.mxu0 0.0
    %2230 = vmatpush.msra.mxu0 0.0
    %2231 = vmatpush.msra.mxu0 0.0
    %2232 = vmatpush.msra.mxu0 0.0
    %2233 = vmatpush.msra.mxu0 %v2013
    %2234 = vmatpush.msra.mxu0 %v2012
    %2235 = vmatpush.msra.mxu0 %v2011
    %2236 = vmatpush.msra.mxu0 %v2010
    %2237 = vmatmul.f32.gmra.mxu0 %v2219
    %v2238 = vpop.f32.mrf.mxu0
    %v2239 = vadd.f32 0.0, %v2238
    %2240 = vdwg.mxu0
    %v2241 = vadd.f32 %v2002, %v2239
    %v2242 = vxor.u32 %v2241, 2147483648
    %v2243 = vmul.f32 %v2242, 1.442695
    %v2244 = vpow.pop %v2243
    %v2245 = vadd.f32 %v2244, 1.0
    %v2246 = vrcp.pop %v2245
    %v2247 = vmul.f32 %v2245, %v2246
    %v2248 = vsub.f32 1.0, %v2247
    %v2249 = vmul.f32 %v2246, %v2248
    %v2250 = vadd.f32 %v2246, %v2249
    %vm2251 = vweird.f32 %v2245
    %vm2252 = vweird.f32 %v2246
    %vm2253 = vmor %vm2251, %vm2252
    %v2254 = vsel %vm2253, %v2246, %v2250
    %v2255 = vand.u32 2147483647, %v2245
    %vm2256 = vcmp.eq.f32.partialorder %v2255, 8.507059e+37
    %v2257 = vand.u32 %v2245, 2147483648
    %v2258 = vor.u32 1.1754944e-38, %v2257
    %v2259 = vsel %vm2256, %v2258, %v2254
    %v2260 = vmul.f32 1.0, %v2259
    %v2261 = vtanh.pop %v2241
    %v2263 = vrot.slane %v2208, 2
    %v2265 = vmul.f32 %v2260, %v2263
    %2267 = vrot.lane.b32.xlu0 %v2261, 32
    %v2268 = vpop.permute.xlu0 %2267
    %v2270 = vmul.f32 %v2260, %v2268
    %2272 = vrot.lane.b32.xlu0 %v2270, 32
    %v2273 = vpop.permute.xlu0 %2272
    %v2275 = vadd.f32 %v2265, %v2273
    %v2276 = vtanh.pop %v2275
    %2278 = vrot.lane.b32.xlu0 %v2276, 32
    %v2279 = vpop.permute.xlu0 %2278
    %v2281 = vmul.f32 %v2260, %v2279
    %2283 = vrot.lane.b32.xlu0 %v2281, 64
    %v2284 = vpop.permute.xlu0 %2283
    %v2285 = vsel %vm264, %v2284, 0
    %2287 = vmatpush.msra.mxu0 0.0
    %2288 = vmatpush.msra.mxu0 0.0
    %2289 = vmatpush.msra.mxu0 0.0
    %2290 = vmatpush.msra.mxu0 0.0
    %2291 = vmatpush.msra.mxu0 0.0
    %2292 = vmatpush.msra.mxu0 0.0
    %2293 = vmatpush.msra.mxu0 0.0
    %2294 = vmatpush.msra.mxu0 0.0
    %2295 = vmatpush.msra.mxu0 0.0
    %2296 = vmatpush.msra.mxu0 0.0
    %2297 = vmatpush.msra.mxu0 0.0
    %2298 = vmatpush.msra.mxu0 0.0
    %2299 = vmatpush.msra.mxu0 %v2013
    %2300 = vmatpush.msra.mxu0 %v2012
    %2301 = vmatpush.msra.mxu0 %v2011
    %2302 = vmatpush.msra.mxu0 %v2010
    %2303 = vmatmul.f32.gmra.mxu0 %v2285
    %v2304 = vpop.f32.mrf.mxu0
    %v2305 = vadd.f32 0.0, %v2304
    %2306 = vdwg.mxu0
    %v2308 = vrot.slane %v2305, 2
    %v2310 = vadd.f32 %v2006, %v2308
    %v2311 = vxor.u32 %v2310, 2147483648
    %v2312 = vmul.f32 %v2311, 1.442695
    %v2313 = vpow.pop %v2312
    %v2314 = vadd.f32 %v2313, 1.0
    %v2315 = vrcp.pop %v2314
    %v2316 = vmul.f32 %v2314, %v2315
    %v2317 = vsub.f32 1.0, %v2316
    %v2318 = vmul.f32 %v2315, %v2317
    %v2319 = vadd.f32 %v2315, %v2318
    %vm2320 = vweird.f32 %v2314
    %vm2321 = vweird.f32 %v2315
    %vm2322 = vmor %vm2320, %vm2321
    %v2323 = vsel %vm2322, %v2315, %v2319
    %v2324 = vand.u32 2147483647, %v2314
    %vm2325 = vcmp.eq.f32.partialorder %v2324, 8.507059e+37
    %v2326 = vand.u32 %v2314, 2147483648
    %v2327 = vor.u32 1.1754944e-38, %v2326
    %v2328 = vsel %vm2325, %v2327, %v2323
    %v2329 = vmul.f32 1.0, %v2328
    %v2330 = vtanh.pop %v2310
    %v2332 = vrot.slane %v2275, 2
    %v2334 = vmul.f32 %v2329, %v2332
    %2336 = vrot.lane.b32.xlu0 %v2330, 32
    %v2337 = vpop.permute.xlu0 %2336
    %v2339 = vmul.f32 %v2329, %v2337
    %2341 = vrot.lane.b32.xlu0 %v2339, 32
    %v2342 = vpop.permute.xlu0 %2341
    %v2344 = vadd.f32 %v2334, %v2342
    %v2345 = vtanh.pop %v2344
    %2347 = vrot.lane.b32.xlu0 %v2345, 32
    %v2348 = vpop.permute.xlu0 %2347
    %v2350 = vmul.f32 %v2329, %v2348
    %v2352 = vrot.slane %v2350, 6
    %2353 = vrot.lane.b32.xlu0 %v2352, 64
    %v2354 = vpop.permute.xlu0 %2353
    %v2355 = vsel %vm264, %v2354, 0
    %2357 = vmatpush.msra.mxu0 0.0
    %2358 = vmatpush.msra.mxu0 0.0
    %2359 = vmatpush.msra.mxu0 0.0
    %2360 = vmatpush.msra.mxu0 0.0
    %2361 = vmatpush.msra.mxu0 0.0
    %2362 = vmatpush.msra.mxu0 0.0
    %2363 = vmatpush.msra.mxu0 0.0
    %2364 = vmatpush.msra.mxu0 0.0
    %2365 = vmatpush.msra.mxu0 0.0
    %2366 = vmatpush.msra.mxu0 0.0
    %2367 = vmatpush.msra.mxu0 0.0
    %2368 = vmatpush.msra.mxu0 0.0
    %2369 = vmatpush.msra.mxu0 %v2013
    %2370 = vmatpush.msra.mxu0 %v2012
    %2371 = vmatpush.msra.mxu0 %v2011
    %2372 = vmatpush.msra.mxu0 %v2010
    %2373 = vmatmul.f32.gmra.mxu0 %v2355
    %v2374 = vpop.f32.mrf.mxu0
    %v2375 = vadd.f32 0.0, %v2374
    %2376 = vdwg.mxu0
    %v2378 = vrot.slane %v2375, 4
    %v2380 = vadd.f32 %v2009, %v2378
    %v2381 = vxor.u32 %v2380, 2147483648
    %v2382 = vmul.f32 %v2381, 1.442695
    %v2383 = vpow.pop %v2382
    %v2384 = vadd.f32 %v2383, 1.0
    %v2385 = vrcp.pop %v2384
    %v2386 = vmul.f32 %v2384, %v2385
    %v2387 = vsub.f32 1.0, %v2386
    %v2388 = vmul.f32 %v2385, %v2387
    %v2389 = vadd.f32 %v2385, %v2388
    %vm2390 = vweird.f32 %v2384
    %vm2391 = vweird.f32 %v2385
    %vm2392 = vmor %vm2390, %vm2391
    %v2393 = vsel %vm2392, %v2385, %v2389
    %v2394 = vand.u32 2147483647, %v2384
    %vm2395 = vcmp.eq.f32.partialorder %v2394, 8.507059e+37
    %v2396 = vand.u32 %v2384, 2147483648
    %v2397 = vor.u32 1.1754944e-38, %v2396
    %v2398 = vsel %vm2395, %v2397, %v2393
    %v2399 = vmul.f32 1.0, %v2398
    %v2400 = vtanh.pop %v2380
    %v2402 = vrot.slane %v2344, 2
    %v2404 = vmul.f32 %v2399, %v2402
    %2406 = vrot.lane.b32.xlu0 %v2400, 32
    %v2407 = vpop.permute.xlu0 %2406
    %v2409 = vmul.f32 %v2399, %v2407
    %2411 = vrot.lane.b32.xlu0 %v2409, 32
    %v2412 = vpop.permute.xlu0 %2411
    %v2414 = vadd.f32 %v2404, %v2412
    %v2415 = vtanh.pop %v2414
    %2417 = vrot.lane.b32.xlu0 %v2415, 32
    %v2418 = vpop.permute.xlu0 %2417
    %v2420 = vmul.f32 %v2399, %v2418
    %v2422 = vrot.slane %v2420, 4
    %2423 = vrot.lane.b32.xlu0 %v2422, 64
    %v2424 = vpop.permute.xlu0 %2423
    %v2425 = vsel %vm264, %v2424, 0
    %2427 = vmatpush.msra.mxu0 0.0
    %2428 = vmatpush.msra.mxu0 0.0
    %2429 = vmatpush.msra.mxu0 0.0
    %2430 = vmatpush.msra.mxu0 0.0
    %2431 = vmatpush.msra.mxu0 0.0
    %2432 = vmatpush.msra.mxu0 0.0
    %2433 = vmatpush.msra.mxu0 0.0
    %2434 = vmatpush.msra.mxu0 0.0
    %2435 = vmatpush.msra.mxu0 0.0
    %2436 = vmatpush.msra.mxu0 0.0
    %2437 = vmatpush.msra.mxu0 0.0
    %2438 = vmatpush.msra.mxu0 0.0
    %2439 = vmatpush.msra.mxu0 %v2013
    %2440 = vmatpush.msra.mxu0 %v2012
    %2441 = vmatpush.msra.mxu0 %v2011
    %2442 = vmatpush.msra.mxu0 %v2010
    %2443 = vmatmul.f32.gmra.mxu0 %v2425
    %v2444 = vpop.f32.mrf.mxu0
    %v2445 = vadd.f32 0.0, %v2444
    %2446 = vdwg.mxu0
    %v2448 = vrot.slane %v2445, 6
    %v2450 = vadd.f32 %v2006, %v2448
    %v2451 = vxor.u32 %v2450, 2147483648
    %v2452 = vmul.f32 %v2451, 1.442695
    %v2453 = vpow.pop %v2452
    %v2454 = vadd.f32 %v2453, 1.0
    %v2455 = vrcp.pop %v2454
    %v2456 = vmul.f32 %v2454, %v2455
    %v2457 = vsub.f32 1.0, %v2456
    %v2458 = vmul.f32 %v2455, %v2457
    %v2459 = vadd.f32 %v2455, %v2458
    %vm2460 = vweird.f32 %v2454
    %vm2461 = vweird.f32 %v2455
    %vm2462 = vmor %vm2460, %vm2461
    %v2463 = vsel %vm2462, %v2455, %v2459
    %v2464 = vand.u32 2147483647, %v2454
    %vm2465 = vcmp.eq.f32.partialorder %v2464, 8.507059e+37
    %v2466 = vand.u32 %v2454, 2147483648
    %v2467 = vor.u32 1.1754944e-38, %v2466
    %v2468 = vsel %vm2465, %v2467, %v2463
    %v2469 = vmul.f32 1.0, %v2468
    %v2470 = vtanh.pop %v2450
    %v2472 = vrot.slane %v2414, 2
    %v2474 = vmul.f32 %v2469, %v2472
    %2476 = vrot.lane.b32.xlu0 %v2470, 32
    %v2477 = vpop.permute.xlu0 %2476
    %v2479 = vmul.f32 %v2469, %v2477
    %2481 = vrot.lane.b32.xlu0 %v2479, 32
    %v2482 = vpop.permute.xlu0 %2481
    %v2484 = vadd.f32 %v2474, %v2482
    %v2485 = vtanh.pop %v2484
    %2487 = vrot.lane.b32.xlu0 %v2485, 32
    %v2488 = vpop.permute.xlu0 %2487
    %v2490 = vmul.f32 %v2469, %v2488
    %v2492 = vrot.slane %v2490, 2
    %2493 = vrot.lane.b32.xlu0 %v2492, 64
    %v2494 = vpop.permute.xlu0 %2493
    %v2495 = vsel %vm264, %v2494, 0
    %2497 = vmatpush.msra.mxu0 0.0
    %2498 = vmatpush.msra.mxu0 0.0
    %2499 = vmatpush.msra.mxu0 0.0
    %2500 = vmatpush.msra.mxu0 0.0
    %2501 = vmatpush.msra.mxu0 0.0
    %2502 = vmatpush.msra.mxu0 0.0
    %2503 = vmatpush.msra.mxu0 0.0
    %2504 = vmatpush.msra.mxu0 0.0
    %2505 = vmatpush.msra.mxu0 0.0
    %2506 = vmatpush.msra.mxu0 0.0
    %2507 = vmatpush.msra.mxu0 0.0
    %2508 = vmatpush.msra.mxu0 0.0
    %2509 = vmatpush.msra.mxu0 %v2013
    %2510 = vmatpush.msra.mxu0 %v2012
    %2511 = vmatpush.msra.mxu0 %v2011
    %2512 = vmatpush.msra.mxu0 %v2010
    %2513 = vmatmul.f32.gmra.mxu0 %v2495
    %v2514 = vpop.f32.mrf.mxu0
    %v2515 = vadd.f32 0.0, %v2514
    %2516 = vdwg.mxu0
    %v2517 = vadd.f32 %v2009, %v2515
    %v2518 = vxor.u32 %v2517, 2147483648
    %v2519 = vmul.f32 %v2518, 1.442695
    %v2520 = vpow.pop %v2519
    %v2521 = vadd.f32 %v2520, 1.0
    %v2522 = vrcp.pop %v2521
    %v2523 = vmul.f32 %v2521, %v2522
    %v2524 = vsub.f32 1.0, %v2523
    %v2525 = vmul.f32 %v2522, %v2524
    %v2526 = vadd.f32 %v2522, %v2525
    %vm2527 = vweird.f32 %v2521
    %vm2528 = vweird.f32 %v2522
    %vm2529 = vmor %vm2527, %vm2528
    %v2530 = vsel %vm2529, %v2522, %v2526
    %v2531 = vand.u32 2147483647, %v2521
    %vm2532 = vcmp.eq.f32.partialorder %v2531, 8.507059e+37
    %v2533 = vand.u32 %v2521, 2147483648
    %v2534 = vor.u32 1.1754944e-38, %v2533
    %v2535 = vsel %vm2532, %v2534, %v2530
    %v2536 = vmul.f32 1.0, %v2535
    %v2537 = vtanh.pop %v2517
    %v2539 = vrot.slane %v2484, 2
    %v2541 = vmul.f32 %v2536, %v2539
    %2543 = vrot.lane.b32.xlu0 %v2537, 32
    %v2544 = vpop.permute.xlu0 %2543
    %v2546 = vmul.f32 %v2536, %v2544
    %2548 = vrot.lane.b32.xlu0 %v2546, 32
    %v2549 = vpop.permute.xlu0 %2548
    %v2551 = vadd.f32 %v2541, %v2549
    %v2552 = vtanh.pop %v2551
    %2554 = vrot.lane.b32.xlu0 %v2552, 32
    %v2555 = vpop.permute.xlu0 %2554
    %v2557 = vmul.f32 %v2536, %v2555
    %v2559 = vrot.slane %v2557, 2
    %2560 = vrot.lane.b32.xlu0 %v2559, 112
    %v2561 = vpop.permute.xlu0 %2560
    %v2563 = vadd.f32 %v2074, %v2561
    %v2564 = vrot.slane %v2490, 6
    %2565 = vrot.lane.b32.xlu0 %v2564, 112
    %v2566 = vpop.permute.xlu0 %2565
    %v2568 = vadd.f32 %v2144, %v2566
    %v2569 = vrot.slane %v2420, 2
    %2570 = vrot.lane.b32.xlu0 %v2569, 112
    %v2571 = vpop.permute.xlu0 %2570
    %v2573 = vadd.f32 %v2214, %v2571
    %2574 = vrot.lane.b32.xlu0 %v2352, 112
    %v2575 = vpop.permute.xlu0 %2574
    %v2577 = vadd.f32 %v2281, %v2575
    %v2578 = vrot.slane %v2281, 2
    %2579 = vrot.lane.b32.xlu0 %v2578, 112
    %v2580 = vpop.permute.xlu0 %2579
    %v2582 = vadd.f32 %v2350, %v2580
    %v2583 = vrot.slane %v2214, 6
    %2584 = vrot.lane.b32.xlu0 %v2583, 112
    %v2585 = vpop.permute.xlu0 %2584
    %v2587 = vadd.f32 %v2420, %v2585
    %v2588 = vrot.slane %v2144, 2
    %2589 = vrot.lane.b32.xlu0 %v2588, 112
    %v2590 = vpop.permute.xlu0 %2589
    %v2592 = vadd.f32 %v2490, %v2590
    %2593 = vrot.lane.b32.xlu0 %v2076, 112
    %v2594 = vpop.permute.xlu0 %2593
    %v2596 = vadd.f32 %v2557, %v2594
    %v2598 = vrot.slane %v2563, 6
    %v2601 = vrot.slane %v2568, 3
    %v2604 = vrot.slane %v2577, 5
    %v2607 = vrot.slane %v2582, 2
    %v2610 = vrot.slane %v2587, 7
    %v2613 = vrot.slane %v2592, 4
    %v2616 = vrot.slane %v2596, 1
    %v2618 = vrot.slane %v2563, 7
    %v2620 = vrot.slane %v2568, 4
    %v2623 = vrot.slane %v2573, 1
    %v2625 = vrot.slane %v2577, 6
    %v2627 = vrot.slane %v2582, 3
    %v2629 = vrot.slane %v2592, 5
    %v2631 = vrot.slane %v2596, 2
    %v2633 = vsel %vm175, %v2598, %v2601
    %v2634 = vsel %vm177, %v2633, %v2573
    %v2635 = vsel %vm179, %v2634, %v2604
    %v2636 = vsel %vm181, %v2635, %v2607
    %v2637 = vsel %vm183, %v2636, %v2610
    %v2638 = vsel %vm185, %v2637, %v2613
    %v2639 = vsel %vm187, %v2638, %v2616
    %v2640 = vsel %vm175, %v2618, %v2620
    %v2641 = vsel %vm177, %v2640, %v2623
    %v2642 = vsel %vm179, %v2641, %v2625
    %v2643 = vsel %vm181, %v2642, %v2627
    %v2644 = vsel %vm183, %v2643, %v2587
    %v2645 = vsel %vm185, %v2644, %v2629
    %v2646 = vsel %vm187, %v2645, %v2631
    %vm2647 = vcmp.ge.f32.partialorder %v2639, 0.0
    %vm2648 = vcmp.ge.f32.partialorder %v2646, 0.0
    %v2649 = vmul.f32 %v2639, 0.01
    %v2650 = vmul.f32 %v2646, 0.01
    %v2651 = vsel %vm2647, %v2639, %v2649
    %v2652 = vsel %vm2648, %v2646, %v2650
    %2655 = vrot.lane.b32.xlu0 %v2651, 64
    %v2656 = vpop.permute.xlu0 %2655
    %2657 = vrot.lane.b32.xlu0 %v2652, 64
    %v2658 = vpop.permute.xlu0 %2657
    %2661 = vst.msk [vmem:[#allocation14] sm:$0xff] %vm897, %v2656
    %2662 = vst.msk [vmem:[#allocation14 + $0x8] sm:$0xff] %vm897, %v2658
    // Predicated region
    $region70: #{bi_lstm_standard_forward.1} parent=1 // pred_check
      _
    $region71: #{bi_lstm_standard_forward.1} parent=1 // pred_check_branch
      %2664 = sbr.rel (0) target = $region73
    $region72: #{bi_lstm_standard_forward.1} parent=1 // pred_region
      %2666 = vsyncadd [#allocation4], 0
      %s2667 = sshll.u32 [#allocation14], 4
      %s2668 = int_to_ptr.vmem [resolvable:$true] %s2667
      %s2669 = sshll.u32 %s10, 4
      %s2670 = int_to_ptr.hbm [resolvable:$true] %s2669
      %2675 = dma.vmem_to_hbm [thread:$0]  %s2668, 256, %s2670, [#allocation4], 128, 128, 8
    $region73: #{bi_lstm_standard_forward.1} parent=1 // pred_fallthru
      _
    // Predicated region
    $region74: #{bi_lstm_standard_forward.1} parent=1 // pred_check
      _
    $region75: #{bi_lstm_standard_forward.1} parent=1 // pred_check_branch
      %2677 = sbr.rel (0) target = $region77
    $region76: #{bi_lstm_standard_forward.1} parent=1 // pred_region
      %2679 = dma.done [#allocation4], 256
    $region77: #{bi_lstm_standard_forward.1} parent=1 // pred_fallthru
      _
    %2680 = vsyncpa [#allocation3], 1
    %2681 = vsyncpa [#allocation6], 1
    %2682 = vsyncpa [#allocation9], 1
    %2683 = vsyncpa [#allocation12], 1
    %2684 = vsyncpa [#allocation4], 1

</llo_original>
